<compile_context>
chip_gen: v6e
topology: v6e:2x2x1
jax: 0.10.0
libtpu: 0.0.40
codegen_flags: <defaults>
</compile_context>

<pallas_src>
import functools

import jax
import jax.numpy as jnp
from jax.experimental import pallas as pl
from jax.experimental.pallas import tpu as pltpu

_LANE = 128
_NEG = -1e30  # f32-safe mask value (softmax math is kept in f32)


def _round_up(v, m):
    return ((v + m - 1) // m) * m


def _pad2(a, rows, cols, dtype=None):
    dtype = a.dtype if dtype is None else dtype
    out = jnp.zeros((rows, cols), dtype)
    return out.at[: a.shape[0], : a.shape[1]].set(a.astype(dtype))


def _choose_tiling(n):
    n_pad = _round_up(max(n, _LANE), _LANE)
    node_tile = 256 if n_pad % 256 == 0 else _LANE
    return n_pad, node_tile


# --------------------------------------------------------------------------
# Kernel 1: layer-0 projection  h0 = x @ W0  and lane-dense source scores.
# --------------------------------------------------------------------------
def _project_kernel(x_ref, w_ref, a_src_ref, h_ref, s_ref):
    h = jnp.dot(x_ref[...], w_ref[...], preferred_element_type=jnp.float32)
    h_ref[...] = h.astype(h_ref.dtype)
    # s_src[j] = <h[j], a_src>  via VPU multiply + lane reduce (no (F,1) matmul),
    # stored as a lane-dense (1, tile) row for broadcast use in the attention kernel.
    s_col = jnp.sum(h * a_src_ref[...], axis=-1, keepdims=True)      # (T, 1)
    s_ref[...] = jnp.transpose(s_col).astype(s_ref.dtype)            # (1, T)


def _project(x_p, w_p, a_src_p, node_tile):
    n_pad, f_in = x_p.shape
    f_out = w_p.shape[1]
    grid = (n_pad // node_tile,)
    return pl.pallas_call(
        _project_kernel,
        out_shape=(jax.ShapeDtypeStruct((n_pad, f_out), jnp.bfloat16),
                   jax.ShapeDtypeStruct((1, n_pad), jnp.float32)),
        grid=grid,
        in_specs=[pl.BlockSpec((node_tile, f_in), lambda i: (i, 0)),
                  pl.BlockSpec((f_in, f_out), lambda i: (0, 0)),
                  pl.BlockSpec((1, f_out), lambda i: (0, 0))],
        out_specs=(pl.BlockSpec((node_tile, f_out), lambda i: (i, 0)),
                   pl.BlockSpec((1, node_tile), lambda i: (0, i))),
        compiler_params=pltpu.CompilerParams(dimension_semantics=("parallel",)),
    )(x_p, w_p, a_src_p)


# --------------------------------------------------------------------------
# Kernel 2: one GAT layer = masked online-softmax attention + aggregation
#           + bias + ReLU, fused with the NEXT layer's projection (or the
#           final Linear).  Also emits the next layer's source scores.
# --------------------------------------------------------------------------
def _gat_attn_kernel(h_dst_ref, h_src_ref, s_src_ref, adj_ref, a_dst_ref, b_ref,
                     w_nxt_ref, b_nxt_ref, a_src_nxt_ref,
                     out_ref, s_nxt_ref,
                     m_ref, l_ref, acc_ref):
    j = pl.program_id(1)

    @pl.when(j == 0)
    def _init():
        m_ref[...] = jnp.full(m_ref.shape, _NEG, m_ref.dtype)
        l_ref[...] = jnp.zeros(l_ref.shape, l_ref.dtype)
        acc_ref[...] = jnp.zeros(acc_ref.shape, acc_ref.dtype)

    # destination scores via VPU multiply + lane reduce (f32)
    h_i = h_dst_ref[...].astype(jnp.float32)                              # (TI, F)
    s_dst = jnp.sum(h_i * a_dst_ref[...], axis=-1, keepdims=True)         # (TI, 1)

    # logits e[i, j] = LeakyReLU(s_dst[i] + s_src[j], 0.2); s_src is already (1, TJ)
    e = s_dst + s_src_ref[...]                                            # (TI, TJ)
    e = jnp.where(e >= 0.0, e, 0.2 * e)
    cnt = adj_ref[...].astype(jnp.float32)        # edge multiplicity (0 = no edge)
    e = jnp.where(cnt > 0.0, e, _NEG)

    # online softmax update (all f32)
    m_prev = m_ref[...]
    m_new = jnp.maximum(m_prev, jnp.max(e, axis=-1, keepdims=True))
    corr = jnp.exp(m_prev - m_new)
    p = jnp.exp(e - m_new) * cnt                  # duplicates counted, masked -> 0
    l_ref[...] = corr * l_ref[...] + jnp.sum(p, axis=-1, keepdims=True)
    acc_ref[...] = corr * acc_ref[...] + jnp.dot(
        p.astype(jnp.bfloat16), h_src_ref[...], preferred_element_type=jnp.float32)
    m_ref[...] = m_new

    @pl.when(j == pl.num_programs(1) - 1)
    def _finalize():
        inv = pl.reciprocal(l_ref[...], approx=True)                      # EUP
        out = jnp.maximum(acc_ref[...] * inv + b_ref[...], 0.0)           # bias+ReLU
        nxt = jnp.dot(out.astype(jnp.bfloat16), w_nxt_ref[...],
                      preferred_element_type=jnp.float32) + b_nxt_ref[...]
        out_ref[...] = nxt.astype(out_ref.dtype)
        s_col = jnp.sum(nxt * a_src_nxt_ref[...], axis=-1, keepdims=True)
        s_nxt_ref[...] = jnp.transpose(s_col).astype(s_nxt_ref.dtype)


def _gat_attention(h, s_src, adj, a_dst, bias, w_next, b_next, a_src_next,
                   node_tile, out_dtype):
    n_pad, f_pad = h.shape
    f_next = w_next.shape[1]
    nt = n_pad // node_tile
    return pl.pallas_call(
        _gat_attn_kernel,
        out_shape=(jax.ShapeDtypeStruct((n_pad, f_next), out_dtype),
                   jax.ShapeDtypeStruct((1, n_pad), jnp.float32)),
        grid=(nt, nt),
        in_specs=[
            pl.BlockSpec((node_tile, f_pad), lambda i, j: (i, 0)),        # h (dst)
            pl.BlockSpec((node_tile, f_pad), lambda i, j: (j, 0)),        # h (src)
            pl.BlockSpec((1, node_tile), lambda i, j: (0, j)),            # s_src row
            pl.BlockSpec((node_tile, node_tile), lambda i, j: (i, j)),    # adj counts
            pl.BlockSpec((1, f_pad), lambda i, j: (0, 0)),                # a_dst
            pl.BlockSpec((1, f_pad), lambda i, j: (0, 0)),                # bias
            pl.BlockSpec((f_pad, f_next), lambda i, j: (0, 0)),           # next W
            pl.BlockSpec((1, f_next), lambda i, j: (0, 0)),               # next bias
            pl.BlockSpec((1, f_next), lambda i, j: (0, 0)),               # next a_src
        ],
        out_specs=(pl.BlockSpec((node_tile, f_next), lambda i, j: (i, 0)),
                   pl.BlockSpec((1, node_tile), lambda i, j: (0, i))),
        scratch_shapes=[pltpu.VMEM((node_tile, 1), jnp.float32),          # m
                        pltpu.VMEM((node_tile, 1), jnp.float32),          # l
                        pltpu.VMEM((node_tile, f_pad), jnp.float32)],     # acc
        compiler_params=pltpu.CompilerParams(
            dimension_semantics=("parallel", "arbitrary")),
    )(h, h, s_src, adj, a_dst, bias, w_next, b_next, a_src_next)


# --------------------------------------------------------------------------
# Parameters & forward pass
# --------------------------------------------------------------------------
def init_params(key, num_features, num_classes, hidden_channels_list):
    """Deterministic synthetic parameters matching GATConv/Linear shapes."""
    hns = [num_features] + list(hidden_channels_list)
    params = {"convs": []}
    for idx in range(len(hidden_channels_list)):
        key, k1, k2, k3 = jax.random.split(key, 4)
        fi, fo = hns[idx], hns[idx + 1]
        params["convs"].append({
            "w": jax.random.normal(k1, (fi, fo), jnp.float32) / jnp.sqrt(float(fi)),
            "a_src": jax.random.normal(k2, (fo, 1), jnp.float32) / jnp.sqrt(float(fo)),
            "a_dst": jax.random.normal(k3, (fo, 1), jnp.float32) / jnp.sqrt(float(fo)),
            "b": jnp.zeros((1, fo), jnp.float32),
        })
    key, k1 = jax.random.split(key)
    h = hidden_channels_list[-1]
    params["lin_w"] = jax.random.normal(k1, (h, num_classes), jnp.float32) / jnp.sqrt(float(h))
    params["lin_b"] = jnp.zeros((1, num_classes), jnp.float32)
    return params


def gat_forward(params, x, edge_index):
    n, f_in = x.shape
    convs = params["convs"]
    num_classes = params["lin_w"].shape[1]
    n_pad, node_tile = _choose_tiling(n)

    # dense adjacency with edge multiplicities: adj[i, j] = #edges j -> i.
    # GATConv removes existing self-loops and adds exactly one per node.
    src, dst = edge_index[0], edge_index[1]
    adj = jnp.zeros((n_pad, n_pad), jnp.float32).at[dst, src].add(1.0)
    idx = jnp.arange(n_pad)
    adj = adj.at[idx, idx].set(1.0)
    adj = adj.astype(jnp.bfloat16)

    # lane-pad all feature dims to multiples of 128
    f_pads = [_round_up(f_in, _LANE)] + \
             [_round_up(c["w"].shape[1], _LANE) for c in convs]
    c_pad = _round_up(num_classes, _LANE)

    # layer-0 projection (+ lane-dense source scores)
    x_p = _pad2(x, n_pad, f_pads[0], jnp.bfloat16)
    w0 = _pad2(convs[0]["w"], f_pads[0], f_pads[1], jnp.bfloat16)
    a_src0 = _pad2(convs[0]["a_src"].T, 1, f_pads[1], jnp.float32)
    h, s_src = _project(x_p, w0, a_src0, node_tile)

    for l, conv in enumerate(convs):
        f_out_pad = f_pads[l + 1]
        a_dst = _pad2(conv["a_dst"].T, 1, f_out_pad, jnp.float32)
        bias = _pad2(conv["b"], 1, f_out_pad, jnp.float32)
        if l + 1 < len(convs):
            nxt = convs[l + 1]
            f_nxt_pad = f_pads[l + 2]
            w_next = _pad2(nxt["w"], f_out_pad, f_nxt_pad, jnp.bfloat16)
            b_next = jnp.zeros((1, f_nxt_pad), jnp.float32)   # GATConv bias added post-agg
            a_src_next = _pad2(nxt["a_src"].T, 1, f_nxt_pad, jnp.float32)
            out_dtype = jnp.bfloat16
        else:  # fuse the final Linear into the last GAT layer's finalize
            w_next = _pad2(params["lin_w"], f_out_pad, c_pad, jnp.bfloat16)
            b_next = _pad2(params["lin_b"], 1, c_pad, jnp.float32)
            a_src_next = jnp.zeros((1, c_pad), jnp.float32)
            out_dtype = jnp.float32
        h, s_src = _gat_attention(h, s_src, adj, a_dst, bias,
                                  w_next, b_next, a_src_next,
                                  node_tile, out_dtype)

    # TODO(synk): training-mode dropout (p=0.5, random mask) intentionally omitted
    # (eval-mode identity).
    return h[:n, :num_classes]


if __name__ == "__main__":
    num_nodes = 64
    num_features = 16
    hidden_channels_list = [32, 32]
    num_classes = 7
    num_edges = 256

    key = jax.random.PRNGKey(0)
    k_x, k_e, k_p = jax.random.split(key, 3)
    x = jax.random.normal(k_x, (num_nodes, num_features), jnp.float32)
    edge_index = jax.random.randint(k_e, (2, num_edges), 0, num_nodes, jnp.int32)

    params = init_params(k_p, num_features, num_classes, hidden_channels_list)

    out = jax.jit(gat_forward)(params, x, edge_index)
    out = jax.block_until_ready(out)
    assert out.shape == (num_nodes, num_classes)
    assert bool(jnp.all(jnp.isfinite(out)))
    print("KERNEL_OK")
</pallas_src>

<mosaic_0001>
module attributes {stable_mosaic.version = 11 : i64} {
  func.func private @main(%arg0: i32) attributes {dimension_semantics = [#tpu.dimension_semantics<core_parallel>], iteration_bounds = array<i64: 2>, tpu.core_type = #tpu.core_type<sc_scalar_subcore>, window_params = []} {
    return
  }
}

module attributes {stable_mosaic.version = 11 : i64} {
  func.func private @main(%arg0: i32) attributes {dimension_semantics = [#tpu.dimension_semantics<core_parallel>], iteration_bounds = array<i64: 2>, tpu.core_type = #tpu.core_type<sc_scalar_subcore>, window_params = []} {
    return
  }
}

module attributes {stable_mosaic.version = 11 : i64} {
  func.func @_project_kernel(%arg0: i32, %arg1: memref<128x128xbf16, #tpu.memory_space<vmem>>, %arg2: memref<128x128xbf16, #tpu.memory_space<vmem>>, %arg3: memref<1x128xf32, #tpu.memory_space<vmem>>, %arg4: memref<128x128xbf16, #tpu.memory_space<vmem>>, %arg5: memref<1x128xf32, #tpu.memory_space<vmem>>) attributes {dimension_semantics = [#tpu.dimension_semantics<parallel>], iteration_bounds = array<i64: 1>, scalar_prefetch = 0 : i64, scratch_operands = 0 : i64, tpu.core_type = #tpu.core_type<tc>, window_params = [{transform_indices = @transform_0, window_bounds = array<i64: 128, 128>}, {pipeline_mode = #tpu.pipeline_mode<synchronous>, transform_indices = @transform_1, window_bounds = array<i64: 128, 128>}, {pipeline_mode = #tpu.pipeline_mode<synchronous>, transform_indices = @transform_2, window_bounds = array<i64: 1, 128>}, {transform_indices = @transform_3, window_bounds = array<i64: 128, 128>}, {transform_indices = @transform_4, window_bounds = array<i64: 1, 128>}]} {
    %c0 = arith.constant 0 : index
    %c0_0 = arith.constant 0 : index
    %0 = vector.load %arg1[%c0, %c0_0] : memref<128x128xbf16, #tpu.memory_space<vmem>>, vector<128x128xbf16>
    %c0_1 = arith.constant 0 : index
    %c0_2 = arith.constant 0 : index
    %1 = vector.load %arg2[%c0_1, %c0_2] : memref<128x128xbf16, #tpu.memory_space<vmem>>, vector<128x128xbf16>
    %cst = arith.constant dense<0.000000e+00> : vector<128x128xf32>
    %2 = tpu.matmul %0, %1, %cst {dimension_numbers = #tpu.dot_dimension_numbers<[1], [0], [0], [1], [0, 0, 1, 1], [], []>} : vector<128x128xbf16>, vector<128x128xbf16>, vector<128x128xf32> -> vector<128x128xf32>
    %3 = arith.truncf %2 : vector<128x128xf32> to vector<128x128xbf16>
    %c0_3 = arith.constant 0 : index
    %c0_4 = arith.constant 0 : index
    %4 = vector.load %arg4[%c0_3, %c0_4] : memref<128x128xbf16, #tpu.memory_space<vmem>>, vector<128x128xbf16>
    tpu.vector_store %arg4[%c0_3, %c0_4], %3 {strides = array<i32>} : memref<128x128xbf16, #tpu.memory_space<vmem>>, vector<128x128xbf16>,
    %c0_5 = arith.constant 0 : index
    %c0_6 = arith.constant 0 : index
    %5 = vector.load %arg3[%c0_5, %c0_6] : memref<1x128xf32, #tpu.memory_space<vmem>>, vector<1x128xf32>
    %6 = vector.broadcast %5 : vector<1x128xf32> to vector<128x128xf32>
    %7 = arith.mulf %2, %6 : vector<128x128xf32>
    %cst_7 = arith.constant dense<0.000000e+00> : vector<128xf32>
    %8 = vector.multi_reduction <add>, %7, %cst_7 [1] : vector<128x128xf32> to vector<128xf32>
    %9 = vector.shape_cast %8 : vector<128xf32> to vector<128x1xf32>
    %10 = tpu.transpose %9, [1, 0] : vector<128x1xf32> -> vector<1x128xf32>
    %c0_8 = arith.constant 0 : index
    %c0_9 = arith.constant 0 : index
    %11 = vector.load %arg5[%c0_8, %c0_9] : memref<1x128xf32, #tpu.memory_space<vmem>>, vector<1x128xf32>
    tpu.vector_store %arg5[%c0_8, %c0_9], %10 {strides = array<i32>} : memref<1x128xf32, #tpu.memory_space<vmem>>, vector<1x128xf32>,
    return
  }
  func.func @transform_0(%arg0: i32) -> (i32, i32) {
    %c0_i32 = arith.constant 0 : i32
    %c0_i32_0 = arith.constant 0 : i32
    return %arg0, %c0_i32 : i32, i32
  }
  func.func @transform_1(%arg0: i32) -> (i32, i32) {
    %c0_i32 = arith.constant 0 : i32
    %c0_i32_0 = arith.constant 0 : i32
    %c0_i32_1 = arith.constant 0 : i32
    return %c0_i32, %c0_i32_0 : i32, i32
  }
  func.func @transform_2(%arg0: i32) -> (i32, i32) {
    %c0_i32 = arith.constant 0 : i32
    %c0_i32_0 = arith.constant 0 : i32
    %c0_i32_1 = arith.constant 0 : i32
    return %c0_i32, %c0_i32_0 : i32, i32
  }
  func.func @transform_3(%arg0: i32) -> (i32, i32) {
    %c0_i32 = arith.constant 0 : i32
    %c0_i32_0 = arith.constant 0 : i32
    return %arg0, %c0_i32 : i32, i32
  }
  func.func @transform_4(%arg0: i32) -> (i32, i32) {
    %c0_i32 = arith.constant 0 : i32
    %c0_i32_0 = arith.constant 0 : i32
    return %c0_i32, %arg0 : i32, i32
  }
}

module attributes {stable_mosaic.version = 11 : i64} {
  func.func @_gat_attn_kernel(%arg0: i32, %arg1: i32, %arg2: memref<128x128xbf16, #tpu.memory_space<vmem>>, %arg3: memref<128x128xbf16, #tpu.memory_space<vmem>>, %arg4: memref<1x128xf32, #tpu.memory_space<vmem>>, %arg5: memref<128x128xbf16, #tpu.memory_space<vmem>>, %arg6: memref<1x128xf32, #tpu.memory_space<vmem>>, %arg7: memref<1x128xf32, #tpu.memory_space<vmem>>, %arg8: memref<128x128xbf16, #tpu.memory_space<vmem>>, %arg9: memref<1x128xf32, #tpu.memory_space<vmem>>, %arg10: memref<1x128xf32, #tpu.memory_space<vmem>>, %arg11: memref<128x128xbf16, #tpu.memory_space<vmem>>, %arg12: memref<1x128xf32, #tpu.memory_space<vmem>>, %arg13: memref<128x1xf32, #tpu.memory_space<vmem>>, %arg14: memref<128x1xf32, #tpu.memory_space<vmem>>, %arg15: memref<128x128xf32, #tpu.memory_space<vmem>>) attributes {dimension_semantics = [#tpu.dimension_semantics<parallel>, #tpu.dimension_semantics<arbitrary>], iteration_bounds = array<i64: 1, 1>, scalar_prefetch = 0 : i64, scratch_operands = 3 : i64, tpu.core_type = #tpu.core_type<tc>, window_params = [{transform_indices = @transform_0, window_bounds = array<i64: 128, 128>}, {transform_indices = @transform_1, window_bounds = array<i64: 128, 128>}, {transform_indices = @transform_2, window_bounds = array<i64: 1, 128>}, {transform_indices = @transform_3, window_bounds = array<i64: 128, 128>}, {pipeline_mode = #tpu.pipeline_mode<synchronous>, transform_indices = @transform_4, window_bounds = array<i64: 1, 128>}, {pipeline_mode = #tpu.pipeline_mode<synchronous>, transform_indices = @transform_5, window_bounds = array<i64: 1, 128>}, {pipeline_mode = #tpu.pipeline_mode<synchronous>, transform_indices = @transform_6, window_bounds = array<i64: 128, 128>}, {pipeline_mode = #tpu.pipeline_mode<synchronous>, transform_indices = @transform_7, window_bounds = array<i64: 1, 128>}, {pipeline_mode = #tpu.pipeline_mode<synchronous>, transform_indices = @transform_8, window_bounds = array<i64: 1, 128>}, {transform_indices = @transform_9, window_bounds = array<i64: 128, 128>}, {transform_indices = @transform_10, window_bounds = array<i64: 1, 128>}]} {
    %c0_i32 = arith.constant 0 : i32
    %0 = arith.cmpi eq, %arg1, %c0_i32 : i32
    %1 = arith.extui %0 : i1 to i32
    %c0_i32_0 = arith.constant 0 : i32
    %2 = arith.cmpi ne, %1, %c0_i32_0 : i32
    scf.if %2 {
      %cst_31 = arith.constant -1.000000e+30 : f32
      %53 = vector.broadcast %cst_31 : f32 to vector<128x1xf32>
      %c0_32 = arith.constant 0 : index
      %c0_33 = arith.constant 0 : index
      %54 = vector.load %arg13[%c0_32, %c0_33] : memref<128x1xf32, #tpu.memory_space<vmem>>, vector<128x1xf32>
      tpu.vector_store %arg13[%c0_32, %c0_33], %53 {strides = array<i32>} : memref<128x1xf32, #tpu.memory_space<vmem>>, vector<128x1xf32>,
      %cst_34 = arith.constant 0.000000e+00 : f32
      %55 = vector.broadcast %cst_34 : f32 to vector<128x1xf32>
      %c0_35 = arith.constant 0 : index
      %c0_36 = arith.constant 0 : index
      %56 = vector.load %arg14[%c0_35, %c0_36] : memref<128x1xf32, #tpu.memory_space<vmem>>, vector<128x1xf32>
      tpu.vector_store %arg14[%c0_35, %c0_36], %55 {strides = array<i32>} : memref<128x1xf32, #tpu.memory_space<vmem>>, vector<128x1xf32>,
      %cst_37 = arith.constant 0.000000e+00 : f32
      %57 = vector.broadcast %cst_37 : f32 to vector<128x128xf32>
      %c0_38 = arith.constant 0 : index
      %c0_39 = arith.constant 0 : index
      %58 = vector.load %arg15[%c0_38, %c0_39] : memref<128x128xf32, #tpu.memory_space<vmem>>, vector<128x128xf32>
      tpu.vector_store %arg15[%c0_38, %c0_39], %57 {strides = array<i32>} : memref<128x128xf32, #tpu.memory_space<vmem>>, vector<128x128xf32>,
    } else {
    }
    %c0 = arith.constant 0 : index
    %c0_1 = arith.constant 0 : index
    %3 = vector.load %arg2[%c0, %c0_1] : memref<128x128xbf16, #tpu.memory_space<vmem>>, vector<128x128xbf16>
    %4 = arith.extf %3 : vector<128x128xbf16> to vector<128x128xf32>
    %c0_2 = arith.constant 0 : index
    %c0_3 = arith.constant 0 : index
    %5 = vector.load %arg6[%c0_2, %c0_3] : memref<1x128xf32, #tpu.memory_space<vmem>>, vector<1x128xf32>
    %6 = vector.broadcast %5 : vector<1x128xf32> to vector<128x128xf32>
    %7 = arith.mulf %4, %6 : vector<128x128xf32>
    %cst = arith.constant dense<0.000000e+00> : vector<128xf32>
    %8 = vector.multi_reduction <add>, %7, %cst [1] : vector<128x128xf32> to vector<128xf32>
    %9 = vector.shape_cast %8 : vector<128xf32> to vector<128x1xf32>
    %c0_4 = arith.constant 0 : index
    %c0_5 = arith.constant 0 : index
    %10 = vector.load %arg4[%c0_4, %c0_5] : memref<1x128xf32, #tpu.memory_space<vmem>>, vector<1x128xf32>
    %11 = vector.broadcast %9 : vector<128x1xf32> to vector<128x128xf32>
    %12 = vector.broadcast %10 : vector<1x128xf32> to vector<128x128xf32>
    %13 = arith.addf %11, %12 : vector<128x128xf32>
    %cst_6 = arith.constant 0.000000e+00 : f32
    %14 = vector.broadcast %cst_6 : f32 to vector<128x128xf32>
    %15 = arith.cmpf oge, %13, %14 : vector<128x128xf32>
    %cst_7 = arith.constant 2.000000e-01 : f32
    %16 = vector.broadcast %cst_7 : f32 to vector<128x128xf32>
    %17 = arith.mulf %16, %13 : vector<128x128xf32>
    %18 = arith.select %15, %13, %17 : vector<128x128xi1>, vector<128x128xf32>
    %c0_8 = arith.constant 0 : index
    %c0_9 = arith.constant 0 : index
    %19 = vector.load %arg5[%c0_8, %c0_9] : memref<128x128xbf16, #tpu.memory_space<vmem>>, vector<128x128xbf16>
    %20 = arith.extf %19 : vector<128x128xbf16> to vector<128x128xf32>
    %cst_10 = arith.constant 0.000000e+00 : f32
    %21 = vector.broadcast %cst_10 : f32 to vector<128x128xf32>
    %22 = arith.cmpf ogt, %20, %21 : vector<128x128xf32>
    %cst_11 = arith.constant -1.000000e+30 : f32
    %23 = vector.broadcast %cst_11 : f32 to vector<128x128xf32>
    %24 = arith.select %22, %18, %23 : vector<128x128xi1>, vector<128x128xf32>
    %c0_12 = arith.constant 0 : index
    %c0_13 = arith.constant 0 : index
    %25 = vector.load %arg13[%c0_12, %c0_13] : memref<128x1xf32, #tpu.memory_space<vmem>>, vector<128x1xf32>
    %cst_14 = arith.constant dense<0xFF800000> : vector<128xf32>
    %26 = vector.multi_reduction <maximumf>, %24, %cst_14 [1] : vector<128x128xf32> to vector<128xf32>
    %27 = vector.shape_cast %26 : vector<128xf32> to vector<128x1xf32>
    %28 = arith.maximumf %25, %27 : vector<128x1xf32>
    %29 = arith.subf %25, %28 : vector<128x1xf32>
    %30 = math.exp %29 : vector<128x1xf32>
    %31 = vector.broadcast %28 : vector<128x1xf32> to vector<128x128xf32>
    %32 = arith.subf %24, %31 : vector<128x128xf32>
    %33 = math.exp %32 : vector<128x128xf32>
    %34 = arith.mulf %33, %20 : vector<128x128xf32>
    %c0_15 = arith.constant 0 : index
    %c0_16 = arith.constant 0 : index
    %35 = vector.load %arg14[%c0_15, %c0_16] : memref<128x1xf32, #tpu.memory_space<vmem>>, vector<128x1xf32>
    %36 = arith.mulf %30, %35 : vector<128x1xf32>
    %cst_17 = arith.constant dense<0.000000e+00> : vector<128xf32>
    %37 = vector.multi_reduction <add>, %34, %cst_17 [1] : vector<128x128xf32> to vector<128xf32>
    %38 = vector.shape_cast %37 : vector<128xf32> to vector<128x1xf32>
    %39 = arith.addf %36, %38 : vector<128x1xf32>
    %c0_18 = arith.constant 0 : index
    %c0_19 = arith.constant 0 : index
    %40 = vector.load %arg14[%c0_18, %c0_19] : memref<128x1xf32, #tpu.memory_space<vmem>>, vector<128x1xf32>
    tpu.vector_store %arg14[%c0_18, %c0_19], %39 {strides = array<i32>} : memref<128x1xf32, #tpu.memory_space<vmem>>, vector<128x1xf32>,
    %c0_20 = arith.constant 0 : index
    %c0_21 = arith.constant 0 : index
    %41 = vector.load %arg15[%c0_20, %c0_21] : memref<128x128xf32, #tpu.memory_space<vmem>>, vector<128x128xf32>
    %42 = vector.broadcast %30 : vector<128x1xf32> to vector<128x128xf32>
    %43 = arith.mulf %42, %41 : vector<128x128xf32>
    %44 = arith.truncf %34 : vector<128x128xf32> to vector<128x128xbf16>
    %c0_22 = arith.constant 0 : index
    %c0_23 = arith.constant 0 : index
    %45 = vector.load %arg3[%c0_22, %c0_23] : memref<128x128xbf16, #tpu.memory_space<vmem>>, vector<128x128xbf16>
    %cst_24 = arith.constant dense<0.000000e+00> : vector<128x128xf32>
    %46 = tpu.matmul %44, %45, %cst_24 {dimension_numbers = #tpu.dot_dimension_numbers<[1], [0], [0], [1], [0, 0, 1, 1], [], []>} : vector<128x128xbf16>, vector<128x128xbf16>, vector<128x128xf32> -> vector<128x128xf32>
    %47 = arith.addf %43, %46 : vector<128x128xf32>
    %c0_25 = arith.constant 0 : index
    %c0_26 = arith.constant 0 : index
    %48 = vector.load %arg15[%c0_25, %c0_26] : memref<128x128xf32, #tpu.memory_space<vmem>>, vector<128x128xf32>
    tpu.vector_store %arg15[%c0_25, %c0_26], %47 {strides = array<i32>} : memref<128x128xf32, #tpu.memory_space<vmem>>, vector<128x128xf32>,
    %c0_27 = arith.constant 0 : index
    %c0_28 = arith.constant 0 : index
    %49 = vector.load %arg13[%c0_27, %c0_28] : memref<128x1xf32, #tpu.memory_space<vmem>>, vector<128x1xf32>
    tpu.vector_store %arg13[%c0_27, %c0_28], %28 {strides = array<i32>} : memref<128x1xf32, #tpu.memory_space<vmem>>, vector<128x1xf32>,
    %c0_i32_29 = arith.constant 0 : i32
    %50 = arith.cmpi eq, %arg1, %c0_i32_29 : i32
    %51 = arith.extui %50 : i1 to i32
    %c0_i32_30 = arith.constant 0 : i32
    %52 = arith.cmpi ne, %51, %c0_i32_30 : i32
    scf.if %52 {
      %c0_31 = arith.constant 0 : index
      %c0_32 = arith.constant 0 : index
      %53 = vector.load %arg14[%c0_31, %c0_32] : memref<128x1xf32, #tpu.memory_space<vmem>>, vector<128x1xf32>
      %54 = tpu.reciprocal %53 {approx = true} : vector<128x1xf32> -> vector<128x1xf32>
      %c0_33 = arith.constant 0 : index
      %c0_34 = arith.constant 0 : index
      %55 = vector.load %arg15[%c0_33, %c0_34] : memref<128x128xf32, #tpu.memory_space<vmem>>, vector<128x128xf32>
      %56 = vector.broadcast %54 : vector<128x1xf32> to vector<128x128xf32>
      %57 = arith.mulf %55, %56 : vector<128x128xf32>
      %c0_35 = arith.constant 0 : index
      %c0_36 = arith.constant 0 : index
      %58 = vector.load %arg7[%c0_35, %c0_36] : memref<1x128xf32, #tpu.memory_space<vmem>>, vector<1x128xf32>
      %59 = vector.broadcast %58 : vector<1x128xf32> to vector<128x128xf32>
      %60 = arith.addf %57, %59 : vector<128x128xf32>
      %cst_37 = arith.constant 0.000000e+00 : f32
      %61 = vector.broadcast %cst_37 : f32 to vector<128x128xf32>
      %62 = arith.maximumf %60, %61 : vector<128x128xf32>
      %63 = arith.truncf %62 : vector<128x128xf32> to vector<128x128xbf16>
      %c0_38 = arith.constant 0 : index
      %c0_39 = arith.constant 0 : index
      %64 = vector.load %arg8[%c0_38, %c0_39] : memref<128x128xbf16, #tpu.memory_space<vmem>>, vector<128x128xbf16>
      %cst_40 = arith.constant dense<0.000000e+00> : vector<128x128xf32>
      %65 = tpu.matmul %63, %64, %cst_40 {dimension_numbers = #tpu.dot_dimension_numbers<[1], [0], [0], [1], [0, 0, 1, 1], [], []>} : vector<128x128xbf16>, vector<128x128xbf16>, vector<128x128xf32> -> vector<128x128xf32>
      %c0_41 = arith.constant 0 : index
      %c0_42 = arith.constant 0 : index
      %66 = vector.load %arg9[%c0_41, %c0_42] : memref<1x128xf32, #tpu.memory_space<vmem>>, vector<1x128xf32>
      %67 = vector.broadcast %66 : vector<1x128xf32> to vector<128x128xf32>
      %68 = arith.addf %65, %67 : vector<128x128xf32>
      %69 = arith.truncf %68 : vector<128x128xf32> to vector<128x128xbf16>
      %c0_43 = arith.constant 0 : index
      %c0_44 = arith.constant 0 : index
      %70 = vector.load %arg11[%c0_43, %c0_44] : memref<128x128xbf16, #tpu.memory_space<vmem>>, vector<128x128xbf16>
      tpu.vector_store %arg11[%c0_43, %c0_44], %69 {strides = array<i32>} : memref<128x128xbf16, #tpu.memory_space<vmem>>, vector<128x128xbf16>,
      %c0_45 = arith.constant 0 : index
      %c0_46 = arith.constant 0 : index
      %71 = vector.load %arg10[%c0_45, %c0_46] : memref<1x128xf32, #tpu.memory_space<vmem>>, vector<1x128xf32>
      %72 = vector.broadcast %71 : vector<1x128xf32> to vector<128x128xf32>
      %73 = arith.mulf %68, %72 : vector<128x128xf32>
      %cst_47 = arith.constant dense<0.000000e+00> : vector<128xf32>
      %74 = vector.multi_reduction <add>, %73, %cst_47 [1] : vector<128x128xf32> to vector<128xf32>
      %75 = vector.shape_cast %74 : vector<128xf32> to vector<128x1xf32>
      %76 = tpu.transpose %75, [1, 0] : vector<128x1xf32> -> vector<1x128xf32>
      %c0_48 = arith.constant 0 : index
      %c0_49 = arith.constant 0 : index
      %77 = vector.load %arg12[%c0_48, %c0_49] : memref<1x128xf32, #tpu.memory_space<vmem>>, vector<1x128xf32>
      tpu.vector_store %arg12[%c0_48, %c0_49], %76 {strides = array<i32>} : memref<1x128xf32, #tpu.memory_space<vmem>>, vector<1x128xf32>,
    } else {
    }
    return
  }
  func.func @transform_0(%arg0: i32, %arg1: i32) -> (i32, i32) {
    %c0_i32 = arith.constant 0 : i32
    %c0_i32_0 = arith.constant 0 : i32
    return %arg0, %c0_i32 : i32, i32
  }
  func.func @transform_1(%arg0: i32, %arg1: i32) -> (i32, i32) {
    %c0_i32 = arith.constant 0 : i32
    %c0_i32_0 = arith.constant 0 : i32
    return %arg1, %c0_i32 : i32, i32
  }
  func.func @transform_2(%arg0: i32, %arg1: i32) -> (i32, i32) {
    %c0_i32 = arith.constant 0 : i32
    %c0_i32_0 = arith.constant 0 : i32
    return %c0_i32, %arg1 : i32, i32
  }
  func.func @transform_3(%arg0: i32, %arg1: i32) -> (i32, i32) {
    %c0_i32 = arith.constant 0 : i32
    return %arg0, %arg1 : i32, i32
  }
  func.func @transform_4(%arg0: i32, %arg1: i32) -> (i32, i32) {
    %c0_i32 = arith.constant 0 : i32
    %c0_i32_0 = arith.constant 0 : i32
    %c0_i32_1 = arith.constant 0 : i32
    return %c0_i32, %c0_i32_0 : i32, i32
  }
  func.func @transform_5(%arg0: i32, %arg1: i32) -> (i32, i32) {
    %c0_i32 = arith.constant 0 : i32
    %c0_i32_0 = arith.constant 0 : i32
    %c0_i32_1 = arith.constant 0 : i32
    return %c0_i32, %c0_i32_0 : i32, i32
  }
  func.func @transform_6(%arg0: i32, %arg1: i32) -> (i32, i32) {
    %c0_i32 = arith.constant 0 : i32
    %c0_i32_0 = arith.constant 0 : i32
    %c0_i32_1 = arith.constant 0 : i32
    return %c0_i32, %c0_i32_0 : i32, i32
  }
  func.func @transform_7(%arg0: i32, %arg1: i32) -> (i32, i32) {
    %c0_i32 = arith.constant 0 : i32
    %c0_i32_0 = arith.constant 0 : i32
    %c0_i32_1 = arith.constant 0 : i32
    return %c0_i32, %c0_i32_0 : i32, i32
  }
  func.func @transform_8(%arg0: i32, %arg1: i32) -> (i32, i32) {
    %c0_i32 = arith.constant 0 : i32
    %c0_i32_0 = arith.constant 0 : i32
    %c0_i32_1 = arith.constant 0 : i32
    return %c0_i32, %c0_i32_0 : i32, i32
  }
  func.func @transform_9(%arg0: i32, %arg1: i32) -> (i32, i32) {
    %c0_i32 = arith.constant 0 : i32
    %c0_i32_0 = arith.constant 0 : i32
    return %arg0, %c0_i32 : i32, i32
  }
  func.func @transform_10(%arg0: i32, %arg1: i32) -> (i32, i32) {
    %c0_i32 = arith.constant 0 : i32
    %c0_i32_0 = arith.constant 0 : i32
    return %c0_i32, %arg0 : i32, i32
  }
}

module attributes {stable_mosaic.version = 11 : i64} {
  func.func @_gat_attn_kernel(%arg0: i32, %arg1: i32, %arg2: memref<128x128xbf16, #tpu.memory_space<vmem>>, %arg3: memref<128x128xbf16, #tpu.memory_space<vmem>>, %arg4: memref<1x128xf32, #tpu.memory_space<vmem>>, %arg5: memref<128x128xbf16, #tpu.memory_space<vmem>>, %arg6: memref<1x128xf32, #tpu.memory_space<vmem>>, %arg7: memref<1x128xf32, #tpu.memory_space<vmem>>, %arg8: memref<128x128xbf16, #tpu.memory_space<vmem>>, %arg9: memref<1x128xf32, #tpu.memory_space<vmem>>, %arg10: memref<1x128xf32, #tpu.memory_space<vmem>>, %arg11: memref<128x128xf32, #tpu.memory_space<vmem>>, %arg12: memref<1x128xf32, #tpu.memory_space<vmem>>, %arg13: memref<128x1xf32, #tpu.memory_space<vmem>>, %arg14: memref<128x1xf32, #tpu.memory_space<vmem>>, %arg15: memref<128x128xf32, #tpu.memory_space<vmem>>) attributes {dimension_semantics = [#tpu.dimension_semantics<parallel>, #tpu.dimension_semantics<arbitrary>], iteration_bounds = array<i64: 1, 1>, scalar_prefetch = 0 : i64, scratch_operands = 3 : i64, tpu.core_type = #tpu.core_type<tc>, window_params = [{transform_indices = @transform_0, window_bounds = array<i64: 128, 128>}, {transform_indices = @transform_1, window_bounds = array<i64: 128, 128>}, {transform_indices = @transform_2, window_bounds = array<i64: 1, 128>}, {transform_indices = @transform_3, window_bounds = array<i64: 128, 128>}, {pipeline_mode = #tpu.pipeline_mode<synchronous>, transform_indices = @transform_4, window_bounds = array<i64: 1, 128>}, {pipeline_mode = #tpu.pipeline_mode<synchronous>, transform_indices = @transform_5, window_bounds = array<i64: 1, 128>}, {pipeline_mode = #tpu.pipeline_mode<synchronous>, transform_indices = @transform_6, window_bounds = array<i64: 128, 128>}, {pipeline_mode = #tpu.pipeline_mode<synchronous>, transform_indices = @transform_7, window_bounds = array<i64: 1, 128>}, {pipeline_mode = #tpu.pipeline_mode<synchronous>, transform_indices = @transform_8, window_bounds = array<i64: 1, 128>}, {transform_indices = @transform_9, window_bounds = array<i64: 128, 128>}, {transform_indices = @transform_10, window_bounds = array<i64: 1, 128>}]} {
    %c0_i32 = arith.constant 0 : i32
    %0 = arith.cmpi eq, %arg1, %c0_i32 : i32
    %1 = arith.extui %0 : i1 to i32
    %c0_i32_0 = arith.constant 0 : i32
    %2 = arith.cmpi ne, %1, %c0_i32_0 : i32
    scf.if %2 {
      %cst_31 = arith.constant -1.000000e+30 : f32
      %53 = vector.broadcast %cst_31 : f32 to vector<128x1xf32>
      %c0_32 = arith.constant 0 : index
      %c0_33 = arith.constant 0 : index
      %54 = vector.load %arg13[%c0_32, %c0_33] : memref<128x1xf32, #tpu.memory_space<vmem>>, vector<128x1xf32>
      tpu.vector_store %arg13[%c0_32, %c0_33], %53 {strides = array<i32>} : memref<128x1xf32, #tpu.memory_space<vmem>>, vector<128x1xf32>,
      %cst_34 = arith.constant 0.000000e+00 : f32
      %55 = vector.broadcast %cst_34 : f32 to vector<128x1xf32>
      %c0_35 = arith.constant 0 : index
      %c0_36 = arith.constant 0 : index
      %56 = vector.load %arg14[%c0_35, %c0_36] : memref<128x1xf32, #tpu.memory_space<vmem>>, vector<128x1xf32>
      tpu.vector_store %arg14[%c0_35, %c0_36], %55 {strides = array<i32>} : memref<128x1xf32, #tpu.memory_space<vmem>>, vector<128x1xf32>,
      %cst_37 = arith.constant 0.000000e+00 : f32
      %57 = vector.broadcast %cst_37 : f32 to vector<128x128xf32>
      %c0_38 = arith.constant 0 : index
      %c0_39 = arith.constant 0 : index
      %58 = vector.load %arg15[%c0_38, %c0_39] : memref<128x128xf32, #tpu.memory_space<vmem>>, vector<128x128xf32>
      tpu.vector_store %arg15[%c0_38, %c0_39], %57 {strides = array<i32>} : memref<128x128xf32, #tpu.memory_space<vmem>>, vector<128x128xf32>,
    } else {
    }
    %c0 = arith.constant 0 : index
    %c0_1 = arith.constant 0 : index
    %3 = vector.load %arg2[%c0, %c0_1] : memref<128x128xbf16, #tpu.memory_space<vmem>>, vector<128x128xbf16>
    %4 = arith.extf %3 : vector<128x128xbf16> to vector<128x128xf32>
    %c0_2 = arith.constant 0 : index
    %c0_3 = arith.constant 0 : index
    %5 = vector.load %arg6[%c0_2, %c0_3] : memref<1x128xf32, #tpu.memory_space<vmem>>, vector<1x128xf32>
    %6 = vector.broadcast %5 : vector<1x128xf32> to vector<128x128xf32>
    %7 = arith.mulf %4, %6 : vector<128x128xf32>
    %cst = arith.constant dense<0.000000e+00> : vector<128xf32>
    %8 = vector.multi_reduction <add>, %7, %cst [1] : vector<128x128xf32> to vector<128xf32>
    %9 = vector.shape_cast %8 : vector<128xf32> to vector<128x1xf32>
    %c0_4 = arith.constant 0 : index
    %c0_5 = arith.constant 0 : index
    %10 = vector.load %arg4[%c0_4, %c0_5] : memref<1x128xf32, #tpu.memory_space<vmem>>, vector<1x128xf32>
    %11 = vector.broadcast %9 : vector<128x1xf32> to vector<128x128xf32>
    %12 = vector.broadcast %10 : vector<1x128xf32> to vector<128x128xf32>
    %13 = arith.addf %11, %12 : vector<128x128xf32>
    %cst_6 = arith.constant 0.000000e+00 : f32
    %14 = vector.broadcast %cst_6 : f32 to vector<128x128xf32>
    %15 = arith.cmpf oge, %13, %14 : vector<128x128xf32>
    %cst_7 = arith.constant 2.000000e-01 : f32
    %16 = vector.broadcast %cst_7 : f32 to vector<128x128xf32>
    %17 = arith.mulf %16, %13 : vector<128x128xf32>
    %18 = arith.select %15, %13, %17 : vector<128x128xi1>, vector<128x128xf32>
    %c0_8 = arith.constant 0 : index
    %c0_9 = arith.constant 0 : index
    %19 = vector.load %arg5[%c0_8, %c0_9] : memref<128x128xbf16, #tpu.memory_space<vmem>>, vector<128x128xbf16>
    %20 = arith.extf %19 : vector<128x128xbf16> to vector<128x128xf32>
    %cst_10 = arith.constant 0.000000e+00 : f32
    %21 = vector.broadcast %cst_10 : f32 to vector<128x128xf32>
    %22 = arith.cmpf ogt, %20, %21 : vector<128x128xf32>
    %cst_11 = arith.constant -1.000000e+30 : f32
    %23 = vector.broadcast %cst_11 : f32 to vector<128x128xf32>
    %24 = arith.select %22, %18, %23 : vector<128x128xi1>, vector<128x128xf32>
    %c0_12 = arith.constant 0 : index
    %c0_13 = arith.constant 0 : index
    %25 = vector.load %arg13[%c0_12, %c0_13] : memref<128x1xf32, #tpu.memory_space<vmem>>, vector<128x1xf32>
    %cst_14 = arith.constant dense<0xFF800000> : vector<128xf32>
    %26 = vector.multi_reduction <maximumf>, %24, %cst_14 [1] : vector<128x128xf32> to vector<128xf32>
    %27 = vector.shape_cast %26 : vector<128xf32> to vector<128x1xf32>
    %28 = arith.maximumf %25, %27 : vector<128x1xf32>
    %29 = arith.subf %25, %28 : vector<128x1xf32>
    %30 = math.exp %29 : vector<128x1xf32>
    %31 = vector.broadcast %28 : vector<128x1xf32> to vector<128x128xf32>
    %32 = arith.subf %24, %31 : vector<128x128xf32>
    %33 = math.exp %32 : vector<128x128xf32>
    %34 = arith.mulf %33, %20 : vector<128x128xf32>
    %c0_15 = arith.constant 0 : index
    %c0_16 = arith.constant 0 : index
    %35 = vector.load %arg14[%c0_15, %c0_16] : memref<128x1xf32, #tpu.memory_space<vmem>>, vector<128x1xf32>
    %36 = arith.mulf %30, %35 : vector<128x1xf32>
    %cst_17 = arith.constant dense<0.000000e+00> : vector<128xf32>
    %37 = vector.multi_reduction <add>, %34, %cst_17 [1] : vector<128x128xf32> to vector<128xf32>
    %38 = vector.shape_cast %37 : vector<128xf32> to vector<128x1xf32>
    %39 = arith.addf %36, %38 : vector<128x1xf32>
    %c0_18 = arith.constant 0 : index
    %c0_19 = arith.constant 0 : index
    %40 = vector.load %arg14[%c0_18, %c0_19] : memref<128x1xf32, #tpu.memory_space<vmem>>, vector<128x1xf32>
    tpu.vector_store %arg14[%c0_18, %c0_19], %39 {strides = array<i32>} : memref<128x1xf32, #tpu.memory_space<vmem>>, vector<128x1xf32>,
    %c0_20 = arith.constant 0 : index
    %c0_21 = arith.constant 0 : index
    %41 = vector.load %arg15[%c0_20, %c0_21] : memref<128x128xf32, #tpu.memory_space<vmem>>, vector<128x128xf32>
    %42 = vector.broadcast %30 : vector<128x1xf32> to vector<128x128xf32>
    %43 = arith.mulf %42, %41 : vector<128x128xf32>
    %44 = arith.truncf %34 : vector<128x128xf32> to vector<128x128xbf16>
    %c0_22 = arith.constant 0 : index
    %c0_23 = arith.constant 0 : index
    %45 = vector.load %arg3[%c0_22, %c0_23] : memref<128x128xbf16, #tpu.memory_space<vmem>>, vector<128x128xbf16>
    %cst_24 = arith.constant dense<0.000000e+00> : vector<128x128xf32>
    %46 = tpu.matmul %44, %45, %cst_24 {dimension_numbers = #tpu.dot_dimension_numbers<[1], [0], [0], [1], [0, 0, 1, 1], [], []>} : vector<128x128xbf16>, vector<128x128xbf16>, vector<128x128xf32> -> vector<128x128xf32>
    %47 = arith.addf %43, %46 : vector<128x128xf32>
    %c0_25 = arith.constant 0 : index
    %c0_26 = arith.constant 0 : index
    %48 = vector.load %arg15[%c0_25, %c0_26] : memref<128x128xf32, #tpu.memory_space<vmem>>, vector<128x128xf32>
    tpu.vector_store %arg15[%c0_25, %c0_26], %47 {strides = array<i32>} : memref<128x128xf32, #tpu.memory_space<vmem>>, vector<128x128xf32>,
    %c0_27 = arith.constant 0 : index
    %c0_28 = arith.constant 0 : index
    %49 = vector.load %arg13[%c0_27, %c0_28] : memref<128x1xf32, #tpu.memory_space<vmem>>, vector<128x1xf32>
    tpu.vector_store %arg13[%c0_27, %c0_28], %28 {strides = array<i32>} : memref<128x1xf32, #tpu.memory_space<vmem>>, vector<128x1xf32>,
    %c0_i32_29 = arith.constant 0 : i32
    %50 = arith.cmpi eq, %arg1, %c0_i32_29 : i32
    %51 = arith.extui %50 : i1 to i32
    %c0_i32_30 = arith.constant 0 : i32
    %52 = arith.cmpi ne, %51, %c0_i32_30 : i32
    scf.if %52 {
      %c0_31 = arith.constant 0 : index
      %c0_32 = arith.constant 0 : index
      %53 = vector.load %arg14[%c0_31, %c0_32] : memref<128x1xf32, #tpu.memory_space<vmem>>, vector<128x1xf32>
      %54 = tpu.reciprocal %53 {approx = true} : vector<128x1xf32> -> vector<128x1xf32>
      %c0_33 = arith.constant 0 : index
      %c0_34 = arith.constant 0 : index
      %55 = vector.load %arg15[%c0_33, %c0_34] : memref<128x128xf32, #tpu.memory_space<vmem>>, vector<128x128xf32>
      %56 = vector.broadcast %54 : vector<128x1xf32> to vector<128x128xf32>
      %57 = arith.mulf %55, %56 : vector<128x128xf32>
      %c0_35 = arith.constant 0 : index
      %c0_36 = arith.constant 0 : index
      %58 = vector.load %arg7[%c0_35, %c0_36] : memref<1x128xf32, #tpu.memory_space<vmem>>, vector<1x128xf32>
      %59 = vector.broadcast %58 : vector<1x128xf32> to vector<128x128xf32>
      %60 = arith.addf %57, %59 : vector<128x128xf32>
      %cst_37 = arith.constant 0.000000e+00 : f32
      %61 = vector.broadcast %cst_37 : f32 to vector<128x128xf32>
      %62 = arith.maximumf %60, %61 : vector<128x128xf32>
      %63 = arith.truncf %62 : vector<128x128xf32> to vector<128x128xbf16>
      %c0_38 = arith.constant 0 : index
      %c0_39 = arith.constant 0 : index
      %64 = vector.load %arg8[%c0_38, %c0_39] : memref<128x128xbf16, #tpu.memory_space<vmem>>, vector<128x128xbf16>
      %cst_40 = arith.constant dense<0.000000e+00> : vector<128x128xf32>
      %65 = tpu.matmul %63, %64, %cst_40 {dimension_numbers = #tpu.dot_dimension_numbers<[1], [0], [0], [1], [0, 0, 1, 1], [], []>} : vector<128x128xbf16>, vector<128x128xbf16>, vector<128x128xf32> -> vector<128x128xf32>
      %c0_41 = arith.constant 0 : index
      %c0_42 = arith.constant 0 : index
      %66 = vector.load %arg9[%c0_41, %c0_42] : memref<1x128xf32, #tpu.memory_space<vmem>>, vector<1x128xf32>
      %67 = vector.broadcast %66 : vector<1x128xf32> to vector<128x128xf32>
      %68 = arith.addf %65, %67 : vector<128x128xf32>
      %c0_43 = arith.constant 0 : index
      %c0_44 = arith.constant 0 : index
      %69 = vector.load %arg11[%c0_43, %c0_44] : memref<128x128xf32, #tpu.memory_space<vmem>>, vector<128x128xf32>
      tpu.vector_store %arg11[%c0_43, %c0_44], %68 {strides = array<i32>} : memref<128x128xf32, #tpu.memory_space<vmem>>, vector<128x128xf32>,
      %c0_45 = arith.constant 0 : index
      %c0_46 = arith.constant 0 : index
      %70 = vector.load %arg10[%c0_45, %c0_46] : memref<1x128xf32, #tpu.memory_space<vmem>>, vector<1x128xf32>
      %71 = vector.broadcast %70 : vector<1x128xf32> to vector<128x128xf32>
      %72 = arith.mulf %68, %71 : vector<128x128xf32>
      %cst_47 = arith.constant dense<0.000000e+00> : vector<128xf32>
      %73 = vector.multi_reduction <add>, %72, %cst_47 [1] : vector<128x128xf32> to vector<128xf32>
      %74 = vector.shape_cast %73 : vector<128xf32> to vector<128x1xf32>
      %75 = tpu.transpose %74, [1, 0] : vector<128x1xf32> -> vector<1x128xf32>
      %c0_48 = arith.constant 0 : index
      %c0_49 = arith.constant 0 : index
      %76 = vector.load %arg12[%c0_48, %c0_49] : memref<1x128xf32, #tpu.memory_space<vmem>>, vector<1x128xf32>
      tpu.vector_store %arg12[%c0_48, %c0_49], %75 {strides = array<i32>} : memref<1x128xf32, #tpu.memory_space<vmem>>, vector<1x128xf32>,
    } else {
    }
    return
  }
  func.func @transform_0(%arg0: i32, %arg1: i32) -> (i32, i32) {
    %c0_i32 = arith.constant 0 : i32
    %c0_i32_0 = arith.constant 0 : i32
    return %arg0, %c0_i32 : i32, i32
  }
  func.func @transform_1(%arg0: i32, %arg1: i32) -> (i32, i32) {
    %c0_i32 = arith.constant 0 : i32
    %c0_i32_0 = arith.constant 0 : i32
    return %arg1, %c0_i32 : i32, i32
  }
  func.func @transform_2(%arg0: i32, %arg1: i32) -> (i32, i32) {
    %c0_i32 = arith.constant 0 : i32
    %c0_i32_0 = arith.constant 0 : i32
    return %c0_i32, %arg1 : i32, i32
  }
  func.func @transform_3(%arg0: i32, %arg1: i32) -> (i32, i32) {
    %c0_i32 = arith.constant 0 : i32
    return %arg0, %arg1 : i32, i32
  }
  func.func @transform_4(%arg0: i32, %arg1: i32) -> (i32, i32) {
    %c0_i32 = arith.constant 0 : i32
    %c0_i32_0 = arith.constant 0 : i32
    %c0_i32_1 = arith.constant 0 : i32
    return %c0_i32, %c0_i32_0 : i32, i32
  }
  func.func @transform_5(%arg0: i32, %arg1: i32) -> (i32, i32) {
    %c0_i32 = arith.constant 0 : i32
    %c0_i32_0 = arith.constant 0 : i32
    %c0_i32_1 = arith.constant 0 : i32
    return %c0_i32, %c0_i32_0 : i32, i32
  }
  func.func @transform_6(%arg0: i32, %arg1: i32) -> (i32, i32) {
    %c0_i32 = arith.constant 0 : i32
    %c0_i32_0 = arith.constant 0 : i32
    %c0_i32_1 = arith.constant 0 : i32
    return %c0_i32, %c0_i32_0 : i32, i32
  }
  func.func @transform_7(%arg0: i32, %arg1: i32) -> (i32, i32) {
    %c0_i32 = arith.constant 0 : i32
    %c0_i32_0 = arith.constant 0 : i32
    %c0_i32_1 = arith.constant 0 : i32
    return %c0_i32, %c0_i32_0 : i32, i32
  }
  func.func @transform_8(%arg0: i32, %arg1: i32) -> (i32, i32) {
    %c0_i32 = arith.constant 0 : i32
    %c0_i32_0 = arith.constant 0 : i32
    %c0_i32_1 = arith.constant 0 : i32
    return %c0_i32, %c0_i32_0 : i32, i32
  }
  func.func @transform_9(%arg0: i32, %arg1: i32) -> (i32, i32) {
    %c0_i32 = arith.constant 0 : i32
    %c0_i32_0 = arith.constant 0 : i32
    return %arg0, %c0_i32 : i32, i32
  }
  func.func @transform_10(%arg0: i32, %arg1: i32) -> (i32, i32) {
    %c0_i32 = arith.constant 0 : i32
    %c0_i32_0 = arith.constant 0 : i32
    return %c0_i32, %arg0 : i32, i32
  }
}

</mosaic_0001>

<llo_original>
// kernel: gat_forward.3
$region0: #{gat_forward.3}
  #allocation0 [shape = 'u32[]', space=smem, size = 0x4, offset = 0x4, fixed_abs, tag = 'smem constant byte address 0x4 - core index']
  #allocation1 [shape = 'u32[144,128]{1,0:T(1,128)}', space=vmem, size = 0x12000, scoped, tag = 'internal scratch']
  %s0 = inlined_call_operand.vmem [shape: bf16[128,128], index: 0, kind: input, shape index: {}]
  %s1 = inlined_call_operand.vmem [shape: bf16[128,128], index: 1, kind: input, shape index: {}]
  %s2 = inlined_call_operand.vmem [shape: f32[1,128], index: 2, kind: input, shape index: {}]
  %s3 = inlined_call_operand.vmem [shape: bf16[128,128], index: 3, kind: output, shape index: {0}]
  %s4 = inlined_call_operand.vmem [shape: f32[1,128], index: 4, kind: output, shape index: {1}]
  %5 = xla_tuple %s3, %s4
  %s6 = sld [smem:[#allocation0]]
  $region30: #{gat_forward.3} parent=0
    _
  %s8 = ssub.s32 1, %s6
  %s9 = scalar_select 0, %s8, %s6
  // Predicated region
  $region2: #{gat_forward.3} parent=0 // pred_check
    _
  $region3: #{gat_forward.3} parent=0 // pred_check_branch
    %11 = sbr.rel (0) target = $region5
  $region4: #{gat_forward.3} parent=0 // pred_region
    _
  $region5: #{gat_forward.3} parent=0 // pred_fallthru
    _
  // Predicated region
  $region6: #{gat_forward.3} parent=0 // pred_check
    _
  $region7: #{gat_forward.3} parent=0 // pred_check_branch
    %13 = sbr.rel (0) target = $region9
  $region8: #{gat_forward.3} parent=0 // pred_region
    _
  $region9: #{gat_forward.3} parent=0 // pred_fallthru
    _
  // Predicated region
  $region10: #{gat_forward.3} parent=0 // pred_check
    _
  $region11: #{gat_forward.3} parent=0 // pred_check_branch
    %15 = sbr.rel (0) target = $region13
  $region12: #{gat_forward.3} parent=0 // pred_region
    _
  $region13: #{gat_forward.3} parent=0 // pred_fallthru
    _
  %v17 = vld [vmem:[%s0] sm:$0xf]
  %v18 = vld [vmem:[%s0 + $0x4] sm:$0xf]
  %v19 = vld [vmem:[%s0 + $0x8] sm:$0xf]
  %v20 = vld [vmem:[%s0 + $0xc] sm:$0xf]
  %v21 = vld [vmem:[%s0 + $0x10] sm:$0xf]
  %v22 = vld [vmem:[%s0 + $0x14] sm:$0xf]
  %v23 = vld [vmem:[%s0 + $0x18] sm:$0xf]
  %v24 = vld [vmem:[%s0 + $0x1c] sm:$0xf]
  %v25 = vld [vmem:[%s0 + $0x20] sm:$0xf]
  %v26 = vld [vmem:[%s0 + $0x24] sm:$0xf]
  %v27 = vld [vmem:[%s0 + $0x28] sm:$0xf]
  %v28 = vld [vmem:[%s0 + $0x2c] sm:$0xf]
  %v29 = vld [vmem:[%s0 + $0x30] sm:$0xf]
  %v30 = vld [vmem:[%s0 + $0x34] sm:$0xf]
  %v31 = vld [vmem:[%s0 + $0x38] sm:$0xf]
  %v32 = vld [vmem:[%s0 + $0x3c] sm:$0xf]
  %v33 = vld [vmem:[%s1] sm:$0xf]
  %v34 = vld [vmem:[%s1 + $0x4] sm:$0xf]
  %v35 = vld [vmem:[%s1 + $0x8] sm:$0xf]
  %v36 = vld [vmem:[%s1 + $0xc] sm:$0xf]
  %v37 = vld [vmem:[%s1 + $0x10] sm:$0xf]
  %v38 = vld [vmem:[%s1 + $0x14] sm:$0xf]
  %v39 = vld [vmem:[%s1 + $0x18] sm:$0xf]
  %v40 = vld [vmem:[%s1 + $0x1c] sm:$0xf]
  %v41 = vld [vmem:[%s1 + $0x20] sm:$0xf]
  %v42 = vld [vmem:[%s1 + $0x24] sm:$0xf]
  %v43 = vld [vmem:[%s1 + $0x28] sm:$0xf]
  %v44 = vld [vmem:[%s1 + $0x2c] sm:$0xf]
  %v45 = vld [vmem:[%s1 + $0x30] sm:$0xf]
  %v46 = vld [vmem:[%s1 + $0x34] sm:$0xf]
  %v47 = vld [vmem:[%s1 + $0x38] sm:$0xf]
  %v48 = vld [vmem:[%s1 + $0x3c] sm:$0xf]
  %v65 = vunpack.c.l.b16 %v17
  %v66 = vunpack.c.l.b16 %v18
  %v67 = vunpack.c.l.b16 %v19
  %v68 = vunpack.c.l.b16 %v20
  %v69 = vunpack.c.l.b16 %v21
  %v70 = vunpack.c.l.b16 %v22
  %v71 = vunpack.c.l.b16 %v23
  %v72 = vunpack.c.l.b16 %v24
  %v73 = vunpack.c.l.b16 %v25
  %v74 = vunpack.c.l.b16 %v26
  %v75 = vunpack.c.l.b16 %v27
  %v76 = vunpack.c.l.b16 %v28
  %v77 = vunpack.c.l.b16 %v29
  %v78 = vunpack.c.l.b16 %v30
  %v79 = vunpack.c.l.b16 %v31
  %v80 = vunpack.c.l.b16 %v32
  %v81 = vpack.c.b16 %v66, %v65
  %v82 = vpack.c.b16 %v68, %v67
  %v83 = vpack.c.b16 %v70, %v69
  %v84 = vpack.c.b16 %v72, %v71
  %v85 = vpack.c.b16 %v74, %v73
  %v86 = vpack.c.b16 %v76, %v75
  %v87 = vpack.c.b16 %v78, %v77
  %v88 = vpack.c.b16 %v80, %v79
  %v113 = vunpack.c.l.b16 %v33
  %v114 = vunpack.c.l.b16 %v34
  %v115 = vunpack.c.l.b16 %v35
  %v116 = vunpack.c.l.b16 %v36
  %v117 = vunpack.c.l.b16 %v37
  %v118 = vunpack.c.l.b16 %v38
  %v119 = vunpack.c.l.b16 %v39
  %v120 = vunpack.c.l.b16 %v40
  %v121 = vunpack.c.l.b16 %v41
  %v122 = vunpack.c.l.b16 %v42
  %v123 = vunpack.c.l.b16 %v43
  %v124 = vunpack.c.l.b16 %v44
  %v125 = vunpack.c.l.b16 %v45
  %v126 = vunpack.c.l.b16 %v46
  %v127 = vunpack.c.l.b16 %v47
  %v128 = vunpack.c.l.b16 %v48
  %v129 = vpack.c.b16 %v114, %v113
  %v130 = vpack.c.b16 %v116, %v115
  %v131 = vpack.c.b16 %v118, %v117
  %v132 = vpack.c.b16 %v120, %v119
  %v133 = vpack.c.b16 %v122, %v121
  %v134 = vpack.c.b16 %v124, %v123
  %v135 = vpack.c.b16 %v126, %v125
  %v136 = vpack.c.b16 %v128, %v127
  %145 = vmatprep.subr.bf16.mxu0 0
  %146 = vmatpush1.bf16.msra.mxu0 %v136
  %147 = vmatprep.subr.bf16.mxu0 0
  %148 = vmatpush1.bf16.msra.mxu0 %v135
  %149 = vmatprep.subr.bf16.mxu0 0
  %150 = vmatpush1.bf16.msra.mxu0 %v134
  %151 = vmatprep.subr.bf16.mxu0 0
  %152 = vmatpush1.bf16.msra.mxu0 %v133
  %153 = vmatprep.subr.bf16.mxu0 0
  %154 = vmatpush1.bf16.msra.mxu0 %v132
  %155 = vmatprep.subr.bf16.mxu0 0
  %156 = vmatpush1.bf16.msra.mxu0 %v131
  %157 = vmatprep.subr.bf16.mxu0 0
  %158 = vmatpush1.bf16.msra.mxu0 %v130
  %159 = vmatprep.subr.bf16.mxu0 0
  %160 = vmatpush1.bf16.msra.mxu0 %v129
  %161 = vmatprep.subr.bf16.mxu0 0
  %162 = vmatpush2.bf16.msra.mxu0 0
  %163 = vmatprep.subr.bf16.mxu0 0
  %164 = vmatpush2.bf16.msra.mxu0 0
  %165 = vmatprep.subr.bf16.mxu0 0
  %166 = vmatpush2.bf16.msra.mxu0 0
  %167 = vmatprep.subr.bf16.mxu0 0
  %168 = vmatpush2.bf16.msra.mxu0 0
  %169 = vmatprep.subr.bf16.mxu0 0
  %170 = vmatpush2.bf16.msra.mxu0 0
  %171 = vmatprep.subr.bf16.mxu0 0
  %172 = vmatpush2.bf16.msra.mxu0 0
  %173 = vmatprep.subr.bf16.mxu0 0
  %174 = vmatpush2.bf16.msra.mxu0 0
  %175 = vmatprep.subr.bf16.mxu0 0
  %176 = vmatpush2.bf16.msra.mxu0 0
  %177 = vmatprep.mubr.bf16.mxu0 0
  %178 = vmatmul.mubr.bf16.gmra.mxu0 %v81
  %v179 = vpop.f32.mrf.mxu0
  %v180 = vadd.f32 0.0, %v179
  %v181 = vpop.f32.mrf.mxu0
  %v182 = vpop.f32.mrf.mxu0
  %v183 = vadd.f32 0.0, %v182
  %v184 = vpop.f32.mrf.mxu0
  %185 = vmatprep.mubr.bf16.mxu0 0
  %186 = vmatmul.mubr.bf16.gmra.mxu0 %v82
  %v187 = vpop.f32.mrf.mxu0
  %v188 = vadd.f32 0.0, %v187
  %v189 = vpop.f32.mrf.mxu0
  %v190 = vpop.f32.mrf.mxu0
  %v191 = vadd.f32 0.0, %v190
  %v192 = vpop.f32.mrf.mxu0
  %193 = vmatprep.mubr.bf16.mxu0 0
  %194 = vmatmul.mubr.bf16.gmra.mxu0 %v83
  %v195 = vpop.f32.mrf.mxu0
  %v196 = vadd.f32 0.0, %v195
  %v197 = vpop.f32.mrf.mxu0
  %v198 = vpop.f32.mrf.mxu0
  %v199 = vadd.f32 0.0, %v198
  %v200 = vpop.f32.mrf.mxu0
  %201 = vmatprep.mubr.bf16.mxu0 0
  %202 = vmatmul.mubr.bf16.gmra.mxu0 %v84
  %v203 = vpop.f32.mrf.mxu0
  %v204 = vadd.f32 0.0, %v203
  %v205 = vpop.f32.mrf.mxu0
  %v206 = vpop.f32.mrf.mxu0
  %v207 = vadd.f32 0.0, %v206
  %v208 = vpop.f32.mrf.mxu0
  %209 = vmatprep.mubr.bf16.mxu0 0
  %210 = vmatmul.mubr.bf16.gmra.mxu0 %v85
  %v211 = vpop.f32.mrf.mxu0
  %v212 = vadd.f32 0.0, %v211
  %v213 = vpop.f32.mrf.mxu0
  %v214 = vpop.f32.mrf.mxu0
  %v215 = vadd.f32 0.0, %v214
  %v216 = vpop.f32.mrf.mxu0
  %217 = vmatprep.mubr.bf16.mxu0 0
  %218 = vmatmul.mubr.bf16.gmra.mxu0 %v86
  %v219 = vpop.f32.mrf.mxu0
  %v220 = vadd.f32 0.0, %v219
  %v221 = vpop.f32.mrf.mxu0
  %v222 = vpop.f32.mrf.mxu0
  %v223 = vadd.f32 0.0, %v222
  %v224 = vpop.f32.mrf.mxu0
  %225 = vmatprep.mubr.bf16.mxu0 0
  %226 = vmatmul.mubr.bf16.gmra.mxu0 %v87
  %v227 = vpop.f32.mrf.mxu0
  %v228 = vadd.f32 0.0, %v227
  %v229 = vpop.f32.mrf.mxu0
  %v230 = vpop.f32.mrf.mxu0
  %v231 = vadd.f32 0.0, %v230
  %v232 = vpop.f32.mrf.mxu0
  %233 = vmatprep.mubr.bf16.mxu0 0
  %234 = vmatmul.mubr.bf16.gmra.mxu0 %v88
  %v235 = vpop.f32.mrf.mxu0
  %v236 = vadd.f32 0.0, %v235
  %v237 = vpop.f32.mrf.mxu0
  %v238 = vpop.f32.mrf.mxu0
  %v239 = vadd.f32 0.0, %v238
  %v240 = vpop.f32.mrf.mxu0
  %241 = vdwg.mxu0
  %v242 = vpack.c.bf16 %v183, %v180
  %v243 = vpack.c.bf16 %v191, %v188
  %v244 = vpack.c.bf16 %v199, %v196
  %v245 = vpack.c.bf16 %v207, %v204
  %v246 = vpack.c.bf16 %v215, %v212
  %v247 = vpack.c.bf16 %v223, %v220
  %v248 = vpack.c.bf16 %v231, %v228
  %v249 = vpack.c.bf16 %v239, %v236
  %v258 = vunpack.c.l.b16 %v242
  %v259 = vunpack.c.h.b16 %v242
  %v260 = vunpack.c.l.b16 %v243
  %v261 = vunpack.c.h.b16 %v243
  %v262 = vunpack.c.l.b16 %v244
  %v263 = vunpack.c.h.b16 %v244
  %v264 = vunpack.c.l.b16 %v245
  %v265 = vunpack.c.h.b16 %v245
  %v266 = vunpack.c.l.b16 %v246
  %v267 = vunpack.c.h.b16 %v246
  %v268 = vunpack.c.l.b16 %v247
  %v269 = vunpack.c.h.b16 %v247
  %v270 = vunpack.c.l.b16 %v248
  %v271 = vunpack.c.h.b16 %v248
  %v272 = vunpack.c.l.b16 %v249
  %v273 = vunpack.c.h.b16 %v249
  %v274 = vpack.c.b16 %v258, %v258
  %v275 = vpack.c.b16 %v259, %v259
  %v276 = vpack.c.b16 %v260, %v260
  %v277 = vpack.c.b16 %v261, %v261
  %v278 = vpack.c.b16 %v262, %v262
  %v279 = vpack.c.b16 %v263, %v263
  %v280 = vpack.c.b16 %v264, %v264
  %v281 = vpack.c.b16 %v265, %v265
  %v282 = vpack.c.b16 %v266, %v266
  %v283 = vpack.c.b16 %v267, %v267
  %v284 = vpack.c.b16 %v268, %v268
  %v285 = vpack.c.b16 %v269, %v269
  %v286 = vpack.c.b16 %v270, %v270
  %v287 = vpack.c.b16 %v271, %v271
  %v288 = vpack.c.b16 %v272, %v272
  %v289 = vpack.c.b16 %v273, %v273
  %306 = vst [vmem:[%s3] sm:$0xf] %v274
  %307 = vst [vmem:[%s3 + $0x4] sm:$0xf] %v275
  %308 = vst [vmem:[%s3 + $0x8] sm:$0xf] %v276
  %309 = vst [vmem:[%s3 + $0xc] sm:$0xf] %v277
  %310 = vst [vmem:[%s3 + $0x10] sm:$0xf] %v278
  %311 = vst [vmem:[%s3 + $0x14] sm:$0xf] %v279
  %312 = vst [vmem:[%s3 + $0x18] sm:$0xf] %v280
  %313 = vst [vmem:[%s3 + $0x1c] sm:$0xf] %v281
  %314 = vst [vmem:[%s3 + $0x20] sm:$0xf] %v282
  %315 = vst [vmem:[%s3 + $0x24] sm:$0xf] %v283
  %316 = vst [vmem:[%s3 + $0x28] sm:$0xf] %v284
  %317 = vst [vmem:[%s3 + $0x2c] sm:$0xf] %v285
  %318 = vst [vmem:[%s3 + $0x30] sm:$0xf] %v286
  %319 = vst [vmem:[%s3 + $0x34] sm:$0xf] %v287
  %320 = vst [vmem:[%s3 + $0x38] sm:$0xf] %v288
  %321 = vst [vmem:[%s3 + $0x3c] sm:$0xf] %v289
  %v322 = vld [vmem:[%s2] sm:$0x1]
  %v324 = vlaneseq
  %v325 = vshrl.u32 %v324, 7
  %v326 = vsub.s32 0, %v325
  %v327 = vrot.slane %v322, %v326
  %v329 = vmul.f32 %v180, %v327
  %v330 = vmul.f32 %v183, %v327
  %v331 = vmul.f32 %v188, %v327
  %v332 = vmul.f32 %v191, %v327
  %v333 = vmul.f32 %v196, %v327
  %v334 = vmul.f32 %v199, %v327
  %v335 = vmul.f32 %v204, %v327
  %v336 = vmul.f32 %v207, %v327
  %v337 = vmul.f32 %v212, %v327
  %v338 = vmul.f32 %v215, %v327
  %v339 = vmul.f32 %v220, %v327
  %v340 = vmul.f32 %v223, %v327
  %v341 = vmul.f32 %v228, %v327
  %v342 = vmul.f32 %v231, %v327
  %v343 = vmul.f32 %v236, %v327
  %v344 = vmul.f32 %v239, %v327
  %345 = vadd.xlane.f32.xlu0 %v329
  %v346 = vpop.xlane.xlu0 %345
  %347 = vadd.xlane.f32.xlu0 %v330
  %v348 = vpop.xlane.xlu0 %347
  %349 = vadd.xlane.f32.xlu0 %v331
  %v350 = vpop.xlane.xlu0 %349
  %351 = vadd.xlane.f32.xlu0 %v332
  %v352 = vpop.xlane.xlu0 %351
  %353 = vadd.xlane.f32.xlu0 %v333
  %v354 = vpop.xlane.xlu0 %353
  %355 = vadd.xlane.f32.xlu0 %v334
  %v356 = vpop.xlane.xlu0 %355
  %357 = vadd.xlane.f32.xlu0 %v335
  %v358 = vpop.xlane.xlu0 %357
  %359 = vadd.xlane.f32.xlu0 %v336
  %v360 = vpop.xlane.xlu0 %359
  %361 = vadd.xlane.f32.xlu0 %v337
  %v362 = vpop.xlane.xlu0 %361
  %363 = vadd.xlane.f32.xlu0 %v338
  %v364 = vpop.xlane.xlu0 %363
  %365 = vadd.xlane.f32.xlu0 %v339
  %v366 = vpop.xlane.xlu0 %365
  %367 = vadd.xlane.f32.xlu0 %v340
  %v368 = vpop.xlane.xlu0 %367
  %369 = vadd.xlane.f32.xlu0 %v341
  %v370 = vpop.xlane.xlu0 %369
  %371 = vadd.xlane.f32.xlu0 %v342
  %v372 = vpop.xlane.xlu0 %371
  %373 = vadd.xlane.f32.xlu0 %v343
  %v374 = vpop.xlane.xlu0 %373
  %375 = vadd.xlane.f32.xlu0 %v344
  %v376 = vpop.xlane.xlu0 %375
  %377 = vxpose.xlu0.b32.start [1/16] %v346, 128
  %378 = vxpose.xlu0.b32.cont [2/16] %v348, 128
  %379 = vxpose.xlu0.b32.cont [3/16] %v350, 128
  %380 = vxpose.xlu0.b32.cont [4/16] %v352, 128
  %381 = vxpose.xlu0.b32.cont [5/16] %v354, 128
  %382 = vxpose.xlu0.b32.cont [6/16] %v356, 128
  %383 = vxpose.xlu0.b32.cont [7/16] %v358, 128
  %384 = vxpose.xlu0.b32.cont [8/16] %v360, 128
  %385 = vxpose.xlu0.b32.cont [9/16] %v362, 128
  %386 = vxpose.xlu0.b32.cont [10/16] %v364, 128
  %387 = vxpose.xlu0.b32.cont [11/16] %v366, 128
  %388 = vxpose.xlu0.b32.cont [12/16] %v368, 128
  %389 = vxpose.xlu0.b32.cont [13/16] %v370, 128
  %390 = vxpose.xlu0.b32.cont [14/16] %v372, 128
  %391 = vxpose.xlu0.b32.cont [15/16] %v374, 128
  %392 = vxpose.xlu0.b32.end [16/16] %v376, 128
  %v393 = vpop.trf.xlu0
  %v394 = vpop.trf.xlu0
  %v395 = vpop.trf.xlu0
  %v396 = vpop.trf.xlu0
  %v397 = vpop.trf.xlu0
  %v398 = vpop.trf.xlu0
  %v399 = vpop.trf.xlu0
  %v400 = vpop.trf.xlu0
  %v401 = vpop.trf.xlu0
  %v402 = vpop.trf.xlu0
  %v403 = vpop.trf.xlu0
  %v404 = vpop.trf.xlu0
  %v405 = vpop.trf.xlu0
  %v406 = vpop.trf.xlu0
  %v407 = vpop.trf.xlu0
  %v408 = vpop.trf.xlu0
  %409 = vst [vmem:[%s4] sm:$0x1] %v393
  // Predicated region
  $region14: #{gat_forward.3} parent=0 // pred_check
    _
  $region15: #{gat_forward.3} parent=0 // pred_check_branch
    %411 = sbr.rel (0) target = $region17
  $region16: #{gat_forward.3} parent=0 // pred_region
    _
  $region17: #{gat_forward.3} parent=0 // pred_fallthru
    _
  // Predicated region
  $region18: #{gat_forward.3} parent=0 // pred_check
    _
  $region19: #{gat_forward.3} parent=0 // pred_check_branch
    %413 = sbr.rel (0) target = $region21
  $region20: #{gat_forward.3} parent=0 // pred_region
    _
  $region21: #{gat_forward.3} parent=0 // pred_fallthru
    _
  // Predicated region
  $region22: #{gat_forward.3} parent=0 // pred_check
    _
  $region23: #{gat_forward.3} parent=0 // pred_check_branch
    %415 = sbr.rel (0) target = $region25
  $region24: #{gat_forward.3} parent=0 // pred_region
    _
  $region25: #{gat_forward.3} parent=0 // pred_fallthru
    _
  // Predicated region
  $region26: #{gat_forward.3} parent=0 // pred_check
    _
  $region27: #{gat_forward.3} parent=0 // pred_check_branch
    %417 = sbr.rel (0) target = $region29
  $region28: #{gat_forward.3} parent=0 // pred_region
    _
  $region29: #{gat_forward.3} parent=0 // pred_fallthru
    _

// kernel: gat_forward.5
$region0: #{gat_forward.5}
  #allocation0 [shape = 'u32[]', space=smem, size = 0x4, offset = 0x4, fixed_abs, tag = 'smem constant byte address 0x4 - core index']
  #allocation1 [shape = 'u32[144,128]{1,0:T(1,128)}', space=vmem, size = 0x12000, scoped, tag = 'internal scratch']
  #allocation2 [shape = 'f32[128,1]{1,0:T(8,128)}', space=vmem, size = 0x10000, scoped, tag = 'scratch operand']
  #allocation3 [shape = 'f32[128,1]{1,0:T(8,128)}', space=vmem, size = 0x10000, scoped, tag = 'scratch operand']
  #allocation4 [shape = 'f32[128,128]{1,0:T(8,128)}', space=vmem, size = 0x10000, scoped, tag = 'scratch operand']
  %s0 = inlined_call_operand.vmem [shape: bf16[128,128], index: 0, kind: input, shape index: {}, may-alias: {0,1}]
  %s1 = inlined_call_operand.vmem [shape: bf16[128,128], index: 1, kind: input, shape index: {}, may-alias: {0,1}]
  %s2 = inlined_call_operand.vmem [shape: f32[1,128], index: 2, kind: input, shape index: {}]
  %s3 = inlined_call_operand.vmem [shape: bf16[128,128], index: 3, kind: input, shape index: {}]
  %s4 = inlined_call_operand.vmem [shape: f32[1,128], index: 4, kind: input, shape index: {}]
  %s5 = inlined_call_operand.vmem [shape: f32[1,128], index: 5, kind: input, shape index: {}]
  %s6 = inlined_call_operand.vmem [shape: bf16[128,128], index: 6, kind: input, shape index: {}]
  %s7 = inlined_call_operand.vmem [shape: f32[1,128], index: 7, kind: input, shape index: {}]
  %s8 = inlined_call_operand.vmem [shape: f32[1,128], index: 8, kind: input, shape index: {}]
  %s9 = inlined_call_operand.vmem [shape: f32[128,128], index: 9, kind: output, shape index: {0}]
  %s10 = inlined_call_operand.hbm [shape: f32[1,128], index: 10, kind: output, shape index: {1}]
  %11 = xla_tuple %s9, %s10
  %s12 = sld [smem:[#allocation0]]
  $region62: #{gat_forward.5} parent=0
    _
  %s14 = ssub.s32 1, %s12
  %s15 = scalar_select 0, %s14, %s12
  $region1: #{gat_forward.5} parent=0
    #allocation5 [shape = 'u8[512]{0}', space=vmem, size = 0x400, scoped, tag = 'output window, operand 1, single buffered']
    #allocation6 [shape = 's32[1]{0}', space=sflag, size = 0x4, scoped, tag = 'scoped memory for gat_forward.5']
    %16 = vsyncpa [#allocation6], 0
    // Predicated region
    $region2: #{gat_forward.5} parent=1 // pred_check
      _
    $region3: #{gat_forward.5} parent=1 // pred_check_branch
      %18 = sbr.rel (0) target = $region5
    $region4: #{gat_forward.5} parent=1 // pred_region
      _
    $region5: #{gat_forward.5} parent=1 // pred_fallthru
      _
    // Predicated region
    $region6: #{gat_forward.5} parent=1 // pred_check
      _
    $region7: #{gat_forward.5} parent=1 // pred_check_branch
      %20 = sbr.rel (0) target = $region9
    $region8: #{gat_forward.5} parent=1 // pred_region
      _
    $region9: #{gat_forward.5} parent=1 // pred_fallthru
      _
    // Predicated region
    $region10: #{gat_forward.5} parent=1 // pred_check
      _
    $region11: #{gat_forward.5} parent=1 // pred_check_branch
      %22 = sbr.rel (0) target = $region13
    $region12: #{gat_forward.5} parent=1 // pred_region
      _
    $region13: #{gat_forward.5} parent=1 // pred_fallthru
      _
    // Predicated region
    $region14: #{gat_forward.5} parent=1 // pred_check
      _
    $region15: #{gat_forward.5} parent=1 // pred_check_branch
      %24 = sbr.rel (0) target = $region17
    $region16: #{gat_forward.5} parent=1 // pred_region
      _
    $region17: #{gat_forward.5} parent=1 // pred_fallthru
      _
    // Predicated region
    $region18: #{gat_forward.5} parent=1 // pred_check
      _
    $region19: #{gat_forward.5} parent=1 // pred_check_branch
      %26 = sbr.rel (0) target = $region21
    $region20: #{gat_forward.5} parent=1 // pred_region
      _
    $region21: #{gat_forward.5} parent=1 // pred_fallthru
      _
    // Predicated region
    $region22: #{gat_forward.5} parent=1 // pred_check
      _
    $region23: #{gat_forward.5} parent=1 // pred_check_branch
      %28 = sbr.rel (0) target = $region25
    $region24: #{gat_forward.5} parent=1 // pred_region
      _
    $region25: #{gat_forward.5} parent=1 // pred_fallthru
      _
    // Predicated region
    $region26: #{gat_forward.5} parent=1 // pred_check
      _
    $region27: #{gat_forward.5} parent=1 // pred_check_branch
      %30 = sbr.rel (0) target = $region29
    $region28: #{gat_forward.5} parent=1 // pred_region
      _
    $region29: #{gat_forward.5} parent=1 // pred_fallthru
      _
    // Predicated region
    $region30: #{gat_forward.5} parent=1 // pred_check
      _
    $region31: #{gat_forward.5} parent=1 // pred_check_branch
      %32 = sbr.rel (0) target = $region33
    $region32: #{gat_forward.5} parent=1 // pred_region
      _
    $region33: #{gat_forward.5} parent=1 // pred_fallthru
      _
    // Predicated region
    $region34: #{gat_forward.5} parent=1 // pred_check
      _
    $region35: #{gat_forward.5} parent=1 // pred_check_branch
      %34 = sbr.rel (0) target = $region37
    $region36: #{gat_forward.5} parent=1 // pred_region
      _
    $region37: #{gat_forward.5} parent=1 // pred_fallthru
      _
    %p36 = scmp.eq.s32.totalorder 0, 0
    // Predicated region
    $region38: #{gat_forward.5} parent=1 // pred_check
      %p37 = pneg %p36
    $region39: #{gat_forward.5} parent=1 // pred_check_branch
      %39 = sbr.rel (%p37) target = $region41
    $region40: #{gat_forward.5} parent=1 // pred_region
      %vm40 = vcmask 7168
      %41 = vst.msk [vmem:[#allocation2] sm:$0xff] %vm40, -1e+30
      %42 = vst.msk [vmem:[#allocation2 + $0x8] sm:$0xff] %vm40, -1e+30
      %43 = vst.msk [vmem:[#allocation2 + $0x10] sm:$0xff] %vm40, -1e+30
      %44 = vst.msk [vmem:[#allocation2 + $0x18] sm:$0xff] %vm40, -1e+30
      %45 = vst.msk [vmem:[#allocation2 + $0x20] sm:$0xff] %vm40, -1e+30
      %46 = vst.msk [vmem:[#allocation2 + $0x28] sm:$0xff] %vm40, -1e+30
      %47 = vst.msk [vmem:[#allocation2 + $0x30] sm:$0xff] %vm40, -1e+30
      %48 = vst.msk [vmem:[#allocation2 + $0x38] sm:$0xff] %vm40, -1e+30
      %49 = vst.msk [vmem:[#allocation2 + $0x40] sm:$0xff] %vm40, -1e+30
      %50 = vst.msk [vmem:[#allocation2 + $0x48] sm:$0xff] %vm40, -1e+30
      %51 = vst.msk [vmem:[#allocation2 + $0x50] sm:$0xff] %vm40, -1e+30
      %52 = vst.msk [vmem:[#allocation2 + $0x58] sm:$0xff] %vm40, -1e+30
      %53 = vst.msk [vmem:[#allocation2 + $0x60] sm:$0xff] %vm40, -1e+30
      %54 = vst.msk [vmem:[#allocation2 + $0x68] sm:$0xff] %vm40, -1e+30
      %55 = vst.msk [vmem:[#allocation2 + $0x70] sm:$0xff] %vm40, -1e+30
      %56 = vst.msk [vmem:[#allocation2 + $0x78] sm:$0xff] %vm40, -1e+30
      %57 = vst.msk [vmem:[#allocation3] sm:$0xff] %vm40, 0.0
      %58 = vst.msk [vmem:[#allocation3 + $0x8] sm:$0xff] %vm40, 0.0
      %59 = vst.msk [vmem:[#allocation3 + $0x10] sm:$0xff] %vm40, 0.0
      %60 = vst.msk [vmem:[#allocation3 + $0x18] sm:$0xff] %vm40, 0.0
      %61 = vst.msk [vmem:[#allocation3 + $0x20] sm:$0xff] %vm40, 0.0
      %62 = vst.msk [vmem:[#allocation3 + $0x28] sm:$0xff] %vm40, 0.0
      %63 = vst.msk [vmem:[#allocation3 + $0x30] sm:$0xff] %vm40, 0.0
      %64 = vst.msk [vmem:[#allocation3 + $0x38] sm:$0xff] %vm40, 0.0
      %65 = vst.msk [vmem:[#allocation3 + $0x40] sm:$0xff] %vm40, 0.0
      %66 = vst.msk [vmem:[#allocation3 + $0x48] sm:$0xff] %vm40, 0.0
      %67 = vst.msk [vmem:[#allocation3 + $0x50] sm:$0xff] %vm40, 0.0
      %68 = vst.msk [vmem:[#allocation3 + $0x58] sm:$0xff] %vm40, 0.0
      %69 = vst.msk [vmem:[#allocation3 + $0x60] sm:$0xff] %vm40, 0.0
      %70 = vst.msk [vmem:[#allocation3 + $0x68] sm:$0xff] %vm40, 0.0
      %71 = vst.msk [vmem:[#allocation3 + $0x70] sm:$0xff] %vm40, 0.0
      %72 = vst.msk [vmem:[#allocation3 + $0x78] sm:$0xff] %vm40, 0.0
      %73 = vst [vmem:[#allocation4] sm:$0xff] 0.0
      %74 = vst [vmem:[#allocation4 + $0x8] sm:$0xff] 0.0
      %75 = vst [vmem:[#allocation4 + $0x10] sm:$0xff] 0.0
      %76 = vst [vmem:[#allocation4 + $0x18] sm:$0xff] 0.0
      %77 = vst [vmem:[#allocation4 + $0x20] sm:$0xff] 0.0
      %78 = vst [vmem:[#allocation4 + $0x28] sm:$0xff] 0.0
      %79 = vst [vmem:[#allocation4 + $0x30] sm:$0xff] 0.0
      %80 = vst [vmem:[#allocation4 + $0x38] sm:$0xff] 0.0
      %81 = vst [vmem:[#allocation4 + $0x40] sm:$0xff] 0.0
      %82 = vst [vmem:[#allocation4 + $0x48] sm:$0xff] 0.0
      %83 = vst [vmem:[#allocation4 + $0x50] sm:$0xff] 0.0
      %84 = vst [vmem:[#allocation4 + $0x58] sm:$0xff] 0.0
      %85 = vst [vmem:[#allocation4 + $0x60] sm:$0xff] 0.0
      %86 = vst [vmem:[#allocation4 + $0x68] sm:$0xff] 0.0
      %87 = vst [vmem:[#allocation4 + $0x70] sm:$0xff] 0.0
      %88 = vst [vmem:[#allocation4 + $0x78] sm:$0xff] 0.0
    $region41: #{gat_forward.5} parent=1 // pred_fallthru
      _
    %v89 = vld [vmem:[%s0] sm:$0xf]
    %v90 = vld [vmem:[%s0 + $0x4] sm:$0xf]
    %v91 = vld [vmem:[%s0 + $0x8] sm:$0xf]
    %v92 = vld [vmem:[%s0 + $0xc] sm:$0xf]
    %v93 = vld [vmem:[%s0 + $0x10] sm:$0xf]
    %v94 = vld [vmem:[%s0 + $0x14] sm:$0xf]
    %v95 = vld [vmem:[%s0 + $0x18] sm:$0xf]
    %v96 = vld [vmem:[%s0 + $0x1c] sm:$0xf]
    %v97 = vld [vmem:[%s0 + $0x20] sm:$0xf]
    %v98 = vld [vmem:[%s0 + $0x24] sm:$0xf]
    %v99 = vld [vmem:[%s0 + $0x28] sm:$0xf]
    %v100 = vld [vmem:[%s0 + $0x2c] sm:$0xf]
    %v101 = vld [vmem:[%s0 + $0x30] sm:$0xf]
    %v102 = vld [vmem:[%s0 + $0x34] sm:$0xf]
    %v103 = vld [vmem:[%s0 + $0x38] sm:$0xf]
    %v104 = vld [vmem:[%s0 + $0x3c] sm:$0xf]
    %v105 = vunpack.c.l.bf16 %v89
    %v106 = vunpack.c.l.bf16 %v90
    %v107 = vunpack.c.l.bf16 %v91
    %v108 = vunpack.c.l.bf16 %v92
    %v109 = vunpack.c.l.bf16 %v93
    %v110 = vunpack.c.l.bf16 %v94
    %v111 = vunpack.c.l.bf16 %v95
    %v112 = vunpack.c.l.bf16 %v96
    %v113 = vunpack.c.l.bf16 %v97
    %v114 = vunpack.c.l.bf16 %v98
    %v115 = vunpack.c.l.bf16 %v99
    %v116 = vunpack.c.l.bf16 %v100
    %v117 = vunpack.c.l.bf16 %v101
    %v118 = vunpack.c.l.bf16 %v102
    %v119 = vunpack.c.l.bf16 %v103
    %v120 = vunpack.c.l.bf16 %v104
    %v121 = vld [vmem:[%s4] sm:$0x1]
    %v123 = vlaneseq
    %v124 = vshrl.u32 %v123, 7
    %v125 = vsub.s32 0, %v124
    %v126 = vrot.slane %v121, %v125
    %v128 = vmul.f32 %v105, %v126
    %v129 = vmul.f32 %v106, %v126
    %v130 = vmul.f32 %v107, %v126
    %v131 = vmul.f32 %v108, %v126
    %v132 = vmul.f32 %v109, %v126
    %v133 = vmul.f32 %v110, %v126
    %v134 = vmul.f32 %v111, %v126
    %v135 = vmul.f32 %v112, %v126
    %v136 = vmul.f32 %v113, %v126
    %v137 = vmul.f32 %v114, %v126
    %v138 = vmul.f32 %v115, %v126
    %v139 = vmul.f32 %v116, %v126
    %v140 = vmul.f32 %v117, %v126
    %v141 = vmul.f32 %v118, %v126
    %v142 = vmul.f32 %v119, %v126
    %v143 = vmul.f32 %v120, %v126
    %144 = vadd.xlane.f32.xlu0 %v128
    %v145 = vpop.xlane.xlu0 %144
    %146 = vadd.xlane.f32.xlu0 %v129
    %v147 = vpop.xlane.xlu0 %146
    %148 = vadd.xlane.f32.xlu0 %v130
    %v149 = vpop.xlane.xlu0 %148
    %150 = vadd.xlane.f32.xlu0 %v131
    %v151 = vpop.xlane.xlu0 %150
    %152 = vadd.xlane.f32.xlu0 %v132
    %v153 = vpop.xlane.xlu0 %152
    %154 = vadd.xlane.f32.xlu0 %v133
    %v155 = vpop.xlane.xlu0 %154
    %156 = vadd.xlane.f32.xlu0 %v134
    %v157 = vpop.xlane.xlu0 %156
    %158 = vadd.xlane.f32.xlu0 %v135
    %v159 = vpop.xlane.xlu0 %158
    %160 = vadd.xlane.f32.xlu0 %v136
    %v161 = vpop.xlane.xlu0 %160
    %162 = vadd.xlane.f32.xlu0 %v137
    %v163 = vpop.xlane.xlu0 %162
    %164 = vadd.xlane.f32.xlu0 %v138
    %v165 = vpop.xlane.xlu0 %164
    %166 = vadd.xlane.f32.xlu0 %v139
    %v167 = vpop.xlane.xlu0 %166
    %168 = vadd.xlane.f32.xlu0 %v140
    %v169 = vpop.xlane.xlu0 %168
    %170 = vadd.xlane.f32.xlu0 %v141
    %v171 = vpop.xlane.xlu0 %170
    %172 = vadd.xlane.f32.xlu0 %v142
    %v173 = vpop.xlane.xlu0 %172
    %174 = vadd.xlane.f32.xlu0 %v143
    %v175 = vpop.xlane.xlu0 %174
    %v176 = vld [vmem:[%s2] sm:$0x1]
    %v178 = vlaneseq
    %v179 = vshrl.u32 %v178, 7
    %v180 = vsub.s32 0, %v179
    %v181 = vrot.slane %v176, %v180
    %v183 = vadd.f32 %v145, %v181
    %v184 = vadd.f32 %v147, %v181
    %v185 = vadd.f32 %v149, %v181
    %v186 = vadd.f32 %v151, %v181
    %v187 = vadd.f32 %v153, %v181
    %v188 = vadd.f32 %v155, %v181
    %v189 = vadd.f32 %v157, %v181
    %v190 = vadd.f32 %v159, %v181
    %v191 = vadd.f32 %v161, %v181
    %v192 = vadd.f32 %v163, %v181
    %v193 = vadd.f32 %v165, %v181
    %v194 = vadd.f32 %v167, %v181
    %v195 = vadd.f32 %v169, %v181
    %v196 = vadd.f32 %v171, %v181
    %v197 = vadd.f32 %v173, %v181
    %v198 = vadd.f32 %v175, %v181
    %vm199 = vcmp.ge.f32.partialorder %v183, 0.0
    %vm200 = vcmp.ge.f32.partialorder %v184, 0.0
    %vm201 = vcmp.ge.f32.partialorder %v185, 0.0
    %vm202 = vcmp.ge.f32.partialorder %v186, 0.0
    %vm203 = vcmp.ge.f32.partialorder %v187, 0.0
    %vm204 = vcmp.ge.f32.partialorder %v188, 0.0
    %vm205 = vcmp.ge.f32.partialorder %v189, 0.0
    %vm206 = vcmp.ge.f32.partialorder %v190, 0.0
    %vm207 = vcmp.ge.f32.partialorder %v191, 0.0
    %vm208 = vcmp.ge.f32.partialorder %v192, 0.0
    %vm209 = vcmp.ge.f32.partialorder %v193, 0.0
    %vm210 = vcmp.ge.f32.partialorder %v194, 0.0
    %vm211 = vcmp.ge.f32.partialorder %v195, 0.0
    %vm212 = vcmp.ge.f32.partialorder %v196, 0.0
    %vm213 = vcmp.ge.f32.partialorder %v197, 0.0
    %vm214 = vcmp.ge.f32.partialorder %v198, 0.0
    %v215 = vmul.f32 %v183, 0.2
    %v216 = vmul.f32 %v184, 0.2
    %v217 = vmul.f32 %v185, 0.2
    %v218 = vmul.f32 %v186, 0.2
    %v219 = vmul.f32 %v187, 0.2
    %v220 = vmul.f32 %v188, 0.2
    %v221 = vmul.f32 %v189, 0.2
    %v222 = vmul.f32 %v190, 0.2
    %v223 = vmul.f32 %v191, 0.2
    %v224 = vmul.f32 %v192, 0.2
    %v225 = vmul.f32 %v193, 0.2
    %v226 = vmul.f32 %v194, 0.2
    %v227 = vmul.f32 %v195, 0.2
    %v228 = vmul.f32 %v196, 0.2
    %v229 = vmul.f32 %v197, 0.2
    %v230 = vmul.f32 %v198, 0.2
    %v231 = vsel %vm199, %v183, %v215
    %v232 = vsel %vm200, %v184, %v216
    %v233 = vsel %vm201, %v185, %v217
    %v234 = vsel %vm202, %v186, %v218
    %v235 = vsel %vm203, %v187, %v219
    %v236 = vsel %vm204, %v188, %v220
    %v237 = vsel %vm205, %v189, %v221
    %v238 = vsel %vm206, %v190, %v222
    %v239 = vsel %vm207, %v191, %v223
    %v240 = vsel %vm208, %v192, %v224
    %v241 = vsel %vm209, %v193, %v225
    %v242 = vsel %vm210, %v194, %v226
    %v243 = vsel %vm211, %v195, %v227
    %v244 = vsel %vm212, %v196, %v228
    %v245 = vsel %vm213, %v197, %v229
    %v246 = vsel %vm214, %v198, %v230
    %v247 = vld [vmem:[%s3] sm:$0xf]
    %v248 = vld [vmem:[%s3 + $0x4] sm:$0xf]
    %v249 = vld [vmem:[%s3 + $0x8] sm:$0xf]
    %v250 = vld [vmem:[%s3 + $0xc] sm:$0xf]
    %v251 = vld [vmem:[%s3 + $0x10] sm:$0xf]
    %v252 = vld [vmem:[%s3 + $0x14] sm:$0xf]
    %v253 = vld [vmem:[%s3 + $0x18] sm:$0xf]
    %v254 = vld [vmem:[%s3 + $0x1c] sm:$0xf]
    %v255 = vld [vmem:[%s3 + $0x20] sm:$0xf]
    %v256 = vld [vmem:[%s3 + $0x24] sm:$0xf]
    %v257 = vld [vmem:[%s3 + $0x28] sm:$0xf]
    %v258 = vld [vmem:[%s3 + $0x2c] sm:$0xf]
    %v259 = vld [vmem:[%s3 + $0x30] sm:$0xf]
    %v260 = vld [vmem:[%s3 + $0x34] sm:$0xf]
    %v261 = vld [vmem:[%s3 + $0x38] sm:$0xf]
    %v262 = vld [vmem:[%s3 + $0x3c] sm:$0xf]
    %v263 = vunpack.c.l.bf16 %v247
    %v264 = vunpack.c.l.bf16 %v248
    %v265 = vunpack.c.l.bf16 %v249
    %v266 = vunpack.c.l.bf16 %v250
    %v267 = vunpack.c.l.bf16 %v251
    %v268 = vunpack.c.l.bf16 %v252
    %v269 = vunpack.c.l.bf16 %v253
    %v270 = vunpack.c.l.bf16 %v254
    %v271 = vunpack.c.l.bf16 %v255
    %v272 = vunpack.c.l.bf16 %v256
    %v273 = vunpack.c.l.bf16 %v257
    %v274 = vunpack.c.l.bf16 %v258
    %v275 = vunpack.c.l.bf16 %v259
    %v276 = vunpack.c.l.bf16 %v260
    %v277 = vunpack.c.l.bf16 %v261
    %v278 = vunpack.c.l.bf16 %v262
    %vm279 = vcmp.gt.f32.partialorder %v263, 0.0
    %vm280 = vcmp.gt.f32.partialorder %v264, 0.0
    %vm281 = vcmp.gt.f32.partialorder %v265, 0.0
    %vm282 = vcmp.gt.f32.partialorder %v266, 0.0
    %vm283 = vcmp.gt.f32.partialorder %v267, 0.0
    %vm284 = vcmp.gt.f32.partialorder %v268, 0.0
    %vm285 = vcmp.gt.f32.partialorder %v269, 0.0
    %vm286 = vcmp.gt.f32.partialorder %v270, 0.0
    %vm287 = vcmp.gt.f32.partialorder %v271, 0.0
    %vm288 = vcmp.gt.f32.partialorder %v272, 0.0
    %vm289 = vcmp.gt.f32.partialorder %v273, 0.0
    %vm290 = vcmp.gt.f32.partialorder %v274, 0.0
    %vm291 = vcmp.gt.f32.partialorder %v275, 0.0
    %vm292 = vcmp.gt.f32.partialorder %v276, 0.0
    %vm293 = vcmp.gt.f32.partialorder %v277, 0.0
    %vm294 = vcmp.gt.f32.partialorder %v278, 0.0
    %v295 = vsel %vm279, %v231, -1e+30
    %v296 = vsel %vm280, %v232, -1e+30
    %v297 = vsel %vm281, %v233, -1e+30
    %v298 = vsel %vm282, %v234, -1e+30
    %v299 = vsel %vm283, %v235, -1e+30
    %v300 = vsel %vm284, %v236, -1e+30
    %v301 = vsel %vm285, %v237, -1e+30
    %v302 = vsel %vm286, %v238, -1e+30
    %v303 = vsel %vm287, %v239, -1e+30
    %v304 = vsel %vm288, %v240, -1e+30
    %v305 = vsel %vm289, %v241, -1e+30
    %v306 = vsel %vm290, %v242, -1e+30
    %v307 = vsel %vm291, %v243, -1e+30
    %v308 = vsel %vm292, %v244, -1e+30
    %v309 = vsel %vm293, %v245, -1e+30
    %v310 = vsel %vm294, %v246, -1e+30
    %v311 = vld [vmem:[#allocation2] sm:$0xff]
    %v312 = vld [vmem:[#allocation2 + $0x8] sm:$0xff]
    %v313 = vld [vmem:[#allocation2 + $0x10] sm:$0xff]
    %v314 = vld [vmem:[#allocation2 + $0x18] sm:$0xff]
    %v315 = vld [vmem:[#allocation2 + $0x20] sm:$0xff]
    %v316 = vld [vmem:[#allocation2 + $0x28] sm:$0xff]
    %v317 = vld [vmem:[#allocation2 + $0x30] sm:$0xff]
    %v318 = vld [vmem:[#allocation2 + $0x38] sm:$0xff]
    %v319 = vld [vmem:[#allocation2 + $0x40] sm:$0xff]
    %v320 = vld [vmem:[#allocation2 + $0x48] sm:$0xff]
    %v321 = vld [vmem:[#allocation2 + $0x50] sm:$0xff]
    %v322 = vld [vmem:[#allocation2 + $0x58] sm:$0xff]
    %v323 = vld [vmem:[#allocation2 + $0x60] sm:$0xff]
    %v324 = vld [vmem:[#allocation2 + $0x68] sm:$0xff]
    %v325 = vld [vmem:[#allocation2 + $0x70] sm:$0xff]
    %v326 = vld [vmem:[#allocation2 + $0x78] sm:$0xff]
    %327 = vmax.xlane.f32.xlu0 %v295
    %v328 = vpop.xlane.xlu0 %327
    %329 = vmax.xlane.f32.xlu0 %v296
    %v330 = vpop.xlane.xlu0 %329
    %331 = vmax.xlane.f32.xlu0 %v297
    %v332 = vpop.xlane.xlu0 %331
    %333 = vmax.xlane.f32.xlu0 %v298
    %v334 = vpop.xlane.xlu0 %333
    %335 = vmax.xlane.f32.xlu0 %v299
    %v336 = vpop.xlane.xlu0 %335
    %337 = vmax.xlane.f32.xlu0 %v300
    %v338 = vpop.xlane.xlu0 %337
    %339 = vmax.xlane.f32.xlu0 %v301
    %v340 = vpop.xlane.xlu0 %339
    %341 = vmax.xlane.f32.xlu0 %v302
    %v342 = vpop.xlane.xlu0 %341
    %343 = vmax.xlane.f32.xlu0 %v303
    %v344 = vpop.xlane.xlu0 %343
    %345 = vmax.xlane.f32.xlu0 %v304
    %v346 = vpop.xlane.xlu0 %345
    %347 = vmax.xlane.f32.xlu0 %v305
    %v348 = vpop.xlane.xlu0 %347
    %349 = vmax.xlane.f32.xlu0 %v306
    %v350 = vpop.xlane.xlu0 %349
    %351 = vmax.xlane.f32.xlu0 %v307
    %v352 = vpop.xlane.xlu0 %351
    %353 = vmax.xlane.f32.xlu0 %v308
    %v354 = vpop.xlane.xlu0 %353
    %355 = vmax.xlane.f32.xlu0 %v309
    %v356 = vpop.xlane.xlu0 %355
    %357 = vmax.xlane.f32.xlu0 %v310
    %v358 = vpop.xlane.xlu0 %357
    %v359 = vmax.f32 %v311, %v328
    %v360 = vmax.f32 %v312, %v330
    %v361 = vmax.f32 %v313, %v332
    %v362 = vmax.f32 %v314, %v334
    %v363 = vmax.f32 %v315, %v336
    %v364 = vmax.f32 %v316, %v338
    %v365 = vmax.f32 %v317, %v340
    %v366 = vmax.f32 %v318, %v342
    %v367 = vmax.f32 %v319, %v344
    %v368 = vmax.f32 %v320, %v346
    %v369 = vmax.f32 %v321, %v348
    %v370 = vmax.f32 %v322, %v350
    %v371 = vmax.f32 %v323, %v352
    %v372 = vmax.f32 %v324, %v354
    %v373 = vmax.f32 %v325, %v356
    %v374 = vmax.f32 %v326, %v358
    %v375 = vsub.f32 %v311, %v359
    %v376 = vsub.f32 %v312, %v360
    %v377 = vsub.f32 %v313, %v361
    %v378 = vsub.f32 %v314, %v362
    %v379 = vsub.f32 %v315, %v363
    %v380 = vsub.f32 %v316, %v364
    %v381 = vsub.f32 %v317, %v365
    %v382 = vsub.f32 %v318, %v366
    %v383 = vsub.f32 %v319, %v367
    %v384 = vsub.f32 %v320, %v368
    %v385 = vsub.f32 %v321, %v369
    %v386 = vsub.f32 %v322, %v370
    %v387 = vsub.f32 %v323, %v371
    %v388 = vsub.f32 %v324, %v372
    %v389 = vsub.f32 %v325, %v373
    %v390 = vsub.f32 %v326, %v374
    %v391 = vmul.f32 %v375, 1.442695
    %v392 = vpow.pop %v391
    %v393 = vmul.f32 %v376, 1.442695
    %v394 = vpow.pop %v393
    %v395 = vmul.f32 %v377, 1.442695
    %v396 = vpow.pop %v395
    %v397 = vmul.f32 %v378, 1.442695
    %v398 = vpow.pop %v397
    %v399 = vmul.f32 %v379, 1.442695
    %v400 = vpow.pop %v399
    %v401 = vmul.f32 %v380, 1.442695
    %v402 = vpow.pop %v401
    %v403 = vmul.f32 %v381, 1.442695
    %v404 = vpow.pop %v403
    %v405 = vmul.f32 %v382, 1.442695
    %v406 = vpow.pop %v405
    %v407 = vmul.f32 %v383, 1.442695
    %v408 = vpow.pop %v407
    %v409 = vmul.f32 %v384, 1.442695
    %v410 = vpow.pop %v409
    %v411 = vmul.f32 %v385, 1.442695
    %v412 = vpow.pop %v411
    %v413 = vmul.f32 %v386, 1.442695
    %v414 = vpow.pop %v413
    %v415 = vmul.f32 %v387, 1.442695
    %v416 = vpow.pop %v415
    %v417 = vmul.f32 %v388, 1.442695
    %v418 = vpow.pop %v417
    %v419 = vmul.f32 %v389, 1.442695
    %v420 = vpow.pop %v419
    %v421 = vmul.f32 %v390, 1.442695
    %v422 = vpow.pop %v421
    %424 = vset.pattern.permute.xlu0 0
    %425 = vperm.xlu0 %424, %v359
    %v426 = vpop.permute.xlu0 %425
    %429 = vset.pattern.permute.xlu0 0
    %430 = vperm.xlu0 %429, %v360
    %v431 = vpop.permute.xlu0 %430
    %434 = vset.pattern.permute.xlu0 0
    %435 = vperm.xlu0 %434, %v361
    %v436 = vpop.permute.xlu0 %435
    %439 = vset.pattern.permute.xlu0 0
    %440 = vperm.xlu0 %439, %v362
    %v441 = vpop.permute.xlu0 %440
    %444 = vset.pattern.permute.xlu0 0
    %445 = vperm.xlu0 %444, %v363
    %v446 = vpop.permute.xlu0 %445
    %449 = vset.pattern.permute.xlu0 0
    %450 = vperm.xlu0 %449, %v364
    %v451 = vpop.permute.xlu0 %450
    %454 = vset.pattern.permute.xlu0 0
    %455 = vperm.xlu0 %454, %v365
    %v456 = vpop.permute.xlu0 %455
    %459 = vset.pattern.permute.xlu0 0
    %460 = vperm.xlu0 %459, %v366
    %v461 = vpop.permute.xlu0 %460
    %464 = vset.pattern.permute.xlu0 0
    %465 = vperm.xlu0 %464, %v367
    %v466 = vpop.permute.xlu0 %465
    %469 = vset.pattern.permute.xlu0 0
    %470 = vperm.xlu0 %469, %v368
    %v471 = vpop.permute.xlu0 %470
    %474 = vset.pattern.permute.xlu0 0
    %475 = vperm.xlu0 %474, %v369
    %v476 = vpop.permute.xlu0 %475
    %479 = vset.pattern.permute.xlu0 0
    %480 = vperm.xlu0 %479, %v370
    %v481 = vpop.permute.xlu0 %480
    %484 = vset.pattern.permute.xlu0 0
    %485 = vperm.xlu0 %484, %v371
    %v486 = vpop.permute.xlu0 %485
    %489 = vset.pattern.permute.xlu0 0
    %490 = vperm.xlu0 %489, %v372
    %v491 = vpop.permute.xlu0 %490
    %494 = vset.pattern.permute.xlu0 0
    %495 = vperm.xlu0 %494, %v373
    %v496 = vpop.permute.xlu0 %495
    %499 = vset.pattern.permute.xlu0 0
    %500 = vperm.xlu0 %499, %v374
    %v501 = vpop.permute.xlu0 %500
    %v503 = vsub.f32 %v295, %v426
    %v504 = vsub.f32 %v296, %v431
    %v505 = vsub.f32 %v297, %v436
    %v506 = vsub.f32 %v298, %v441
    %v507 = vsub.f32 %v299, %v446
    %v508 = vsub.f32 %v300, %v451
    %v509 = vsub.f32 %v301, %v456
    %v510 = vsub.f32 %v302, %v461
    %v511 = vsub.f32 %v303, %v466
    %v512 = vsub.f32 %v304, %v471
    %v513 = vsub.f32 %v305, %v476
    %v514 = vsub.f32 %v306, %v481
    %v515 = vsub.f32 %v307, %v486
    %v516 = vsub.f32 %v308, %v491
    %v517 = vsub.f32 %v309, %v496
    %v518 = vsub.f32 %v310, %v501
    %v519 = vmul.f32 %v503, 1.442695
    %v520 = vpow.pop %v519
    %v521 = vmul.f32 %v504, 1.442695
    %v522 = vpow.pop %v521
    %v523 = vmul.f32 %v505, 1.442695
    %v524 = vpow.pop %v523
    %v525 = vmul.f32 %v506, 1.442695
    %v526 = vpow.pop %v525
    %v527 = vmul.f32 %v507, 1.442695
    %v528 = vpow.pop %v527
    %v529 = vmul.f32 %v508, 1.442695
    %v530 = vpow.pop %v529
    %v531 = vmul.f32 %v509, 1.442695
    %v532 = vpow.pop %v531
    %v533 = vmul.f32 %v510, 1.442695
    %v534 = vpow.pop %v533
    %v535 = vmul.f32 %v511, 1.442695
    %v536 = vpow.pop %v535
    %v537 = vmul.f32 %v512, 1.442695
    %v538 = vpow.pop %v537
    %v539 = vmul.f32 %v513, 1.442695
    %v540 = vpow.pop %v539
    %v541 = vmul.f32 %v514, 1.442695
    %v542 = vpow.pop %v541
    %v543 = vmul.f32 %v515, 1.442695
    %v544 = vpow.pop %v543
    %v545 = vmul.f32 %v516, 1.442695
    %v546 = vpow.pop %v545
    %v547 = vmul.f32 %v517, 1.442695
    %v548 = vpow.pop %v547
    %v549 = vmul.f32 %v518, 1.442695
    %v550 = vpow.pop %v549
    %v551 = vmul.f32 %v520, %v263
    %v552 = vmul.f32 %v522, %v264
    %v553 = vmul.f32 %v524, %v265
    %v554 = vmul.f32 %v526, %v266
    %v555 = vmul.f32 %v528, %v267
    %v556 = vmul.f32 %v530, %v268
    %v557 = vmul.f32 %v532, %v269
    %v558 = vmul.f32 %v534, %v270
    %v559 = vmul.f32 %v536, %v271
    %v560 = vmul.f32 %v538, %v272
    %v561 = vmul.f32 %v540, %v273
    %v562 = vmul.f32 %v542, %v274
    %v563 = vmul.f32 %v544, %v275
    %v564 = vmul.f32 %v546, %v276
    %v565 = vmul.f32 %v548, %v277
    %v566 = vmul.f32 %v550, %v278
    %v567 = vld [vmem:[#allocation3] sm:$0xff]
    %v568 = vld [vmem:[#allocation3 + $0x8] sm:$0xff]
    %v569 = vld [vmem:[#allocation3 + $0x10] sm:$0xff]
    %v570 = vld [vmem:[#allocation3 + $0x18] sm:$0xff]
    %v571 = vld [vmem:[#allocation3 + $0x20] sm:$0xff]
    %v572 = vld [vmem:[#allocation3 + $0x28] sm:$0xff]
    %v573 = vld [vmem:[#allocation3 + $0x30] sm:$0xff]
    %v574 = vld [vmem:[#allocation3 + $0x38] sm:$0xff]
    %v575 = vld [vmem:[#allocation3 + $0x40] sm:$0xff]
    %v576 = vld [vmem:[#allocation3 + $0x48] sm:$0xff]
    %v577 = vld [vmem:[#allocation3 + $0x50] sm:$0xff]
    %v578 = vld [vmem:[#allocation3 + $0x58] sm:$0xff]
    %v579 = vld [vmem:[#allocation3 + $0x60] sm:$0xff]
    %v580 = vld [vmem:[#allocation3 + $0x68] sm:$0xff]
    %v581 = vld [vmem:[#allocation3 + $0x70] sm:$0xff]
    %v582 = vld [vmem:[#allocation3 + $0x78] sm:$0xff]
    %v583 = vmul.f32 %v392, %v567
    %v584 = vmul.f32 %v394, %v568
    %v585 = vmul.f32 %v396, %v569
    %v586 = vmul.f32 %v398, %v570
    %v587 = vmul.f32 %v400, %v571
    %v588 = vmul.f32 %v402, %v572
    %v589 = vmul.f32 %v404, %v573
    %v590 = vmul.f32 %v406, %v574
    %v591 = vmul.f32 %v408, %v575
    %v592 = vmul.f32 %v410, %v576
    %v593 = vmul.f32 %v412, %v577
    %v594 = vmul.f32 %v414, %v578
    %v595 = vmul.f32 %v416, %v579
    %v596 = vmul.f32 %v418, %v580
    %v597 = vmul.f32 %v420, %v581
    %v598 = vmul.f32 %v422, %v582
    %599 = vadd.xlane.f32.xlu0 %v551
    %v600 = vpop.xlane.xlu0 %599
    %601 = vadd.xlane.f32.xlu0 %v552
    %v602 = vpop.xlane.xlu0 %601
    %603 = vadd.xlane.f32.xlu0 %v553
    %v604 = vpop.xlane.xlu0 %603
    %605 = vadd.xlane.f32.xlu0 %v554
    %v606 = vpop.xlane.xlu0 %605
    %607 = vadd.xlane.f32.xlu0 %v555
    %v608 = vpop.xlane.xlu0 %607
    %609 = vadd.xlane.f32.xlu0 %v556
    %v610 = vpop.xlane.xlu0 %609
    %611 = vadd.xlane.f32.xlu0 %v557
    %v612 = vpop.xlane.xlu0 %611
    %613 = vadd.xlane.f32.xlu0 %v558
    %v614 = vpop.xlane.xlu0 %613
    %615 = vadd.xlane.f32.xlu0 %v559
    %v616 = vpop.xlane.xlu0 %615
    %617 = vadd.xlane.f32.xlu0 %v560
    %v618 = vpop.xlane.xlu0 %617
    %619 = vadd.xlane.f32.xlu0 %v561
    %v620 = vpop.xlane.xlu0 %619
    %621 = vadd.xlane.f32.xlu0 %v562
    %v622 = vpop.xlane.xlu0 %621
    %623 = vadd.xlane.f32.xlu0 %v563
    %v624 = vpop.xlane.xlu0 %623
    %625 = vadd.xlane.f32.xlu0 %v564
    %v626 = vpop.xlane.xlu0 %625
    %627 = vadd.xlane.f32.xlu0 %v565
    %v628 = vpop.xlane.xlu0 %627
    %629 = vadd.xlane.f32.xlu0 %v566
    %v630 = vpop.xlane.xlu0 %629
    %v631 = vadd.f32 %v583, %v600
    %v632 = vadd.f32 %v584, %v602
    %v633 = vadd.f32 %v585, %v604
    %v634 = vadd.f32 %v586, %v606
    %v635 = vadd.f32 %v587, %v608
    %v636 = vadd.f32 %v588, %v610
    %v637 = vadd.f32 %v589, %v612
    %v638 = vadd.f32 %v590, %v614
    %v639 = vadd.f32 %v591, %v616
    %v640 = vadd.f32 %v592, %v618
    %v641 = vadd.f32 %v593, %v620
    %v642 = vadd.f32 %v594, %v622
    %v643 = vadd.f32 %v595, %v624
    %v644 = vadd.f32 %v596, %v626
    %v645 = vadd.f32 %v597, %v628
    %v646 = vadd.f32 %v598, %v630
    %vm647 = vcmask 7168
    %648 = vst.msk [vmem:[#allocation3] sm:$0xff] %vm647, %v631
    %649 = vst.msk [vmem:[#allocation3 + $0x8] sm:$0xff] %vm647, %v632
    %650 = vst.msk [vmem:[#allocation3 + $0x10] sm:$0xff] %vm647, %v633
    %651 = vst.msk [vmem:[#allocation3 + $0x18] sm:$0xff] %vm647, %v634
    %652 = vst.msk [vmem:[#allocation3 + $0x20] sm:$0xff] %vm647, %v635
    %653 = vst.msk [vmem:[#allocation3 + $0x28] sm:$0xff] %vm647, %v636
    %654 = vst.msk [vmem:[#allocation3 + $0x30] sm:$0xff] %vm647, %v637
    %655 = vst.msk [vmem:[#allocation3 + $0x38] sm:$0xff] %vm647, %v638
    %656 = vst.msk [vmem:[#allocation3 + $0x40] sm:$0xff] %vm647, %v639
    %657 = vst.msk [vmem:[#allocation3 + $0x48] sm:$0xff] %vm647, %v640
    %658 = vst.msk [vmem:[#allocation3 + $0x50] sm:$0xff] %vm647, %v641
    %659 = vst.msk [vmem:[#allocation3 + $0x58] sm:$0xff] %vm647, %v642
    %660 = vst.msk [vmem:[#allocation3 + $0x60] sm:$0xff] %vm647, %v643
    %661 = vst.msk [vmem:[#allocation3 + $0x68] sm:$0xff] %vm647, %v644
    %662 = vst.msk [vmem:[#allocation3 + $0x70] sm:$0xff] %vm647, %v645
    %663 = vst.msk [vmem:[#allocation3 + $0x78] sm:$0xff] %vm647, %v646
    %v664 = vld [vmem:[#allocation4] sm:$0xff]
    %v665 = vld [vmem:[#allocation4 + $0x8] sm:$0xff]
    %v666 = vld [vmem:[#allocation4 + $0x10] sm:$0xff]
    %v667 = vld [vmem:[#allocation4 + $0x18] sm:$0xff]
    %v668 = vld [vmem:[#allocation4 + $0x20] sm:$0xff]
    %v669 = vld [vmem:[#allocation4 + $0x28] sm:$0xff]
    %v670 = vld [vmem:[#allocation4 + $0x30] sm:$0xff]
    %v671 = vld [vmem:[#allocation4 + $0x38] sm:$0xff]
    %v672 = vld [vmem:[#allocation4 + $0x40] sm:$0xff]
    %v673 = vld [vmem:[#allocation4 + $0x48] sm:$0xff]
    %v674 = vld [vmem:[#allocation4 + $0x50] sm:$0xff]
    %v675 = vld [vmem:[#allocation4 + $0x58] sm:$0xff]
    %v676 = vld [vmem:[#allocation4 + $0x60] sm:$0xff]
    %v677 = vld [vmem:[#allocation4 + $0x68] sm:$0xff]
    %v678 = vld [vmem:[#allocation4 + $0x70] sm:$0xff]
    %v679 = vld [vmem:[#allocation4 + $0x78] sm:$0xff]
    %681 = vset.pattern.permute.xlu0 0
    %682 = vperm.xlu0 %681, %v392
    %v683 = vpop.permute.xlu0 %682
    %686 = vset.pattern.permute.xlu0 0
    %687 = vperm.xlu0 %686, %v394
    %v688 = vpop.permute.xlu0 %687
    %691 = vset.pattern.permute.xlu0 0
    %692 = vperm.xlu0 %691, %v396
    %v693 = vpop.permute.xlu0 %692
    %696 = vset.pattern.permute.xlu0 0
    %697 = vperm.xlu0 %696, %v398
    %v698 = vpop.permute.xlu0 %697
    %701 = vset.pattern.permute.xlu0 0
    %702 = vperm.xlu0 %701, %v400
    %v703 = vpop.permute.xlu0 %702
    %706 = vset.pattern.permute.xlu0 0
    %707 = vperm.xlu0 %706, %v402
    %v708 = vpop.permute.xlu0 %707
    %711 = vset.pattern.permute.xlu0 0
    %712 = vperm.xlu0 %711, %v404
    %v713 = vpop.permute.xlu0 %712
    %716 = vset.pattern.permute.xlu0 0
    %717 = vperm.xlu0 %716, %v406
    %v718 = vpop.permute.xlu0 %717
    %721 = vset.pattern.permute.xlu0 0
    %722 = vperm.xlu0 %721, %v408
    %v723 = vpop.permute.xlu0 %722
    %726 = vset.pattern.permute.xlu0 0
    %727 = vperm.xlu0 %726, %v410
    %v728 = vpop.permute.xlu0 %727
    %731 = vset.pattern.permute.xlu0 0
    %732 = vperm.xlu0 %731, %v412
    %v733 = vpop.permute.xlu0 %732
    %736 = vset.pattern.permute.xlu0 0
    %737 = vperm.xlu0 %736, %v414
    %v738 = vpop.permute.xlu0 %737
    %741 = vset.pattern.permute.xlu0 0
    %742 = vperm.xlu0 %741, %v416
    %v743 = vpop.permute.xlu0 %742
    %746 = vset.pattern.permute.xlu0 0
    %747 = vperm.xlu0 %746, %v418
    %v748 = vpop.permute.xlu0 %747
    %751 = vset.pattern.permute.xlu0 0
    %752 = vperm.xlu0 %751, %v420
    %v753 = vpop.permute.xlu0 %752
    %756 = vset.pattern.permute.xlu0 0
    %757 = vperm.xlu0 %756, %v422
    %v758 = vpop.permute.xlu0 %757
    %v760 = vmul.f32 %v683, %v664
    %v761 = vmul.f32 %v688, %v665
    %v762 = vmul.f32 %v693, %v666
    %v763 = vmul.f32 %v698, %v667
    %v764 = vmul.f32 %v703, %v668
    %v765 = vmul.f32 %v708, %v669
    %v766 = vmul.f32 %v713, %v670
    %v767 = vmul.f32 %v718, %v671
    %v768 = vmul.f32 %v723, %v672
    %v769 = vmul.f32 %v728, %v673
    %v770 = vmul.f32 %v733, %v674
    %v771 = vmul.f32 %v738, %v675
    %v772 = vmul.f32 %v743, %v676
    %v773 = vmul.f32 %v748, %v677
    %v774 = vmul.f32 %v753, %v678
    %v775 = vmul.f32 %v758, %v679
    %v776 = vpack.c.bf16 %v552, %v551
    %v777 = vpack.c.bf16 %v554, %v553
    %v778 = vpack.c.bf16 %v556, %v555
    %v779 = vpack.c.bf16 %v558, %v557
    %v780 = vpack.c.bf16 %v560, %v559
    %v781 = vpack.c.bf16 %v562, %v561
    %v782 = vpack.c.bf16 %v564, %v563
    %v783 = vpack.c.bf16 %v566, %v565
    %v784 = vld [vmem:[%s1] sm:$0xf]
    %v785 = vld [vmem:[%s1 + $0x4] sm:$0xf]
    %v786 = vld [vmem:[%s1 + $0x8] sm:$0xf]
    %v787 = vld [vmem:[%s1 + $0xc] sm:$0xf]
    %v788 = vld [vmem:[%s1 + $0x10] sm:$0xf]
    %v789 = vld [vmem:[%s1 + $0x14] sm:$0xf]
    %v790 = vld [vmem:[%s1 + $0x18] sm:$0xf]
    %v791 = vld [vmem:[%s1 + $0x1c] sm:$0xf]
    %v792 = vld [vmem:[%s1 + $0x20] sm:$0xf]
    %v793 = vld [vmem:[%s1 + $0x24] sm:$0xf]
    %v794 = vld [vmem:[%s1 + $0x28] sm:$0xf]
    %v795 = vld [vmem:[%s1 + $0x2c] sm:$0xf]
    %v796 = vld [vmem:[%s1 + $0x30] sm:$0xf]
    %v797 = vld [vmem:[%s1 + $0x34] sm:$0xf]
    %v798 = vld [vmem:[%s1 + $0x38] sm:$0xf]
    %v799 = vld [vmem:[%s1 + $0x3c] sm:$0xf]
    %v816 = vunpack.c.l.b16 %v784
    %v817 = vunpack.c.l.b16 %v785
    %v818 = vunpack.c.l.b16 %v786
    %v819 = vunpack.c.l.b16 %v787
    %v820 = vunpack.c.l.b16 %v788
    %v821 = vunpack.c.l.b16 %v789
    %v822 = vunpack.c.l.b16 %v790
    %v823 = vunpack.c.l.b16 %v791
    %v824 = vunpack.c.l.b16 %v792
    %v825 = vunpack.c.l.b16 %v793
    %v826 = vunpack.c.l.b16 %v794
    %v827 = vunpack.c.l.b16 %v795
    %v828 = vunpack.c.l.b16 %v796
    %v829 = vunpack.c.l.b16 %v797
    %v830 = vunpack.c.l.b16 %v798
    %v831 = vunpack.c.l.b16 %v799
    %v832 = vpack.c.b16 %v817, %v816
    %v833 = vpack.c.b16 %v819, %v818
    %v834 = vpack.c.b16 %v821, %v820
    %v835 = vpack.c.b16 %v823, %v822
    %v836 = vpack.c.b16 %v825, %v824
    %v837 = vpack.c.b16 %v827, %v826
    %v838 = vpack.c.b16 %v829, %v828
    %v839 = vpack.c.b16 %v831, %v830
    %848 = vmatprep.subr.bf16.mxu0 0
    %849 = vmatpush1.bf16.msra.mxu0 %v839
    %850 = vmatprep.subr.bf16.mxu0 0
    %851 = vmatpush1.bf16.msra.mxu0 %v838
    %852 = vmatprep.subr.bf16.mxu0 0
    %853 = vmatpush1.bf16.msra.mxu0 %v837
    %854 = vmatprep.subr.bf16.mxu0 0
    %855 = vmatpush1.bf16.msra.mxu0 %v836
    %856 = vmatprep.subr.bf16.mxu0 0
    %857 = vmatpush1.bf16.msra.mxu0 %v835
    %858 = vmatprep.subr.bf16.mxu0 0
    %859 = vmatpush1.bf16.msra.mxu0 %v834
    %860 = vmatprep.subr.bf16.mxu0 0
    %861 = vmatpush1.bf16.msra.mxu0 %v833
    %862 = vmatprep.subr.bf16.mxu0 0
    %863 = vmatpush1.bf16.msra.mxu0 %v832
    %864 = vmatprep.subr.bf16.mxu0 0
    %865 = vmatpush2.bf16.msra.mxu0 0
    %866 = vmatprep.subr.bf16.mxu0 0
    %867 = vmatpush2.bf16.msra.mxu0 0
    %868 = vmatprep.subr.bf16.mxu0 0
    %869 = vmatpush2.bf16.msra.mxu0 0
    %870 = vmatprep.subr.bf16.mxu0 0
    %871 = vmatpush2.bf16.msra.mxu0 0
    %872 = vmatprep.subr.bf16.mxu0 0
    %873 = vmatpush2.bf16.msra.mxu0 0
    %874 = vmatprep.subr.bf16.mxu0 0
    %875 = vmatpush2.bf16.msra.mxu0 0
    %876 = vmatprep.subr.bf16.mxu0 0
    %877 = vmatpush2.bf16.msra.mxu0 0
    %878 = vmatprep.subr.bf16.mxu0 0
    %879 = vmatpush2.bf16.msra.mxu0 0
    %880 = vmatprep.mubr.bf16.mxu0 0
    %881 = vmatmul.mubr.bf16.gmra.mxu0 %v776
    %v882 = vpop.f32.mrf.mxu0
    %v883 = vadd.f32 0.0, %v882
    %v884 = vpop.f32.mrf.mxu0
    %v885 = vpop.f32.mrf.mxu0
    %v886 = vadd.f32 0.0, %v885
    %v887 = vpop.f32.mrf.mxu0
    %888 = vmatprep.mubr.bf16.mxu0 0
    %889 = vmatmul.mubr.bf16.gmra.mxu0 %v777
    %v890 = vpop.f32.mrf.mxu0
    %v891 = vadd.f32 0.0, %v890
    %v892 = vpop.f32.mrf.mxu0
    %v893 = vpop.f32.mrf.mxu0
    %v894 = vadd.f32 0.0, %v893
    %v895 = vpop.f32.mrf.mxu0
    %896 = vmatprep.mubr.bf16.mxu0 0
    %897 = vmatmul.mubr.bf16.gmra.mxu0 %v778
    %v898 = vpop.f32.mrf.mxu0
    %v899 = vadd.f32 0.0, %v898
    %v900 = vpop.f32.mrf.mxu0
    %v901 = vpop.f32.mrf.mxu0
    %v902 = vadd.f32 0.0, %v901
    %v903 = vpop.f32.mrf.mxu0
    %904 = vmatprep.mubr.bf16.mxu0 0
    %905 = vmatmul.mubr.bf16.gmra.mxu0 %v779
    %v906 = vpop.f32.mrf.mxu0
    %v907 = vadd.f32 0.0, %v906
    %v908 = vpop.f32.mrf.mxu0
    %v909 = vpop.f32.mrf.mxu0
    %v910 = vadd.f32 0.0, %v909
    %v911 = vpop.f32.mrf.mxu0
    %912 = vmatprep.mubr.bf16.mxu0 0
    %913 = vmatmul.mubr.bf16.gmra.mxu0 %v780
    %v914 = vpop.f32.mrf.mxu0
    %v915 = vadd.f32 0.0, %v914
    %v916 = vpop.f32.mrf.mxu0
    %v917 = vpop.f32.mrf.mxu0
    %v918 = vadd.f32 0.0, %v917
    %v919 = vpop.f32.mrf.mxu0
    %920 = vmatprep.mubr.bf16.mxu0 0
    %921 = vmatmul.mubr.bf16.gmra.mxu0 %v781
    %v922 = vpop.f32.mrf.mxu0
    %v923 = vadd.f32 0.0, %v922
    %v924 = vpop.f32.mrf.mxu0
    %v925 = vpop.f32.mrf.mxu0
    %v926 = vadd.f32 0.0, %v925
    %v927 = vpop.f32.mrf.mxu0
    %928 = vmatprep.mubr.bf16.mxu0 0
    %929 = vmatmul.mubr.bf16.gmra.mxu0 %v782
    %v930 = vpop.f32.mrf.mxu0
    %v931 = vadd.f32 0.0, %v930
    %v932 = vpop.f32.mrf.mxu0
    %v933 = vpop.f32.mrf.mxu0
    %v934 = vadd.f32 0.0, %v933
    %v935 = vpop.f32.mrf.mxu0
    %936 = vmatprep.mubr.bf16.mxu0 0
    %937 = vmatmul.mubr.bf16.gmra.mxu0 %v783
    %v938 = vpop.f32.mrf.mxu0
    %v939 = vadd.f32 0.0, %v938
    %v940 = vpop.f32.mrf.mxu0
    %v941 = vpop.f32.mrf.mxu0
    %v942 = vadd.f32 0.0, %v941
    %v943 = vpop.f32.mrf.mxu0
    %944 = vdwg.mxu0
    %v945 = vadd.f32 %v760, %v883
    %v946 = vadd.f32 %v761, %v886
    %v947 = vadd.f32 %v762, %v891
    %v948 = vadd.f32 %v763, %v894
    %v949 = vadd.f32 %v764, %v899
    %v950 = vadd.f32 %v765, %v902
    %v951 = vadd.f32 %v766, %v907
    %v952 = vadd.f32 %v767, %v910
    %v953 = vadd.f32 %v768, %v915
    %v954 = vadd.f32 %v769, %v918
    %v955 = vadd.f32 %v770, %v923
    %v956 = vadd.f32 %v771, %v926
    %v957 = vadd.f32 %v772, %v931
    %v958 = vadd.f32 %v773, %v934
    %v959 = vadd.f32 %v774, %v939
    %v960 = vadd.f32 %v775, %v942
    %961 = vst [vmem:[#allocation4] sm:$0xff] %v945
    %962 = vst [vmem:[#allocation4 + $0x8] sm:$0xff] %v946
    %963 = vst [vmem:[#allocation4 + $0x10] sm:$0xff] %v947
    %964 = vst [vmem:[#allocation4 + $0x18] sm:$0xff] %v948
    %965 = vst [vmem:[#allocation4 + $0x20] sm:$0xff] %v949
    %966 = vst [vmem:[#allocation4 + $0x28] sm:$0xff] %v950
    %967 = vst [vmem:[#allocation4 + $0x30] sm:$0xff] %v951
    %968 = vst [vmem:[#allocation4 + $0x38] sm:$0xff] %v952
    %969 = vst [vmem:[#allocation4 + $0x40] sm:$0xff] %v953
    %970 = vst [vmem:[#allocation4 + $0x48] sm:$0xff] %v954
    %971 = vst [vmem:[#allocation4 + $0x50] sm:$0xff] %v955
    %972 = vst [vmem:[#allocation4 + $0x58] sm:$0xff] %v956
    %973 = vst [vmem:[#allocation4 + $0x60] sm:$0xff] %v957
    %974 = vst [vmem:[#allocation4 + $0x68] sm:$0xff] %v958
    %975 = vst [vmem:[#allocation4 + $0x70] sm:$0xff] %v959
    %976 = vst [vmem:[#allocation4 + $0x78] sm:$0xff] %v960
    %977 = vst.msk [vmem:[#allocation2] sm:$0xff] %vm647, %v359
    %978 = vst.msk [vmem:[#allocation2 + $0x8] sm:$0xff] %vm647, %v360
    %979 = vst.msk [vmem:[#allocation2 + $0x10] sm:$0xff] %vm647, %v361
    %980 = vst.msk [vmem:[#allocation2 + $0x18] sm:$0xff] %vm647, %v362
    %981 = vst.msk [vmem:[#allocation2 + $0x20] sm:$0xff] %vm647, %v363
    %982 = vst.msk [vmem:[#allocation2 + $0x28] sm:$0xff] %vm647, %v364
    %983 = vst.msk [vmem:[#allocation2 + $0x30] sm:$0xff] %vm647, %v365
    %984 = vst.msk [vmem:[#allocation2 + $0x38] sm:$0xff] %vm647, %v366
    %985 = vst.msk [vmem:[#allocation2 + $0x40] sm:$0xff] %vm647, %v367
    %986 = vst.msk [vmem:[#allocation2 + $0x48] sm:$0xff] %vm647, %v368
    %987 = vst.msk [vmem:[#allocation2 + $0x50] sm:$0xff] %vm647, %v369
    %988 = vst.msk [vmem:[#allocation2 + $0x58] sm:$0xff] %vm647, %v370
    %989 = vst.msk [vmem:[#allocation2 + $0x60] sm:$0xff] %vm647, %v371
    %990 = vst.msk [vmem:[#allocation2 + $0x68] sm:$0xff] %vm647, %v372
    %991 = vst.msk [vmem:[#allocation2 + $0x70] sm:$0xff] %vm647, %v373
    %992 = vst.msk [vmem:[#allocation2 + $0x78] sm:$0xff] %vm647, %v374
    // Predicated region
    $region42: #{gat_forward.5} parent=1 // pred_check
      %p993 = pneg %p36
    $region43: #{gat_forward.5} parent=1 // pred_check_branch
      %995 = sbr.rel (%p993) target = $region45
    $region44: #{gat_forward.5} parent=1 // pred_region
      %v996 = vld [vmem:[#allocation3] sm:$0xff]
      %v997 = vld [vmem:[#allocation3 + $0x8] sm:$0xff]
      %v998 = vld [vmem:[#allocation3 + $0x10] sm:$0xff]
      %v999 = vld [vmem:[#allocation3 + $0x18] sm:$0xff]
      %v1000 = vld [vmem:[#allocation3 + $0x20] sm:$0xff]
      %v1001 = vld [vmem:[#allocation3 + $0x28] sm:$0xff]
      %v1002 = vld [vmem:[#allocation3 + $0x30] sm:$0xff]
      %v1003 = vld [vmem:[#allocation3 + $0x38] sm:$0xff]
      %v1004 = vld [vmem:[#allocation3 + $0x40] sm:$0xff]
      %v1005 = vld [vmem:[#allocation3 + $0x48] sm:$0xff]
      %v1006 = vld [vmem:[#allocation3 + $0x50] sm:$0xff]
      %v1007 = vld [vmem:[#allocation3 + $0x58] sm:$0xff]
      %v1008 = vld [vmem:[#allocation3 + $0x60] sm:$0xff]
      %v1009 = vld [vmem:[#allocation3 + $0x68] sm:$0xff]
      %v1010 = vld [vmem:[#allocation3 + $0x70] sm:$0xff]
      %v1011 = vld [vmem:[#allocation3 + $0x78] sm:$0xff]
      %v1012 = vrcp.pop %v996
      %v1013 = vrcp.pop %v997
      %v1014 = vrcp.pop %v998
      %v1015 = vrcp.pop %v999
      %v1016 = vrcp.pop %v1000
      %v1017 = vrcp.pop %v1001
      %v1018 = vrcp.pop %v1002
      %v1019 = vrcp.pop %v1003
      %v1020 = vrcp.pop %v1004
      %v1021 = vrcp.pop %v1005
      %v1022 = vrcp.pop %v1006
      %v1023 = vrcp.pop %v1007
      %v1024 = vrcp.pop %v1008
      %v1025 = vrcp.pop %v1009
      %v1026 = vrcp.pop %v1010
      %v1027 = vrcp.pop %v1011
      %v1028 = vld [vmem:[#allocation4] sm:$0xff]
      %v1029 = vld [vmem:[#allocation4 + $0x8] sm:$0xff]
      %v1030 = vld [vmem:[#allocation4 + $0x10] sm:$0xff]
      %v1031 = vld [vmem:[#allocation4 + $0x18] sm:$0xff]
      %v1032 = vld [vmem:[#allocation4 + $0x20] sm:$0xff]
      %v1033 = vld [vmem:[#allocation4 + $0x28] sm:$0xff]
      %v1034 = vld [vmem:[#allocation4 + $0x30] sm:$0xff]
      %v1035 = vld [vmem:[#allocation4 + $0x38] sm:$0xff]
      %v1036 = vld [vmem:[#allocation4 + $0x40] sm:$0xff]
      %v1037 = vld [vmem:[#allocation4 + $0x48] sm:$0xff]
      %v1038 = vld [vmem:[#allocation4 + $0x50] sm:$0xff]
      %v1039 = vld [vmem:[#allocation4 + $0x58] sm:$0xff]
      %v1040 = vld [vmem:[#allocation4 + $0x60] sm:$0xff]
      %v1041 = vld [vmem:[#allocation4 + $0x68] sm:$0xff]
      %v1042 = vld [vmem:[#allocation4 + $0x70] sm:$0xff]
      %v1043 = vld [vmem:[#allocation4 + $0x78] sm:$0xff]
      %1045 = vset.pattern.permute.xlu0 0
      %1046 = vperm.xlu0 %1045, %v1012
      %v1047 = vpop.permute.xlu0 %1046
      %1050 = vset.pattern.permute.xlu0 0
      %1051 = vperm.xlu0 %1050, %v1013
      %v1052 = vpop.permute.xlu0 %1051
      %1055 = vset.pattern.permute.xlu0 0
      %1056 = vperm.xlu0 %1055, %v1014
      %v1057 = vpop.permute.xlu0 %1056
      %1060 = vset.pattern.permute.xlu0 0
      %1061 = vperm.xlu0 %1060, %v1015
      %v1062 = vpop.permute.xlu0 %1061
      %1065 = vset.pattern.permute.xlu0 0
      %1066 = vperm.xlu0 %1065, %v1016
      %v1067 = vpop.permute.xlu0 %1066
      %1070 = vset.pattern.permute.xlu0 0
      %1071 = vperm.xlu0 %1070, %v1017
      %v1072 = vpop.permute.xlu0 %1071
      %1075 = vset.pattern.permute.xlu0 0
      %1076 = vperm.xlu0 %1075, %v1018
      %v1077 = vpop.permute.xlu0 %1076
      %1080 = vset.pattern.permute.xlu0 0
      %1081 = vperm.xlu0 %1080, %v1019
      %v1082 = vpop.permute.xlu0 %1081
      %1085 = vset.pattern.permute.xlu0 0
      %1086 = vperm.xlu0 %1085, %v1020
      %v1087 = vpop.permute.xlu0 %1086
      %1090 = vset.pattern.permute.xlu0 0
      %1091 = vperm.xlu0 %1090, %v1021
      %v1092 = vpop.permute.xlu0 %1091
      %1095 = vset.pattern.permute.xlu0 0
      %1096 = vperm.xlu0 %1095, %v1022
      %v1097 = vpop.permute.xlu0 %1096
      %1100 = vset.pattern.permute.xlu0 0
      %1101 = vperm.xlu0 %1100, %v1023
      %v1102 = vpop.permute.xlu0 %1101
      %1105 = vset.pattern.permute.xlu0 0
      %1106 = vperm.xlu0 %1105, %v1024
      %v1107 = vpop.permute.xlu0 %1106
      %1110 = vset.pattern.permute.xlu0 0
      %1111 = vperm.xlu0 %1110, %v1025
      %v1112 = vpop.permute.xlu0 %1111
      %1115 = vset.pattern.permute.xlu0 0
      %1116 = vperm.xlu0 %1115, %v1026
      %v1117 = vpop.permute.xlu0 %1116
      %1120 = vset.pattern.permute.xlu0 0
      %1121 = vperm.xlu0 %1120, %v1027
      %v1122 = vpop.permute.xlu0 %1121
      %v1124 = vmul.f32 %v1028, %v1047
      %v1125 = vmul.f32 %v1029, %v1052
      %v1126 = vmul.f32 %v1030, %v1057
      %v1127 = vmul.f32 %v1031, %v1062
      %v1128 = vmul.f32 %v1032, %v1067
      %v1129 = vmul.f32 %v1033, %v1072
      %v1130 = vmul.f32 %v1034, %v1077
      %v1131 = vmul.f32 %v1035, %v1082
      %v1132 = vmul.f32 %v1036, %v1087
      %v1133 = vmul.f32 %v1037, %v1092
      %v1134 = vmul.f32 %v1038, %v1097
      %v1135 = vmul.f32 %v1039, %v1102
      %v1136 = vmul.f32 %v1040, %v1107
      %v1137 = vmul.f32 %v1041, %v1112
      %v1138 = vmul.f32 %v1042, %v1117
      %v1139 = vmul.f32 %v1043, %v1122
      %v1140 = vld [vmem:[%s5] sm:$0x1]
      %v1142 = vlaneseq
      %v1143 = vshrl.u32 %v1142, 7
      %v1144 = vsub.s32 0, %v1143
      %v1145 = vrot.slane %v1140, %v1144
      %v1147 = vadd.f32 %v1124, %v1145
      %v1148 = vadd.f32 %v1125, %v1145
      %v1149 = vadd.f32 %v1126, %v1145
      %v1150 = vadd.f32 %v1127, %v1145
      %v1151 = vadd.f32 %v1128, %v1145
      %v1152 = vadd.f32 %v1129, %v1145
      %v1153 = vadd.f32 %v1130, %v1145
      %v1154 = vadd.f32 %v1131, %v1145
      %v1155 = vadd.f32 %v1132, %v1145
      %v1156 = vadd.f32 %v1133, %v1145
      %v1157 = vadd.f32 %v1134, %v1145
      %v1158 = vadd.f32 %v1135, %v1145
      %v1159 = vadd.f32 %v1136, %v1145
      %v1160 = vadd.f32 %v1137, %v1145
      %v1161 = vadd.f32 %v1138, %v1145
      %v1162 = vadd.f32 %v1139, %v1145
      %v1163 = vmax.f32 %v1147, 0.0
      %v1164 = vmax.f32 %v1148, 0.0
      %v1165 = vmax.f32 %v1149, 0.0
      %v1166 = vmax.f32 %v1150, 0.0
      %v1167 = vmax.f32 %v1151, 0.0
      %v1168 = vmax.f32 %v1152, 0.0
      %v1169 = vmax.f32 %v1153, 0.0
      %v1170 = vmax.f32 %v1154, 0.0
      %v1171 = vmax.f32 %v1155, 0.0
      %v1172 = vmax.f32 %v1156, 0.0
      %v1173 = vmax.f32 %v1157, 0.0
      %v1174 = vmax.f32 %v1158, 0.0
      %v1175 = vmax.f32 %v1159, 0.0
      %v1176 = vmax.f32 %v1160, 0.0
      %v1177 = vmax.f32 %v1161, 0.0
      %v1178 = vmax.f32 %v1162, 0.0
      %v1179 = vpack.c.bf16 %v1164, %v1163
      %v1180 = vpack.c.bf16 %v1166, %v1165
      %v1181 = vpack.c.bf16 %v1168, %v1167
      %v1182 = vpack.c.bf16 %v1170, %v1169
      %v1183 = vpack.c.bf16 %v1172, %v1171
      %v1184 = vpack.c.bf16 %v1174, %v1173
      %v1185 = vpack.c.bf16 %v1176, %v1175
      %v1186 = vpack.c.bf16 %v1178, %v1177
      %v1187 = vld [vmem:[%s6] sm:$0xf]
      %v1188 = vld [vmem:[%s6 + $0x4] sm:$0xf]
      %v1189 = vld [vmem:[%s6 + $0x8] sm:$0xf]
      %v1190 = vld [vmem:[%s6 + $0xc] sm:$0xf]
      %v1191 = vld [vmem:[%s6 + $0x10] sm:$0xf]
      %v1192 = vld [vmem:[%s6 + $0x14] sm:$0xf]
      %v1193 = vld [vmem:[%s6 + $0x18] sm:$0xf]
      %v1194 = vld [vmem:[%s6 + $0x1c] sm:$0xf]
      %v1195 = vld [vmem:[%s6 + $0x20] sm:$0xf]
      %v1196 = vld [vmem:[%s6 + $0x24] sm:$0xf]
      %v1197 = vld [vmem:[%s6 + $0x28] sm:$0xf]
      %v1198 = vld [vmem:[%s6 + $0x2c] sm:$0xf]
      %v1199 = vld [vmem:[%s6 + $0x30] sm:$0xf]
      %v1200 = vld [vmem:[%s6 + $0x34] sm:$0xf]
      %v1201 = vld [vmem:[%s6 + $0x38] sm:$0xf]
      %v1202 = vld [vmem:[%s6 + $0x3c] sm:$0xf]
      %v1203 = vld [vmem:[%s7] sm:$0x1]
      %v1205 = vlaneseq
      %v1206 = vshrl.u32 %v1205, 7
      %v1207 = vsub.s32 0, %v1206
      %v1208 = vrot.slane %v1203, %v1207
      %v1226 = vunpack.c.l.b16 %v1187
      %v1227 = vunpack.c.l.b16 %v1188
      %v1228 = vunpack.c.l.b16 %v1189
      %v1229 = vunpack.c.l.b16 %v1190
      %v1230 = vunpack.c.l.b16 %v1191
      %v1231 = vunpack.c.l.b16 %v1192
      %v1232 = vunpack.c.l.b16 %v1193
      %v1233 = vunpack.c.l.b16 %v1194
      %v1234 = vunpack.c.l.b16 %v1195
      %v1235 = vunpack.c.l.b16 %v1196
      %v1236 = vunpack.c.l.b16 %v1197
      %v1237 = vunpack.c.l.b16 %v1198
      %v1238 = vunpack.c.l.b16 %v1199
      %v1239 = vunpack.c.l.b16 %v1200
      %v1240 = vunpack.c.l.b16 %v1201
      %v1241 = vunpack.c.l.b16 %v1202
      %v1242 = vpack.c.b16 %v1227, %v1226
      %v1243 = vpack.c.b16 %v1229, %v1228
      %v1244 = vpack.c.b16 %v1231, %v1230
      %v1245 = vpack.c.b16 %v1233, %v1232
      %v1246 = vpack.c.b16 %v1235, %v1234
      %v1247 = vpack.c.b16 %v1237, %v1236
      %v1248 = vpack.c.b16 %v1239, %v1238
      %v1249 = vpack.c.b16 %v1241, %v1240
      %1258 = vmatprep.subr.bf16.mxu0 0
      %1259 = vmatpush1.bf16.msra.mxu0 %v1249
      %1260 = vmatprep.subr.bf16.mxu0 0
      %1261 = vmatpush1.bf16.msra.mxu0 %v1248
      %1262 = vmatprep.subr.bf16.mxu0 0
      %1263 = vmatpush1.bf16.msra.mxu0 %v1247
      %1264 = vmatprep.subr.bf16.mxu0 0
      %1265 = vmatpush1.bf16.msra.mxu0 %v1246
      %1266 = vmatprep.subr.bf16.mxu0 0
      %1267 = vmatpush1.bf16.msra.mxu0 %v1245
      %1268 = vmatprep.subr.bf16.mxu0 0
      %1269 = vmatpush1.bf16.msra.mxu0 %v1244
      %1270 = vmatprep.subr.bf16.mxu0 0
      %1271 = vmatpush1.bf16.msra.mxu0 %v1243
      %1272 = vmatprep.subr.bf16.mxu0 0
      %1273 = vmatpush1.bf16.msra.mxu0 %v1242
      %1274 = vmatprep.subr.bf16.mxu0 0
      %1275 = vmatpush2.bf16.msra.mxu0 0
      %1276 = vmatprep.subr.bf16.mxu0 0
      %1277 = vmatpush2.bf16.msra.mxu0 0
      %1278 = vmatprep.subr.bf16.mxu0 0
      %1279 = vmatpush2.bf16.msra.mxu0 0
      %1280 = vmatprep.subr.bf16.mxu0 0
      %1281 = vmatpush2.bf16.msra.mxu0 0
      %1282 = vmatprep.subr.bf16.mxu0 0
      %1283 = vmatpush2.bf16.msra.mxu0 0
      %1284 = vmatprep.subr.bf16.mxu0 0
      %1285 = vmatpush2.bf16.msra.mxu0 0
      %1286 = vmatprep.subr.bf16.mxu0 0
      %1287 = vmatpush2.bf16.msra.mxu0 0
      %1288 = vmatprep.subr.bf16.mxu0 0
      %1289 = vmatpush2.bf16.msra.mxu0 0
      %1290 = vmatprep.mubr.bf16.mxu0 0
      %1291 = vmatmul.mubr.bf16.gmra.mxu0 %v1179
      %v1292 = vpop.f32.mrf.mxu0
      %v1293 = vadd.f32 %v1208, %v1292
      %v1294 = vpop.f32.mrf.mxu0
      %v1295 = vpop.f32.mrf.mxu0
      %v1296 = vadd.f32 %v1208, %v1295
      %v1297 = vpop.f32.mrf.mxu0
      %1298 = vmatprep.mubr.bf16.mxu0 0
      %1299 = vmatmul.mubr.bf16.gmra.mxu0 %v1180
      %v1300 = vpop.f32.mrf.mxu0
      %v1301 = vadd.f32 %v1208, %v1300
      %v1302 = vpop.f32.mrf.mxu0
      %v1303 = vpop.f32.mrf.mxu0
      %v1304 = vadd.f32 %v1208, %v1303
      %v1305 = vpop.f32.mrf.mxu0
      %1306 = vmatprep.mubr.bf16.mxu0 0
      %1307 = vmatmul.mubr.bf16.gmra.mxu0 %v1181
      %v1308 = vpop.f32.mrf.mxu0
      %v1309 = vadd.f32 %v1208, %v1308
      %v1310 = vpop.f32.mrf.mxu0
      %v1311 = vpop.f32.mrf.mxu0
      %v1312 = vadd.f32 %v1208, %v1311
      %v1313 = vpop.f32.mrf.mxu0
      %1314 = vmatprep.mubr.bf16.mxu0 0
      %1315 = vmatmul.mubr.bf16.gmra.mxu0 %v1182
      %v1316 = vpop.f32.mrf.mxu0
      %v1317 = vadd.f32 %v1208, %v1316
      %v1318 = vpop.f32.mrf.mxu0
      %v1319 = vpop.f32.mrf.mxu0
      %v1320 = vadd.f32 %v1208, %v1319
      %v1321 = vpop.f32.mrf.mxu0
      %1322 = vmatprep.mubr.bf16.mxu0 0
      %1323 = vmatmul.mubr.bf16.gmra.mxu0 %v1183
      %v1324 = vpop.f32.mrf.mxu0
      %v1325 = vadd.f32 %v1208, %v1324
      %v1326 = vpop.f32.mrf.mxu0
      %v1327 = vpop.f32.mrf.mxu0
      %v1328 = vadd.f32 %v1208, %v1327
      %v1329 = vpop.f32.mrf.mxu0
      %1330 = vmatprep.mubr.bf16.mxu0 0
      %1331 = vmatmul.mubr.bf16.gmra.mxu0 %v1184
      %v1332 = vpop.f32.mrf.mxu0
      %v1333 = vadd.f32 %v1208, %v1332
      %v1334 = vpop.f32.mrf.mxu0
      %v1335 = vpop.f32.mrf.mxu0
      %v1336 = vadd.f32 %v1208, %v1335
      %v1337 = vpop.f32.mrf.mxu0
      %1338 = vmatprep.mubr.bf16.mxu0 0
      %1339 = vmatmul.mubr.bf16.gmra.mxu0 %v1185
      %v1340 = vpop.f32.mrf.mxu0
      %v1341 = vadd.f32 %v1208, %v1340
      %v1342 = vpop.f32.mrf.mxu0
      %v1343 = vpop.f32.mrf.mxu0
      %v1344 = vadd.f32 %v1208, %v1343
      %v1345 = vpop.f32.mrf.mxu0
      %1346 = vmatprep.mubr.bf16.mxu0 0
      %1347 = vmatmul.mubr.bf16.gmra.mxu0 %v1186
      %v1348 = vpop.f32.mrf.mxu0
      %v1349 = vadd.f32 %v1208, %v1348
      %v1350 = vpop.f32.mrf.mxu0
      %v1351 = vpop.f32.mrf.mxu0
      %v1352 = vadd.f32 %v1208, %v1351
      %v1353 = vpop.f32.mrf.mxu0
      %1354 = vdwg.mxu0
      %1355 = vst [vmem:[%s9] sm:$0xff] %v1293
      %1356 = vst [vmem:[%s9 + $0x8] sm:$0xff] %v1296
      %1357 = vst [vmem:[%s9 + $0x10] sm:$0xff] %v1301
      %1358 = vst [vmem:[%s9 + $0x18] sm:$0xff] %v1304
      %1359 = vst [vmem:[%s9 + $0x20] sm:$0xff] %v1309
      %1360 = vst [vmem:[%s9 + $0x28] sm:$0xff] %v1312
      %1361 = vst [vmem:[%s9 + $0x30] sm:$0xff] %v1317
      %1362 = vst [vmem:[%s9 + $0x38] sm:$0xff] %v1320
      %1363 = vst [vmem:[%s9 + $0x40] sm:$0xff] %v1325
      %1364 = vst [vmem:[%s9 + $0x48] sm:$0xff] %v1328
      %1365 = vst [vmem:[%s9 + $0x50] sm:$0xff] %v1333
      %1366 = vst [vmem:[%s9 + $0x58] sm:$0xff] %v1336
      %1367 = vst [vmem:[%s9 + $0x60] sm:$0xff] %v1341
      %1368 = vst [vmem:[%s9 + $0x68] sm:$0xff] %v1344
      %1369 = vst [vmem:[%s9 + $0x70] sm:$0xff] %v1349
      %1370 = vst [vmem:[%s9 + $0x78] sm:$0xff] %v1352
      %v1371 = vld [vmem:[%s8] sm:$0x1]
      %v1373 = vlaneseq
      %v1374 = vshrl.u32 %v1373, 7
      %v1375 = vsub.s32 0, %v1374
      %v1376 = vrot.slane %v1371, %v1375
      %v1378 = vmul.f32 %v1293, %v1376
      %v1379 = vmul.f32 %v1296, %v1376
      %v1380 = vmul.f32 %v1301, %v1376
      %v1381 = vmul.f32 %v1304, %v1376
      %v1382 = vmul.f32 %v1309, %v1376
      %v1383 = vmul.f32 %v1312, %v1376
      %v1384 = vmul.f32 %v1317, %v1376
      %v1385 = vmul.f32 %v1320, %v1376
      %v1386 = vmul.f32 %v1325, %v1376
      %v1387 = vmul.f32 %v1328, %v1376
      %v1388 = vmul.f32 %v1333, %v1376
      %v1389 = vmul.f32 %v1336, %v1376
      %v1390 = vmul.f32 %v1341, %v1376
      %v1391 = vmul.f32 %v1344, %v1376
      %v1392 = vmul.f32 %v1349, %v1376
      %v1393 = vmul.f32 %v1352, %v1376
      %1394 = vadd.xlane.f32.xlu0 %v1378
      %v1395 = vpop.xlane.xlu0 %1394
      %1396 = vadd.xlane.f32.xlu0 %v1379
      %v1397 = vpop.xlane.xlu0 %1396
      %1398 = vadd.xlane.f32.xlu0 %v1380
      %v1399 = vpop.xlane.xlu0 %1398
      %1400 = vadd.xlane.f32.xlu0 %v1381
      %v1401 = vpop.xlane.xlu0 %1400
      %1402 = vadd.xlane.f32.xlu0 %v1382
      %v1403 = vpop.xlane.xlu0 %1402
      %1404 = vadd.xlane.f32.xlu0 %v1383
      %v1405 = vpop.xlane.xlu0 %1404
      %1406 = vadd.xlane.f32.xlu0 %v1384
      %v1407 = vpop.xlane.xlu0 %1406
      %1408 = vadd.xlane.f32.xlu0 %v1385
      %v1409 = vpop.xlane.xlu0 %1408
      %1410 = vadd.xlane.f32.xlu0 %v1386
      %v1411 = vpop.xlane.xlu0 %1410
      %1412 = vadd.xlane.f32.xlu0 %v1387
      %v1413 = vpop.xlane.xlu0 %1412
      %1414 = vadd.xlane.f32.xlu0 %v1388
      %v1415 = vpop.xlane.xlu0 %1414
      %1416 = vadd.xlane.f32.xlu0 %v1389
      %v1417 = vpop.xlane.xlu0 %1416
      %1418 = vadd.xlane.f32.xlu0 %v1390
      %v1419 = vpop.xlane.xlu0 %1418
      %1420 = vadd.xlane.f32.xlu0 %v1391
      %v1421 = vpop.xlane.xlu0 %1420
      %1422 = vadd.xlane.f32.xlu0 %v1392
      %v1423 = vpop.xlane.xlu0 %1422
      %1424 = vadd.xlane.f32.xlu0 %v1393
      %v1425 = vpop.xlane.xlu0 %1424
      %1426 = vxpose.xlu0.b32.start [1/16] %v1395, 128
      %1427 = vxpose.xlu0.b32.cont [2/16] %v1397, 128
      %1428 = vxpose.xlu0.b32.cont [3/16] %v1399, 128
      %1429 = vxpose.xlu0.b32.cont [4/16] %v1401, 128
      %1430 = vxpose.xlu0.b32.cont [5/16] %v1403, 128
      %1431 = vxpose.xlu0.b32.cont [6/16] %v1405, 128
      %1432 = vxpose.xlu0.b32.cont [7/16] %v1407, 128
      %1433 = vxpose.xlu0.b32.cont [8/16] %v1409, 128
      %1434 = vxpose.xlu0.b32.cont [9/16] %v1411, 128
      %1435 = vxpose.xlu0.b32.cont [10/16] %v1413, 128
      %1436 = vxpose.xlu0.b32.cont [11/16] %v1415, 128
      %1437 = vxpose.xlu0.b32.cont [12/16] %v1417, 128
      %1438 = vxpose.xlu0.b32.cont [13/16] %v1419, 128
      %1439 = vxpose.xlu0.b32.cont [14/16] %v1421, 128
      %1440 = vxpose.xlu0.b32.cont [15/16] %v1423, 128
      %1441 = vxpose.xlu0.b32.end [16/16] %v1425, 128
      %v1442 = vpop.trf.xlu0
      %v1443 = vpop.trf.xlu0
      %v1444 = vpop.trf.xlu0
      %v1445 = vpop.trf.xlu0
      %v1446 = vpop.trf.xlu0
      %v1447 = vpop.trf.xlu0
      %v1448 = vpop.trf.xlu0
      %v1449 = vpop.trf.xlu0
      %v1450 = vpop.trf.xlu0
      %v1451 = vpop.trf.xlu0
      %v1452 = vpop.trf.xlu0
      %v1453 = vpop.trf.xlu0
      %v1454 = vpop.trf.xlu0
      %v1455 = vpop.trf.xlu0
      %v1456 = vpop.trf.xlu0
      %v1457 = vpop.trf.xlu0
      %1458 = vst [vmem:[#allocation5] sm:$0x1] %v1442
    $region45: #{gat_forward.5} parent=1 // pred_fallthru
      _
    // Predicated region
    $region46: #{gat_forward.5} parent=1 // pred_check
      _
    $region47: #{gat_forward.5} parent=1 // pred_check_branch
      %1460 = sbr.rel (0) target = $region49
    $region48: #{gat_forward.5} parent=1 // pred_region
      _
    $region49: #{gat_forward.5} parent=1 // pred_fallthru
      _
    // Predicated region
    $region50: #{gat_forward.5} parent=1 // pred_check
      _
    $region51: #{gat_forward.5} parent=1 // pred_check_branch
      %1462 = sbr.rel (0) target = $region53
    $region52: #{gat_forward.5} parent=1 // pred_region
      %s1464 = ssub.s32 16, 16
      %1465 = vsyncadd [#allocation6], %s1464
      %s1467 = sshll.u32 [#allocation5], 4
      %s1468 = int_to_ptr.vmem [resolvable:$true] %s1467
      %1470 = dma.vmem_to_hbm [thread:$0]  %s1468, 16, %s10, [#allocation6]
    $region53: #{gat_forward.5} parent=1 // pred_fallthru
      _
    // Predicated region
    $region54: #{gat_forward.5} parent=1 // pred_check
      _
    $region55: #{gat_forward.5} parent=1 // pred_check_branch
      %1472 = sbr.rel (0) target = $region57
    $region56: #{gat_forward.5} parent=1 // pred_region
      _
    $region57: #{gat_forward.5} parent=1 // pred_fallthru
      _
    // Predicated region
    $region58: #{gat_forward.5} parent=1 // pred_check
      _
    $region59: #{gat_forward.5} parent=1 // pred_check_branch
      %1474 = sbr.rel (0) target = $region61
    $region60: #{gat_forward.5} parent=1 // pred_region
      %1475 = dma.done [#allocation6], 16
    $region61: #{gat_forward.5} parent=1 // pred_fallthru
      _
    %1476 = vsyncpa [#allocation6], 1

// kernel: gat_forward.4
$region0: #{gat_forward.4}
  #allocation0 [shape = 'u32[]', space=smem, size = 0x4, offset = 0x4, fixed_abs, tag = 'smem constant byte address 0x4 - core index']
  #allocation1 [shape = 'u32[144,128]{1,0:T(1,128)}', space=vmem, size = 0x12000, scoped, tag = 'internal scratch']
  #allocation2 [shape = 'f32[128,1]{1,0:T(8,128)}', space=vmem, size = 0x10000, scoped, tag = 'scratch operand']
  #allocation3 [shape = 'f32[128,1]{1,0:T(8,128)}', space=vmem, size = 0x10000, scoped, tag = 'scratch operand']
  #allocation4 [shape = 'f32[128,128]{1,0:T(8,128)}', space=vmem, size = 0x10000, scoped, tag = 'scratch operand']
  %s0 = inlined_call_operand.vmem [shape: bf16[128,128], index: 0, kind: input, shape index: {}, may-alias: {0,1}]
  %s1 = inlined_call_operand.vmem [shape: bf16[128,128], index: 1, kind: input, shape index: {}, may-alias: {0,1}]
  %s2 = inlined_call_operand.vmem [shape: f32[1,128], index: 2, kind: input, shape index: {}]
  %s3 = inlined_call_operand.vmem [shape: bf16[128,128], index: 3, kind: input, shape index: {}]
  %s4 = inlined_call_operand.vmem [shape: f32[1,128], index: 4, kind: input, shape index: {}]
  %s5 = inlined_call_operand.vmem [shape: f32[1,128], index: 5, kind: input, shape index: {}]
  %s6 = inlined_call_operand.vmem [shape: bf16[128,128], index: 6, kind: input, shape index: {}]
  %s7 = inlined_call_operand.vmem [shape: f32[1,128], index: 7, kind: input, shape index: {}]
  %s8 = inlined_call_operand.vmem [shape: f32[1,128], index: 8, kind: input, shape index: {}]
  %s9 = inlined_call_operand.vmem [shape: bf16[128,128], index: 9, kind: output, shape index: {0}]
  %s10 = inlined_call_operand.vmem [shape: f32[1,128], index: 10, kind: output, shape index: {1}]
  %11 = xla_tuple %s9, %s10
  %s12 = sld [smem:[#allocation0]]
  $region62: #{gat_forward.4} parent=0
    _
  %s14 = ssub.s32 1, %s12
  %s15 = scalar_select 0, %s14, %s12
  // Predicated region
  $region2: #{gat_forward.4} parent=0 // pred_check
    _
  $region3: #{gat_forward.4} parent=0 // pred_check_branch
    %17 = sbr.rel (0) target = $region5
  $region4: #{gat_forward.4} parent=0 // pred_region
    _
  $region5: #{gat_forward.4} parent=0 // pred_fallthru
    _
  // Predicated region
  $region6: #{gat_forward.4} parent=0 // pred_check
    _
  $region7: #{gat_forward.4} parent=0 // pred_check_branch
    %19 = sbr.rel (0) target = $region9
  $region8: #{gat_forward.4} parent=0 // pred_region
    _
  $region9: #{gat_forward.4} parent=0 // pred_fallthru
    _
  // Predicated region
  $region10: #{gat_forward.4} parent=0 // pred_check
    _
  $region11: #{gat_forward.4} parent=0 // pred_check_branch
    %21 = sbr.rel (0) target = $region13
  $region12: #{gat_forward.4} parent=0 // pred_region
    _
  $region13: #{gat_forward.4} parent=0 // pred_fallthru
    _
  // Predicated region
  $region14: #{gat_forward.4} parent=0 // pred_check
    _
  $region15: #{gat_forward.4} parent=0 // pred_check_branch
    %23 = sbr.rel (0) target = $region17
  $region16: #{gat_forward.4} parent=0 // pred_region
    _
  $region17: #{gat_forward.4} parent=0 // pred_fallthru
    _
  // Predicated region
  $region18: #{gat_forward.4} parent=0 // pred_check
    _
  $region19: #{gat_forward.4} parent=0 // pred_check_branch
    %25 = sbr.rel (0) target = $region21
  $region20: #{gat_forward.4} parent=0 // pred_region
    _
  $region21: #{gat_forward.4} parent=0 // pred_fallthru
    _
  // Predicated region
  $region22: #{gat_forward.4} parent=0 // pred_check
    _
  $region23: #{gat_forward.4} parent=0 // pred_check_branch
    %27 = sbr.rel (0) target = $region25
  $region24: #{gat_forward.4} parent=0 // pred_region
    _
  $region25: #{gat_forward.4} parent=0 // pred_fallthru
    _
  // Predicated region
  $region26: #{gat_forward.4} parent=0 // pred_check
    _
  $region27: #{gat_forward.4} parent=0 // pred_check_branch
    %29 = sbr.rel (0) target = $region29
  $region28: #{gat_forward.4} parent=0 // pred_region
    _
  $region29: #{gat_forward.4} parent=0 // pred_fallthru
    _
  // Predicated region
  $region30: #{gat_forward.4} parent=0 // pred_check
    _
  $region31: #{gat_forward.4} parent=0 // pred_check_branch
    %31 = sbr.rel (0) target = $region33
  $region32: #{gat_forward.4} parent=0 // pred_region
    _
  $region33: #{gat_forward.4} parent=0 // pred_fallthru
    _
  // Predicated region
  $region34: #{gat_forward.4} parent=0 // pred_check
    _
  $region35: #{gat_forward.4} parent=0 // pred_check_branch
    %33 = sbr.rel (0) target = $region37
  $region36: #{gat_forward.4} parent=0 // pred_region
    _
  $region37: #{gat_forward.4} parent=0 // pred_fallthru
    _
  %p35 = scmp.eq.s32.totalorder 0, 0
  // Predicated region
  $region38: #{gat_forward.4} parent=0 // pred_check
    %p36 = pneg %p35
  $region39: #{gat_forward.4} parent=0 // pred_check_branch
    %38 = sbr.rel (%p36) target = $region41
  $region40: #{gat_forward.4} parent=0 // pred_region
    %vm39 = vcmask 7168
    %40 = vst.msk [vmem:[#allocation2] sm:$0xff] %vm39, -1e+30
    %41 = vst.msk [vmem:[#allocation2 + $0x8] sm:$0xff] %vm39, -1e+30
    %42 = vst.msk [vmem:[#allocation2 + $0x10] sm:$0xff] %vm39, -1e+30
    %43 = vst.msk [vmem:[#allocation2 + $0x18] sm:$0xff] %vm39, -1e+30
    %44 = vst.msk [vmem:[#allocation2 + $0x20] sm:$0xff] %vm39, -1e+30
    %45 = vst.msk [vmem:[#allocation2 + $0x28] sm:$0xff] %vm39, -1e+30
    %46 = vst.msk [vmem:[#allocation2 + $0x30] sm:$0xff] %vm39, -1e+30
    %47 = vst.msk [vmem:[#allocation2 + $0x38] sm:$0xff] %vm39, -1e+30
    %48 = vst.msk [vmem:[#allocation2 + $0x40] sm:$0xff] %vm39, -1e+30
    %49 = vst.msk [vmem:[#allocation2 + $0x48] sm:$0xff] %vm39, -1e+30
    %50 = vst.msk [vmem:[#allocation2 + $0x50] sm:$0xff] %vm39, -1e+30
    %51 = vst.msk [vmem:[#allocation2 + $0x58] sm:$0xff] %vm39, -1e+30
    %52 = vst.msk [vmem:[#allocation2 + $0x60] sm:$0xff] %vm39, -1e+30
    %53 = vst.msk [vmem:[#allocation2 + $0x68] sm:$0xff] %vm39, -1e+30
    %54 = vst.msk [vmem:[#allocation2 + $0x70] sm:$0xff] %vm39, -1e+30
    %55 = vst.msk [vmem:[#allocation2 + $0x78] sm:$0xff] %vm39, -1e+30
    %56 = vst.msk [vmem:[#allocation3] sm:$0xff] %vm39, 0.0
    %57 = vst.msk [vmem:[#allocation3 + $0x8] sm:$0xff] %vm39, 0.0
    %58 = vst.msk [vmem:[#allocation3 + $0x10] sm:$0xff] %vm39, 0.0
    %59 = vst.msk [vmem:[#allocation3 + $0x18] sm:$0xff] %vm39, 0.0
    %60 = vst.msk [vmem:[#allocation3 + $0x20] sm:$0xff] %vm39, 0.0
    %61 = vst.msk [vmem:[#allocation3 + $0x28] sm:$0xff] %vm39, 0.0
    %62 = vst.msk [vmem:[#allocation3 + $0x30] sm:$0xff] %vm39, 0.0
    %63 = vst.msk [vmem:[#allocation3 + $0x38] sm:$0xff] %vm39, 0.0
    %64 = vst.msk [vmem:[#allocation3 + $0x40] sm:$0xff] %vm39, 0.0
    %65 = vst.msk [vmem:[#allocation3 + $0x48] sm:$0xff] %vm39, 0.0
    %66 = vst.msk [vmem:[#allocation3 + $0x50] sm:$0xff] %vm39, 0.0
    %67 = vst.msk [vmem:[#allocation3 + $0x58] sm:$0xff] %vm39, 0.0
    %68 = vst.msk [vmem:[#allocation3 + $0x60] sm:$0xff] %vm39, 0.0
    %69 = vst.msk [vmem:[#allocation3 + $0x68] sm:$0xff] %vm39, 0.0
    %70 = vst.msk [vmem:[#allocation3 + $0x70] sm:$0xff] %vm39, 0.0
    %71 = vst.msk [vmem:[#allocation3 + $0x78] sm:$0xff] %vm39, 0.0
    %72 = vst [vmem:[#allocation4] sm:$0xff] 0.0
    %73 = vst [vmem:[#allocation4 + $0x8] sm:$0xff] 0.0
    %74 = vst [vmem:[#allocation4 + $0x10] sm:$0xff] 0.0
    %75 = vst [vmem:[#allocation4 + $0x18] sm:$0xff] 0.0
    %76 = vst [vmem:[#allocation4 + $0x20] sm:$0xff] 0.0
    %77 = vst [vmem:[#allocation4 + $0x28] sm:$0xff] 0.0
    %78 = vst [vmem:[#allocation4 + $0x30] sm:$0xff] 0.0
    %79 = vst [vmem:[#allocation4 + $0x38] sm:$0xff] 0.0
    %80 = vst [vmem:[#allocation4 + $0x40] sm:$0xff] 0.0
    %81 = vst [vmem:[#allocation4 + $0x48] sm:$0xff] 0.0
    %82 = vst [vmem:[#allocation4 + $0x50] sm:$0xff] 0.0
    %83 = vst [vmem:[#allocation4 + $0x58] sm:$0xff] 0.0
    %84 = vst [vmem:[#allocation4 + $0x60] sm:$0xff] 0.0
    %85 = vst [vmem:[#allocation4 + $0x68] sm:$0xff] 0.0
    %86 = vst [vmem:[#allocation4 + $0x70] sm:$0xff] 0.0
    %87 = vst [vmem:[#allocation4 + $0x78] sm:$0xff] 0.0
  $region41: #{gat_forward.4} parent=0 // pred_fallthru
    _
  %v88 = vld [vmem:[%s0] sm:$0xf]
  %v89 = vld [vmem:[%s0 + $0x4] sm:$0xf]
  %v90 = vld [vmem:[%s0 + $0x8] sm:$0xf]
  %v91 = vld [vmem:[%s0 + $0xc] sm:$0xf]
  %v92 = vld [vmem:[%s0 + $0x10] sm:$0xf]
  %v93 = vld [vmem:[%s0 + $0x14] sm:$0xf]
  %v94 = vld [vmem:[%s0 + $0x18] sm:$0xf]
  %v95 = vld [vmem:[%s0 + $0x1c] sm:$0xf]
  %v96 = vld [vmem:[%s0 + $0x20] sm:$0xf]
  %v97 = vld [vmem:[%s0 + $0x24] sm:$0xf]
  %v98 = vld [vmem:[%s0 + $0x28] sm:$0xf]
  %v99 = vld [vmem:[%s0 + $0x2c] sm:$0xf]
  %v100 = vld [vmem:[%s0 + $0x30] sm:$0xf]
  %v101 = vld [vmem:[%s0 + $0x34] sm:$0xf]
  %v102 = vld [vmem:[%s0 + $0x38] sm:$0xf]
  %v103 = vld [vmem:[%s0 + $0x3c] sm:$0xf]
  %v104 = vunpack.c.l.bf16 %v88
  %v105 = vunpack.c.l.bf16 %v89
  %v106 = vunpack.c.l.bf16 %v90
  %v107 = vunpack.c.l.bf16 %v91
  %v108 = vunpack.c.l.bf16 %v92
  %v109 = vunpack.c.l.bf16 %v93
  %v110 = vunpack.c.l.bf16 %v94
  %v111 = vunpack.c.l.bf16 %v95
  %v112 = vunpack.c.l.bf16 %v96
  %v113 = vunpack.c.l.bf16 %v97
  %v114 = vunpack.c.l.bf16 %v98
  %v115 = vunpack.c.l.bf16 %v99
  %v116 = vunpack.c.l.bf16 %v100
  %v117 = vunpack.c.l.bf16 %v101
  %v118 = vunpack.c.l.bf16 %v102
  %v119 = vunpack.c.l.bf16 %v103
  %v120 = vld [vmem:[%s4] sm:$0x1]
  %v122 = vlaneseq
  %v123 = vshrl.u32 %v122, 7
  %v124 = vsub.s32 0, %v123
  %v125 = vrot.slane %v120, %v124
  %v127 = vmul.f32 %v104, %v125
  %v128 = vmul.f32 %v105, %v125
  %v129 = vmul.f32 %v106, %v125
  %v130 = vmul.f32 %v107, %v125
  %v131 = vmul.f32 %v108, %v125
  %v132 = vmul.f32 %v109, %v125
  %v133 = vmul.f32 %v110, %v125
  %v134 = vmul.f32 %v111, %v125
  %v135 = vmul.f32 %v112, %v125
  %v136 = vmul.f32 %v113, %v125
  %v137 = vmul.f32 %v114, %v125
  %v138 = vmul.f32 %v115, %v125
  %v139 = vmul.f32 %v116, %v125
  %v140 = vmul.f32 %v117, %v125
  %v141 = vmul.f32 %v118, %v125
  %v142 = vmul.f32 %v119, %v125
  %143 = vadd.xlane.f32.xlu0 %v127
  %v144 = vpop.xlane.xlu0 %143
  %145 = vadd.xlane.f32.xlu0 %v128
  %v146 = vpop.xlane.xlu0 %145
  %147 = vadd.xlane.f32.xlu0 %v129
  %v148 = vpop.xlane.xlu0 %147
  %149 = vadd.xlane.f32.xlu0 %v130
  %v150 = vpop.xlane.xlu0 %149
  %151 = vadd.xlane.f32.xlu0 %v131
  %v152 = vpop.xlane.xlu0 %151
  %153 = vadd.xlane.f32.xlu0 %v132
  %v154 = vpop.xlane.xlu0 %153
  %155 = vadd.xlane.f32.xlu0 %v133
  %v156 = vpop.xlane.xlu0 %155
  %157 = vadd.xlane.f32.xlu0 %v134
  %v158 = vpop.xlane.xlu0 %157
  %159 = vadd.xlane.f32.xlu0 %v135
  %v160 = vpop.xlane.xlu0 %159
  %161 = vadd.xlane.f32.xlu0 %v136
  %v162 = vpop.xlane.xlu0 %161
  %163 = vadd.xlane.f32.xlu0 %v137
  %v164 = vpop.xlane.xlu0 %163
  %165 = vadd.xlane.f32.xlu0 %v138
  %v166 = vpop.xlane.xlu0 %165
  %167 = vadd.xlane.f32.xlu0 %v139
  %v168 = vpop.xlane.xlu0 %167
  %169 = vadd.xlane.f32.xlu0 %v140
  %v170 = vpop.xlane.xlu0 %169
  %171 = vadd.xlane.f32.xlu0 %v141
  %v172 = vpop.xlane.xlu0 %171
  %173 = vadd.xlane.f32.xlu0 %v142
  %v174 = vpop.xlane.xlu0 %173
  %v175 = vld [vmem:[%s2] sm:$0x1]
  %v177 = vlaneseq
  %v178 = vshrl.u32 %v177, 7
  %v179 = vsub.s32 0, %v178
  %v180 = vrot.slane %v175, %v179
  %v182 = vadd.f32 %v144, %v180
  %v183 = vadd.f32 %v146, %v180
  %v184 = vadd.f32 %v148, %v180
  %v185 = vadd.f32 %v150, %v180
  %v186 = vadd.f32 %v152, %v180
  %v187 = vadd.f32 %v154, %v180
  %v188 = vadd.f32 %v156, %v180
  %v189 = vadd.f32 %v158, %v180
  %v190 = vadd.f32 %v160, %v180
  %v191 = vadd.f32 %v162, %v180
  %v192 = vadd.f32 %v164, %v180
  %v193 = vadd.f32 %v166, %v180
  %v194 = vadd.f32 %v168, %v180
  %v195 = vadd.f32 %v170, %v180
  %v196 = vadd.f32 %v172, %v180
  %v197 = vadd.f32 %v174, %v180
  %vm198 = vcmp.ge.f32.partialorder %v182, 0.0
  %vm199 = vcmp.ge.f32.partialorder %v183, 0.0
  %vm200 = vcmp.ge.f32.partialorder %v184, 0.0
  %vm201 = vcmp.ge.f32.partialorder %v185, 0.0
  %vm202 = vcmp.ge.f32.partialorder %v186, 0.0
  %vm203 = vcmp.ge.f32.partialorder %v187, 0.0
  %vm204 = vcmp.ge.f32.partialorder %v188, 0.0
  %vm205 = vcmp.ge.f32.partialorder %v189, 0.0
  %vm206 = vcmp.ge.f32.partialorder %v190, 0.0
  %vm207 = vcmp.ge.f32.partialorder %v191, 0.0
  %vm208 = vcmp.ge.f32.partialorder %v192, 0.0
  %vm209 = vcmp.ge.f32.partialorder %v193, 0.0
  %vm210 = vcmp.ge.f32.partialorder %v194, 0.0
  %vm211 = vcmp.ge.f32.partialorder %v195, 0.0
  %vm212 = vcmp.ge.f32.partialorder %v196, 0.0
  %vm213 = vcmp.ge.f32.partialorder %v197, 0.0
  %v214 = vmul.f32 %v182, 0.2
  %v215 = vmul.f32 %v183, 0.2
  %v216 = vmul.f32 %v184, 0.2
  %v217 = vmul.f32 %v185, 0.2
  %v218 = vmul.f32 %v186, 0.2
  %v219 = vmul.f32 %v187, 0.2
  %v220 = vmul.f32 %v188, 0.2
  %v221 = vmul.f32 %v189, 0.2
  %v222 = vmul.f32 %v190, 0.2
  %v223 = vmul.f32 %v191, 0.2
  %v224 = vmul.f32 %v192, 0.2
  %v225 = vmul.f32 %v193, 0.2
  %v226 = vmul.f32 %v194, 0.2
  %v227 = vmul.f32 %v195, 0.2
  %v228 = vmul.f32 %v196, 0.2
  %v229 = vmul.f32 %v197, 0.2
  %v230 = vsel %vm198, %v182, %v214
  %v231 = vsel %vm199, %v183, %v215
  %v232 = vsel %vm200, %v184, %v216
  %v233 = vsel %vm201, %v185, %v217
  %v234 = vsel %vm202, %v186, %v218
  %v235 = vsel %vm203, %v187, %v219
  %v236 = vsel %vm204, %v188, %v220
  %v237 = vsel %vm205, %v189, %v221
  %v238 = vsel %vm206, %v190, %v222
  %v239 = vsel %vm207, %v191, %v223
  %v240 = vsel %vm208, %v192, %v224
  %v241 = vsel %vm209, %v193, %v225
  %v242 = vsel %vm210, %v194, %v226
  %v243 = vsel %vm211, %v195, %v227
  %v244 = vsel %vm212, %v196, %v228
  %v245 = vsel %vm213, %v197, %v229
  %v246 = vld [vmem:[%s3] sm:$0xf]
  %v247 = vld [vmem:[%s3 + $0x4] sm:$0xf]
  %v248 = vld [vmem:[%s3 + $0x8] sm:$0xf]
  %v249 = vld [vmem:[%s3 + $0xc] sm:$0xf]
  %v250 = vld [vmem:[%s3 + $0x10] sm:$0xf]
  %v251 = vld [vmem:[%s3 + $0x14] sm:$0xf]
  %v252 = vld [vmem:[%s3 + $0x18] sm:$0xf]
  %v253 = vld [vmem:[%s3 + $0x1c] sm:$0xf]
  %v254 = vld [vmem:[%s3 + $0x20] sm:$0xf]
  %v255 = vld [vmem:[%s3 + $0x24] sm:$0xf]
  %v256 = vld [vmem:[%s3 + $0x28] sm:$0xf]
  %v257 = vld [vmem:[%s3 + $0x2c] sm:$0xf]
  %v258 = vld [vmem:[%s3 + $0x30] sm:$0xf]
  %v259 = vld [vmem:[%s3 + $0x34] sm:$0xf]
  %v260 = vld [vmem:[%s3 + $0x38] sm:$0xf]
  %v261 = vld [vmem:[%s3 + $0x3c] sm:$0xf]
  %v262 = vunpack.c.l.bf16 %v246
  %v263 = vunpack.c.l.bf16 %v247
  %v264 = vunpack.c.l.bf16 %v248
  %v265 = vunpack.c.l.bf16 %v249
  %v266 = vunpack.c.l.bf16 %v250
  %v267 = vunpack.c.l.bf16 %v251
  %v268 = vunpack.c.l.bf16 %v252
  %v269 = vunpack.c.l.bf16 %v253
  %v270 = vunpack.c.l.bf16 %v254
  %v271 = vunpack.c.l.bf16 %v255
  %v272 = vunpack.c.l.bf16 %v256
  %v273 = vunpack.c.l.bf16 %v257
  %v274 = vunpack.c.l.bf16 %v258
  %v275 = vunpack.c.l.bf16 %v259
  %v276 = vunpack.c.l.bf16 %v260
  %v277 = vunpack.c.l.bf16 %v261
  %vm278 = vcmp.gt.f32.partialorder %v262, 0.0
  %vm279 = vcmp.gt.f32.partialorder %v263, 0.0
  %vm280 = vcmp.gt.f32.partialorder %v264, 0.0
  %vm281 = vcmp.gt.f32.partialorder %v265, 0.0
  %vm282 = vcmp.gt.f32.partialorder %v266, 0.0
  %vm283 = vcmp.gt.f32.partialorder %v267, 0.0
  %vm284 = vcmp.gt.f32.partialorder %v268, 0.0
  %vm285 = vcmp.gt.f32.partialorder %v269, 0.0
  %vm286 = vcmp.gt.f32.partialorder %v270, 0.0
  %vm287 = vcmp.gt.f32.partialorder %v271, 0.0
  %vm288 = vcmp.gt.f32.partialorder %v272, 0.0
  %vm289 = vcmp.gt.f32.partialorder %v273, 0.0
  %vm290 = vcmp.gt.f32.partialorder %v274, 0.0
  %vm291 = vcmp.gt.f32.partialorder %v275, 0.0
  %vm292 = vcmp.gt.f32.partialorder %v276, 0.0
  %vm293 = vcmp.gt.f32.partialorder %v277, 0.0
  %v294 = vsel %vm278, %v230, -1e+30
  %v295 = vsel %vm279, %v231, -1e+30
  %v296 = vsel %vm280, %v232, -1e+30
  %v297 = vsel %vm281, %v233, -1e+30
  %v298 = vsel %vm282, %v234, -1e+30
  %v299 = vsel %vm283, %v235, -1e+30
  %v300 = vsel %vm284, %v236, -1e+30
  %v301 = vsel %vm285, %v237, -1e+30
  %v302 = vsel %vm286, %v238, -1e+30
  %v303 = vsel %vm287, %v239, -1e+30
  %v304 = vsel %vm288, %v240, -1e+30
  %v305 = vsel %vm289, %v241, -1e+30
  %v306 = vsel %vm290, %v242, -1e+30
  %v307 = vsel %vm291, %v243, -1e+30
  %v308 = vsel %vm292, %v244, -1e+30
  %v309 = vsel %vm293, %v245, -1e+30
  %v310 = vld [vmem:[#allocation2] sm:$0xff]
  %v311 = vld [vmem:[#allocation2 + $0x8] sm:$0xff]
  %v312 = vld [vmem:[#allocation2 + $0x10] sm:$0xff]
  %v313 = vld [vmem:[#allocation2 + $0x18] sm:$0xff]
  %v314 = vld [vmem:[#allocation2 + $0x20] sm:$0xff]
  %v315 = vld [vmem:[#allocation2 + $0x28] sm:$0xff]
  %v316 = vld [vmem:[#allocation2 + $0x30] sm:$0xff]
  %v317 = vld [vmem:[#allocation2 + $0x38] sm:$0xff]
  %v318 = vld [vmem:[#allocation2 + $0x40] sm:$0xff]
  %v319 = vld [vmem:[#allocation2 + $0x48] sm:$0xff]
  %v320 = vld [vmem:[#allocation2 + $0x50] sm:$0xff]
  %v321 = vld [vmem:[#allocation2 + $0x58] sm:$0xff]
  %v322 = vld [vmem:[#allocation2 + $0x60] sm:$0xff]
  %v323 = vld [vmem:[#allocation2 + $0x68] sm:$0xff]
  %v324 = vld [vmem:[#allocation2 + $0x70] sm:$0xff]
  %v325 = vld [vmem:[#allocation2 + $0x78] sm:$0xff]
  %326 = vmax.xlane.f32.xlu0 %v294
  %v327 = vpop.xlane.xlu0 %326
  %328 = vmax.xlane.f32.xlu0 %v295
  %v329 = vpop.xlane.xlu0 %328
  %330 = vmax.xlane.f32.xlu0 %v296
  %v331 = vpop.xlane.xlu0 %330
  %332 = vmax.xlane.f32.xlu0 %v297
  %v333 = vpop.xlane.xlu0 %332
  %334 = vmax.xlane.f32.xlu0 %v298
  %v335 = vpop.xlane.xlu0 %334
  %336 = vmax.xlane.f32.xlu0 %v299
  %v337 = vpop.xlane.xlu0 %336
  %338 = vmax.xlane.f32.xlu0 %v300
  %v339 = vpop.xlane.xlu0 %338
  %340 = vmax.xlane.f32.xlu0 %v301
  %v341 = vpop.xlane.xlu0 %340
  %342 = vmax.xlane.f32.xlu0 %v302
  %v343 = vpop.xlane.xlu0 %342
  %344 = vmax.xlane.f32.xlu0 %v303
  %v345 = vpop.xlane.xlu0 %344
  %346 = vmax.xlane.f32.xlu0 %v304
  %v347 = vpop.xlane.xlu0 %346
  %348 = vmax.xlane.f32.xlu0 %v305
  %v349 = vpop.xlane.xlu0 %348
  %350 = vmax.xlane.f32.xlu0 %v306
  %v351 = vpop.xlane.xlu0 %350
  %352 = vmax.xlane.f32.xlu0 %v307
  %v353 = vpop.xlane.xlu0 %352
  %354 = vmax.xlane.f32.xlu0 %v308
  %v355 = vpop.xlane.xlu0 %354
  %356 = vmax.xlane.f32.xlu0 %v309
  %v357 = vpop.xlane.xlu0 %356
  %v358 = vmax.f32 %v310, %v327
  %v359 = vmax.f32 %v311, %v329
  %v360 = vmax.f32 %v312, %v331
  %v361 = vmax.f32 %v313, %v333
  %v362 = vmax.f32 %v314, %v335
  %v363 = vmax.f32 %v315, %v337
  %v364 = vmax.f32 %v316, %v339
  %v365 = vmax.f32 %v317, %v341
  %v366 = vmax.f32 %v318, %v343
  %v367 = vmax.f32 %v319, %v345
  %v368 = vmax.f32 %v320, %v347
  %v369 = vmax.f32 %v321, %v349
  %v370 = vmax.f32 %v322, %v351
  %v371 = vmax.f32 %v323, %v353
  %v372 = vmax.f32 %v324, %v355
  %v373 = vmax.f32 %v325, %v357
  %v374 = vsub.f32 %v310, %v358
  %v375 = vsub.f32 %v311, %v359
  %v376 = vsub.f32 %v312, %v360
  %v377 = vsub.f32 %v313, %v361
  %v378 = vsub.f32 %v314, %v362
  %v379 = vsub.f32 %v315, %v363
  %v380 = vsub.f32 %v316, %v364
  %v381 = vsub.f32 %v317, %v365
  %v382 = vsub.f32 %v318, %v366
  %v383 = vsub.f32 %v319, %v367
  %v384 = vsub.f32 %v320, %v368
  %v385 = vsub.f32 %v321, %v369
  %v386 = vsub.f32 %v322, %v370
  %v387 = vsub.f32 %v323, %v371
  %v388 = vsub.f32 %v324, %v372
  %v389 = vsub.f32 %v325, %v373
  %v390 = vmul.f32 %v374, 1.442695
  %v391 = vpow.pop %v390
  %v392 = vmul.f32 %v375, 1.442695
  %v393 = vpow.pop %v392
  %v394 = vmul.f32 %v376, 1.442695
  %v395 = vpow.pop %v394
  %v396 = vmul.f32 %v377, 1.442695
  %v397 = vpow.pop %v396
  %v398 = vmul.f32 %v378, 1.442695
  %v399 = vpow.pop %v398
  %v400 = vmul.f32 %v379, 1.442695
  %v401 = vpow.pop %v400
  %v402 = vmul.f32 %v380, 1.442695
  %v403 = vpow.pop %v402
  %v404 = vmul.f32 %v381, 1.442695
  %v405 = vpow.pop %v404
  %v406 = vmul.f32 %v382, 1.442695
  %v407 = vpow.pop %v406
  %v408 = vmul.f32 %v383, 1.442695
  %v409 = vpow.pop %v408
  %v410 = vmul.f32 %v384, 1.442695
  %v411 = vpow.pop %v410
  %v412 = vmul.f32 %v385, 1.442695
  %v413 = vpow.pop %v412
  %v414 = vmul.f32 %v386, 1.442695
  %v415 = vpow.pop %v414
  %v416 = vmul.f32 %v387, 1.442695
  %v417 = vpow.pop %v416
  %v418 = vmul.f32 %v388, 1.442695
  %v419 = vpow.pop %v418
  %v420 = vmul.f32 %v389, 1.442695
  %v421 = vpow.pop %v420
  %423 = vset.pattern.permute.xlu0 0
  %424 = vperm.xlu0 %423, %v358
  %v425 = vpop.permute.xlu0 %424
  %428 = vset.pattern.permute.xlu0 0
  %429 = vperm.xlu0 %428, %v359
  %v430 = vpop.permute.xlu0 %429
  %433 = vset.pattern.permute.xlu0 0
  %434 = vperm.xlu0 %433, %v360
  %v435 = vpop.permute.xlu0 %434
  %438 = vset.pattern.permute.xlu0 0
  %439 = vperm.xlu0 %438, %v361
  %v440 = vpop.permute.xlu0 %439
  %443 = vset.pattern.permute.xlu0 0
  %444 = vperm.xlu0 %443, %v362
  %v445 = vpop.permute.xlu0 %444
  %448 = vset.pattern.permute.xlu0 0
  %449 = vperm.xlu0 %448, %v363
  %v450 = vpop.permute.xlu0 %449
  %453 = vset.pattern.permute.xlu0 0
  %454 = vperm.xlu0 %453, %v364
  %v455 = vpop.permute.xlu0 %454
  %458 = vset.pattern.permute.xlu0 0
  %459 = vperm.xlu0 %458, %v365
  %v460 = vpop.permute.xlu0 %459
  %463 = vset.pattern.permute.xlu0 0
  %464 = vperm.xlu0 %463, %v366
  %v465 = vpop.permute.xlu0 %464
  %468 = vset.pattern.permute.xlu0 0
  %469 = vperm.xlu0 %468, %v367
  %v470 = vpop.permute.xlu0 %469
  %473 = vset.pattern.permute.xlu0 0
  %474 = vperm.xlu0 %473, %v368
  %v475 = vpop.permute.xlu0 %474
  %478 = vset.pattern.permute.xlu0 0
  %479 = vperm.xlu0 %478, %v369
  %v480 = vpop.permute.xlu0 %479
  %483 = vset.pattern.permute.xlu0 0
  %484 = vperm.xlu0 %483, %v370
  %v485 = vpop.permute.xlu0 %484
  %488 = vset.pattern.permute.xlu0 0
  %489 = vperm.xlu0 %488, %v371
  %v490 = vpop.permute.xlu0 %489
  %493 = vset.pattern.permute.xlu0 0
  %494 = vperm.xlu0 %493, %v372
  %v495 = vpop.permute.xlu0 %494
  %498 = vset.pattern.permute.xlu0 0
  %499 = vperm.xlu0 %498, %v373
  %v500 = vpop.permute.xlu0 %499
  %v502 = vsub.f32 %v294, %v425
  %v503 = vsub.f32 %v295, %v430
  %v504 = vsub.f32 %v296, %v435
  %v505 = vsub.f32 %v297, %v440
  %v506 = vsub.f32 %v298, %v445
  %v507 = vsub.f32 %v299, %v450
  %v508 = vsub.f32 %v300, %v455
  %v509 = vsub.f32 %v301, %v460
  %v510 = vsub.f32 %v302, %v465
  %v511 = vsub.f32 %v303, %v470
  %v512 = vsub.f32 %v304, %v475
  %v513 = vsub.f32 %v305, %v480
  %v514 = vsub.f32 %v306, %v485
  %v515 = vsub.f32 %v307, %v490
  %v516 = vsub.f32 %v308, %v495
  %v517 = vsub.f32 %v309, %v500
  %v518 = vmul.f32 %v502, 1.442695
  %v519 = vpow.pop %v518
  %v520 = vmul.f32 %v503, 1.442695
  %v521 = vpow.pop %v520
  %v522 = vmul.f32 %v504, 1.442695
  %v523 = vpow.pop %v522
  %v524 = vmul.f32 %v505, 1.442695
  %v525 = vpow.pop %v524
  %v526 = vmul.f32 %v506, 1.442695
  %v527 = vpow.pop %v526
  %v528 = vmul.f32 %v507, 1.442695
  %v529 = vpow.pop %v528
  %v530 = vmul.f32 %v508, 1.442695
  %v531 = vpow.pop %v530
  %v532 = vmul.f32 %v509, 1.442695
  %v533 = vpow.pop %v532
  %v534 = vmul.f32 %v510, 1.442695
  %v535 = vpow.pop %v534
  %v536 = vmul.f32 %v511, 1.442695
  %v537 = vpow.pop %v536
  %v538 = vmul.f32 %v512, 1.442695
  %v539 = vpow.pop %v538
  %v540 = vmul.f32 %v513, 1.442695
  %v541 = vpow.pop %v540
  %v542 = vmul.f32 %v514, 1.442695
  %v543 = vpow.pop %v542
  %v544 = vmul.f32 %v515, 1.442695
  %v545 = vpow.pop %v544
  %v546 = vmul.f32 %v516, 1.442695
  %v547 = vpow.pop %v546
  %v548 = vmul.f32 %v517, 1.442695
  %v549 = vpow.pop %v548
  %v550 = vmul.f32 %v519, %v262
  %v551 = vmul.f32 %v521, %v263
  %v552 = vmul.f32 %v523, %v264
  %v553 = vmul.f32 %v525, %v265
  %v554 = vmul.f32 %v527, %v266
  %v555 = vmul.f32 %v529, %v267
  %v556 = vmul.f32 %v531, %v268
  %v557 = vmul.f32 %v533, %v269
  %v558 = vmul.f32 %v535, %v270
  %v559 = vmul.f32 %v537, %v271
  %v560 = vmul.f32 %v539, %v272
  %v561 = vmul.f32 %v541, %v273
  %v562 = vmul.f32 %v543, %v274
  %v563 = vmul.f32 %v545, %v275
  %v564 = vmul.f32 %v547, %v276
  %v565 = vmul.f32 %v549, %v277
  %v566 = vld [vmem:[#allocation3] sm:$0xff]
  %v567 = vld [vmem:[#allocation3 + $0x8] sm:$0xff]
  %v568 = vld [vmem:[#allocation3 + $0x10] sm:$0xff]
  %v569 = vld [vmem:[#allocation3 + $0x18] sm:$0xff]
  %v570 = vld [vmem:[#allocation3 + $0x20] sm:$0xff]
  %v571 = vld [vmem:[#allocation3 + $0x28] sm:$0xff]
  %v572 = vld [vmem:[#allocation3 + $0x30] sm:$0xff]
  %v573 = vld [vmem:[#allocation3 + $0x38] sm:$0xff]
  %v574 = vld [vmem:[#allocation3 + $0x40] sm:$0xff]
  %v575 = vld [vmem:[#allocation3 + $0x48] sm:$0xff]
  %v576 = vld [vmem:[#allocation3 + $0x50] sm:$0xff]
  %v577 = vld [vmem:[#allocation3 + $0x58] sm:$0xff]
  %v578 = vld [vmem:[#allocation3 + $0x60] sm:$0xff]
  %v579 = vld [vmem:[#allocation3 + $0x68] sm:$0xff]
  %v580 = vld [vmem:[#allocation3 + $0x70] sm:$0xff]
  %v581 = vld [vmem:[#allocation3 + $0x78] sm:$0xff]
  %v582 = vmul.f32 %v391, %v566
  %v583 = vmul.f32 %v393, %v567
  %v584 = vmul.f32 %v395, %v568
  %v585 = vmul.f32 %v397, %v569
  %v586 = vmul.f32 %v399, %v570
  %v587 = vmul.f32 %v401, %v571
  %v588 = vmul.f32 %v403, %v572
  %v589 = vmul.f32 %v405, %v573
  %v590 = vmul.f32 %v407, %v574
  %v591 = vmul.f32 %v409, %v575
  %v592 = vmul.f32 %v411, %v576
  %v593 = vmul.f32 %v413, %v577
  %v594 = vmul.f32 %v415, %v578
  %v595 = vmul.f32 %v417, %v579
  %v596 = vmul.f32 %v419, %v580
  %v597 = vmul.f32 %v421, %v581
  %598 = vadd.xlane.f32.xlu0 %v550
  %v599 = vpop.xlane.xlu0 %598
  %600 = vadd.xlane.f32.xlu0 %v551
  %v601 = vpop.xlane.xlu0 %600
  %602 = vadd.xlane.f32.xlu0 %v552
  %v603 = vpop.xlane.xlu0 %602
  %604 = vadd.xlane.f32.xlu0 %v553
  %v605 = vpop.xlane.xlu0 %604
  %606 = vadd.xlane.f32.xlu0 %v554
  %v607 = vpop.xlane.xlu0 %606
  %608 = vadd.xlane.f32.xlu0 %v555
  %v609 = vpop.xlane.xlu0 %608
  %610 = vadd.xlane.f32.xlu0 %v556
  %v611 = vpop.xlane.xlu0 %610
  %612 = vadd.xlane.f32.xlu0 %v557
  %v613 = vpop.xlane.xlu0 %612
  %614 = vadd.xlane.f32.xlu0 %v558
  %v615 = vpop.xlane.xlu0 %614
  %616 = vadd.xlane.f32.xlu0 %v559
  %v617 = vpop.xlane.xlu0 %616
  %618 = vadd.xlane.f32.xlu0 %v560
  %v619 = vpop.xlane.xlu0 %618
  %620 = vadd.xlane.f32.xlu0 %v561
  %v621 = vpop.xlane.xlu0 %620
  %622 = vadd.xlane.f32.xlu0 %v562
  %v623 = vpop.xlane.xlu0 %622
  %624 = vadd.xlane.f32.xlu0 %v563
  %v625 = vpop.xlane.xlu0 %624
  %626 = vadd.xlane.f32.xlu0 %v564
  %v627 = vpop.xlane.xlu0 %626
  %628 = vadd.xlane.f32.xlu0 %v565
  %v629 = vpop.xlane.xlu0 %628
  %v630 = vadd.f32 %v582, %v599
  %v631 = vadd.f32 %v583, %v601
  %v632 = vadd.f32 %v584, %v603
  %v633 = vadd.f32 %v585, %v605
  %v634 = vadd.f32 %v586, %v607
  %v635 = vadd.f32 %v587, %v609
  %v636 = vadd.f32 %v588, %v611
  %v637 = vadd.f32 %v589, %v613
  %v638 = vadd.f32 %v590, %v615
  %v639 = vadd.f32 %v591, %v617
  %v640 = vadd.f32 %v592, %v619
  %v641 = vadd.f32 %v593, %v621
  %v642 = vadd.f32 %v594, %v623
  %v643 = vadd.f32 %v595, %v625
  %v644 = vadd.f32 %v596, %v627
  %v645 = vadd.f32 %v597, %v629
  %vm646 = vcmask 7168
  %647 = vst.msk [vmem:[#allocation3] sm:$0xff] %vm646, %v630
  %648 = vst.msk [vmem:[#allocation3 + $0x8] sm:$0xff] %vm646, %v631
  %649 = vst.msk [vmem:[#allocation3 + $0x10] sm:$0xff] %vm646, %v632
  %650 = vst.msk [vmem:[#allocation3 + $0x18] sm:$0xff] %vm646, %v633
  %651 = vst.msk [vmem:[#allocation3 + $0x20] sm:$0xff] %vm646, %v634
  %652 = vst.msk [vmem:[#allocation3 + $0x28] sm:$0xff] %vm646, %v635
  %653 = vst.msk [vmem:[#allocation3 + $0x30] sm:$0xff] %vm646, %v636
  %654 = vst.msk [vmem:[#allocation3 + $0x38] sm:$0xff] %vm646, %v637
  %655 = vst.msk [vmem:[#allocation3 + $0x40] sm:$0xff] %vm646, %v638
  %656 = vst.msk [vmem:[#allocation3 + $0x48] sm:$0xff] %vm646, %v639
  %657 = vst.msk [vmem:[#allocation3 + $0x50] sm:$0xff] %vm646, %v640
  %658 = vst.msk [vmem:[#allocation3 + $0x58] sm:$0xff] %vm646, %v641
  %659 = vst.msk [vmem:[#allocation3 + $0x60] sm:$0xff] %vm646, %v642
  %660 = vst.msk [vmem:[#allocation3 + $0x68] sm:$0xff] %vm646, %v643
  %661 = vst.msk [vmem:[#allocation3 + $0x70] sm:$0xff] %vm646, %v644
  %662 = vst.msk [vmem:[#allocation3 + $0x78] sm:$0xff] %vm646, %v645
  %v663 = vld [vmem:[#allocation4] sm:$0xff]
  %v664 = vld [vmem:[#allocation4 + $0x8] sm:$0xff]
  %v665 = vld [vmem:[#allocation4 + $0x10] sm:$0xff]
  %v666 = vld [vmem:[#allocation4 + $0x18] sm:$0xff]
  %v667 = vld [vmem:[#allocation4 + $0x20] sm:$0xff]
  %v668 = vld [vmem:[#allocation4 + $0x28] sm:$0xff]
  %v669 = vld [vmem:[#allocation4 + $0x30] sm:$0xff]
  %v670 = vld [vmem:[#allocation4 + $0x38] sm:$0xff]
  %v671 = vld [vmem:[#allocation4 + $0x40] sm:$0xff]
  %v672 = vld [vmem:[#allocation4 + $0x48] sm:$0xff]
  %v673 = vld [vmem:[#allocation4 + $0x50] sm:$0xff]
  %v674 = vld [vmem:[#allocation4 + $0x58] sm:$0xff]
  %v675 = vld [vmem:[#allocation4 + $0x60] sm:$0xff]
  %v676 = vld [vmem:[#allocation4 + $0x68] sm:$0xff]
  %v677 = vld [vmem:[#allocation4 + $0x70] sm:$0xff]
  %v678 = vld [vmem:[#allocation4 + $0x78] sm:$0xff]
  %680 = vset.pattern.permute.xlu0 0
  %681 = vperm.xlu0 %680, %v391
  %v682 = vpop.permute.xlu0 %681
  %685 = vset.pattern.permute.xlu0 0
  %686 = vperm.xlu0 %685, %v393
  %v687 = vpop.permute.xlu0 %686
  %690 = vset.pattern.permute.xlu0 0
  %691 = vperm.xlu0 %690, %v395
  %v692 = vpop.permute.xlu0 %691
  %695 = vset.pattern.permute.xlu0 0
  %696 = vperm.xlu0 %695, %v397
  %v697 = vpop.permute.xlu0 %696
  %700 = vset.pattern.permute.xlu0 0
  %701 = vperm.xlu0 %700, %v399
  %v702 = vpop.permute.xlu0 %701
  %705 = vset.pattern.permute.xlu0 0
  %706 = vperm.xlu0 %705, %v401
  %v707 = vpop.permute.xlu0 %706
  %710 = vset.pattern.permute.xlu0 0
  %711 = vperm.xlu0 %710, %v403
  %v712 = vpop.permute.xlu0 %711
  %715 = vset.pattern.permute.xlu0 0
  %716 = vperm.xlu0 %715, %v405
  %v717 = vpop.permute.xlu0 %716
  %720 = vset.pattern.permute.xlu0 0
  %721 = vperm.xlu0 %720, %v407
  %v722 = vpop.permute.xlu0 %721
  %725 = vset.pattern.permute.xlu0 0
  %726 = vperm.xlu0 %725, %v409
  %v727 = vpop.permute.xlu0 %726
  %730 = vset.pattern.permute.xlu0 0
  %731 = vperm.xlu0 %730, %v411
  %v732 = vpop.permute.xlu0 %731
  %735 = vset.pattern.permute.xlu0 0
  %736 = vperm.xlu0 %735, %v413
  %v737 = vpop.permute.xlu0 %736
  %740 = vset.pattern.permute.xlu0 0
  %741 = vperm.xlu0 %740, %v415
  %v742 = vpop.permute.xlu0 %741
  %745 = vset.pattern.permute.xlu0 0
  %746 = vperm.xlu0 %745, %v417
  %v747 = vpop.permute.xlu0 %746
  %750 = vset.pattern.permute.xlu0 0
  %751 = vperm.xlu0 %750, %v419
  %v752 = vpop.permute.xlu0 %751
  %755 = vset.pattern.permute.xlu0 0
  %756 = vperm.xlu0 %755, %v421
  %v757 = vpop.permute.xlu0 %756
  %v759 = vmul.f32 %v682, %v663
  %v760 = vmul.f32 %v687, %v664
  %v761 = vmul.f32 %v692, %v665
  %v762 = vmul.f32 %v697, %v666
  %v763 = vmul.f32 %v702, %v667
  %v764 = vmul.f32 %v707, %v668
  %v765 = vmul.f32 %v712, %v669
  %v766 = vmul.f32 %v717, %v670
  %v767 = vmul.f32 %v722, %v671
  %v768 = vmul.f32 %v727, %v672
  %v769 = vmul.f32 %v732, %v673
  %v770 = vmul.f32 %v737, %v674
  %v771 = vmul.f32 %v742, %v675
  %v772 = vmul.f32 %v747, %v676
  %v773 = vmul.f32 %v752, %v677
  %v774 = vmul.f32 %v757, %v678
  %v775 = vpack.c.bf16 %v551, %v550
  %v776 = vpack.c.bf16 %v553, %v552
  %v777 = vpack.c.bf16 %v555, %v554
  %v778 = vpack.c.bf16 %v557, %v556
  %v779 = vpack.c.bf16 %v559, %v558
  %v780 = vpack.c.bf16 %v561, %v560
  %v781 = vpack.c.bf16 %v563, %v562
  %v782 = vpack.c.bf16 %v565, %v564
  %v783 = vld [vmem:[%s1] sm:$0xf]
  %v784 = vld [vmem:[%s1 + $0x4] sm:$0xf]
  %v785 = vld [vmem:[%s1 + $0x8] sm:$0xf]
  %v786 = vld [vmem:[%s1 + $0xc] sm:$0xf]
  %v787 = vld [vmem:[%s1 + $0x10] sm:$0xf]
  %v788 = vld [vmem:[%s1 + $0x14] sm:$0xf]
  %v789 = vld [vmem:[%s1 + $0x18] sm:$0xf]
  %v790 = vld [vmem:[%s1 + $0x1c] sm:$0xf]
  %v791 = vld [vmem:[%s1 + $0x20] sm:$0xf]
  %v792 = vld [vmem:[%s1 + $0x24] sm:$0xf]
  %v793 = vld [vmem:[%s1 + $0x28] sm:$0xf]
  %v794 = vld [vmem:[%s1 + $0x2c] sm:$0xf]
  %v795 = vld [vmem:[%s1 + $0x30] sm:$0xf]
  %v796 = vld [vmem:[%s1 + $0x34] sm:$0xf]
  %v797 = vld [vmem:[%s1 + $0x38] sm:$0xf]
  %v798 = vld [vmem:[%s1 + $0x3c] sm:$0xf]
  %v815 = vunpack.c.l.b16 %v783
  %v816 = vunpack.c.l.b16 %v784
  %v817 = vunpack.c.l.b16 %v785
  %v818 = vunpack.c.l.b16 %v786
  %v819 = vunpack.c.l.b16 %v787
  %v820 = vunpack.c.l.b16 %v788
  %v821 = vunpack.c.l.b16 %v789
  %v822 = vunpack.c.l.b16 %v790
  %v823 = vunpack.c.l.b16 %v791
  %v824 = vunpack.c.l.b16 %v792
  %v825 = vunpack.c.l.b16 %v793
  %v826 = vunpack.c.l.b16 %v794
  %v827 = vunpack.c.l.b16 %v795
  %v828 = vunpack.c.l.b16 %v796
  %v829 = vunpack.c.l.b16 %v797
  %v830 = vunpack.c.l.b16 %v798
  %v831 = vpack.c.b16 %v816, %v815
  %v832 = vpack.c.b16 %v818, %v817
  %v833 = vpack.c.b16 %v820, %v819
  %v834 = vpack.c.b16 %v822, %v821
  %v835 = vpack.c.b16 %v824, %v823
  %v836 = vpack.c.b16 %v826, %v825
  %v837 = vpack.c.b16 %v828, %v827
  %v838 = vpack.c.b16 %v830, %v829
  %847 = vmatprep.subr.bf16.mxu0 0
  %848 = vmatpush1.bf16.msra.mxu0 %v838
  %849 = vmatprep.subr.bf16.mxu0 0
  %850 = vmatpush1.bf16.msra.mxu0 %v837
  %851 = vmatprep.subr.bf16.mxu0 0
  %852 = vmatpush1.bf16.msra.mxu0 %v836
  %853 = vmatprep.subr.bf16.mxu0 0
  %854 = vmatpush1.bf16.msra.mxu0 %v835
  %855 = vmatprep.subr.bf16.mxu0 0
  %856 = vmatpush1.bf16.msra.mxu0 %v834
  %857 = vmatprep.subr.bf16.mxu0 0
  %858 = vmatpush1.bf16.msra.mxu0 %v833
  %859 = vmatprep.subr.bf16.mxu0 0
  %860 = vmatpush1.bf16.msra.mxu0 %v832
  %861 = vmatprep.subr.bf16.mxu0 0
  %862 = vmatpush1.bf16.msra.mxu0 %v831
  %863 = vmatprep.subr.bf16.mxu0 0
  %864 = vmatpush2.bf16.msra.mxu0 0
  %865 = vmatprep.subr.bf16.mxu0 0
  %866 = vmatpush2.bf16.msra.mxu0 0
  %867 = vmatprep.subr.bf16.mxu0 0
  %868 = vmatpush2.bf16.msra.mxu0 0
  %869 = vmatprep.subr.bf16.mxu0 0
  %870 = vmatpush2.bf16.msra.mxu0 0
  %871 = vmatprep.subr.bf16.mxu0 0
  %872 = vmatpush2.bf16.msra.mxu0 0
  %873 = vmatprep.subr.bf16.mxu0 0
  %874 = vmatpush2.bf16.msra.mxu0 0
  %875 = vmatprep.subr.bf16.mxu0 0
  %876 = vmatpush2.bf16.msra.mxu0 0
  %877 = vmatprep.subr.bf16.mxu0 0
  %878 = vmatpush2.bf16.msra.mxu0 0
  %879 = vmatprep.mubr.bf16.mxu0 0
  %880 = vmatmul.mubr.bf16.gmra.mxu0 %v775
  %v881 = vpop.f32.mrf.mxu0
  %v882 = vadd.f32 0.0, %v881
  %v883 = vpop.f32.mrf.mxu0
  %v884 = vpop.f32.mrf.mxu0
  %v885 = vadd.f32 0.0, %v884
  %v886 = vpop.f32.mrf.mxu0
  %887 = vmatprep.mubr.bf16.mxu0 0
  %888 = vmatmul.mubr.bf16.gmra.mxu0 %v776
  %v889 = vpop.f32.mrf.mxu0
  %v890 = vadd.f32 0.0, %v889
  %v891 = vpop.f32.mrf.mxu0
  %v892 = vpop.f32.mrf.mxu0
  %v893 = vadd.f32 0.0, %v892
  %v894 = vpop.f32.mrf.mxu0
  %895 = vmatprep.mubr.bf16.mxu0 0
  %896 = vmatmul.mubr.bf16.gmra.mxu0 %v777
  %v897 = vpop.f32.mrf.mxu0
  %v898 = vadd.f32 0.0, %v897
  %v899 = vpop.f32.mrf.mxu0
  %v900 = vpop.f32.mrf.mxu0
  %v901 = vadd.f32 0.0, %v900
  %v902 = vpop.f32.mrf.mxu0
  %903 = vmatprep.mubr.bf16.mxu0 0
  %904 = vmatmul.mubr.bf16.gmra.mxu0 %v778
  %v905 = vpop.f32.mrf.mxu0
  %v906 = vadd.f32 0.0, %v905
  %v907 = vpop.f32.mrf.mxu0
  %v908 = vpop.f32.mrf.mxu0
  %v909 = vadd.f32 0.0, %v908
  %v910 = vpop.f32.mrf.mxu0
  %911 = vmatprep.mubr.bf16.mxu0 0
  %912 = vmatmul.mubr.bf16.gmra.mxu0 %v779
  %v913 = vpop.f32.mrf.mxu0
  %v914 = vadd.f32 0.0, %v913
  %v915 = vpop.f32.mrf.mxu0
  %v916 = vpop.f32.mrf.mxu0
  %v917 = vadd.f32 0.0, %v916
  %v918 = vpop.f32.mrf.mxu0
  %919 = vmatprep.mubr.bf16.mxu0 0
  %920 = vmatmul.mubr.bf16.gmra.mxu0 %v780
  %v921 = vpop.f32.mrf.mxu0
  %v922 = vadd.f32 0.0, %v921
  %v923 = vpop.f32.mrf.mxu0
  %v924 = vpop.f32.mrf.mxu0
  %v925 = vadd.f32 0.0, %v924
  %v926 = vpop.f32.mrf.mxu0
  %927 = vmatprep.mubr.bf16.mxu0 0
  %928 = vmatmul.mubr.bf16.gmra.mxu0 %v781
  %v929 = vpop.f32.mrf.mxu0
  %v930 = vadd.f32 0.0, %v929
  %v931 = vpop.f32.mrf.mxu0
  %v932 = vpop.f32.mrf.mxu0
  %v933 = vadd.f32 0.0, %v932
  %v934 = vpop.f32.mrf.mxu0
  %935 = vmatprep.mubr.bf16.mxu0 0
  %936 = vmatmul.mubr.bf16.gmra.mxu0 %v782
  %v937 = vpop.f32.mrf.mxu0
  %v938 = vadd.f32 0.0, %v937
  %v939 = vpop.f32.mrf.mxu0
  %v940 = vpop.f32.mrf.mxu0
  %v941 = vadd.f32 0.0, %v940
  %v942 = vpop.f32.mrf.mxu0
  %943 = vdwg.mxu0
  %v944 = vadd.f32 %v759, %v882
  %v945 = vadd.f32 %v760, %v885
  %v946 = vadd.f32 %v761, %v890
  %v947 = vadd.f32 %v762, %v893
  %v948 = vadd.f32 %v763, %v898
  %v949 = vadd.f32 %v764, %v901
  %v950 = vadd.f32 %v765, %v906
  %v951 = vadd.f32 %v766, %v909
  %v952 = vadd.f32 %v767, %v914
  %v953 = vadd.f32 %v768, %v917
  %v954 = vadd.f32 %v769, %v922
  %v955 = vadd.f32 %v770, %v925
  %v956 = vadd.f32 %v771, %v930
  %v957 = vadd.f32 %v772, %v933
  %v958 = vadd.f32 %v773, %v938
  %v959 = vadd.f32 %v774, %v941
  %960 = vst [vmem:[#allocation4] sm:$0xff] %v944
  %961 = vst [vmem:[#allocation4 + $0x8] sm:$0xff] %v945
  %962 = vst [vmem:[#allocation4 + $0x10] sm:$0xff] %v946
  %963 = vst [vmem:[#allocation4 + $0x18] sm:$0xff] %v947
  %964 = vst [vmem:[#allocation4 + $0x20] sm:$0xff] %v948
  %965 = vst [vmem:[#allocation4 + $0x28] sm:$0xff] %v949
  %966 = vst [vmem:[#allocation4 + $0x30] sm:$0xff] %v950
  %967 = vst [vmem:[#allocation4 + $0x38] sm:$0xff] %v951
  %968 = vst [vmem:[#allocation4 + $0x40] sm:$0xff] %v952
  %969 = vst [vmem:[#allocation4 + $0x48] sm:$0xff] %v953
  %970 = vst [vmem:[#allocation4 + $0x50] sm:$0xff] %v954
  %971 = vst [vmem:[#allocation4 + $0x58] sm:$0xff] %v955
  %972 = vst [vmem:[#allocation4 + $0x60] sm:$0xff] %v956
  %973 = vst [vmem:[#allocation4 + $0x68] sm:$0xff] %v957
  %974 = vst [vmem:[#allocation4 + $0x70] sm:$0xff] %v958
  %975 = vst [vmem:[#allocation4 + $0x78] sm:$0xff] %v959
  %976 = vst.msk [vmem:[#allocation2] sm:$0xff] %vm646, %v358
  %977 = vst.msk [vmem:[#allocation2 + $0x8] sm:$0xff] %vm646, %v359
  %978 = vst.msk [vmem:[#allocation2 + $0x10] sm:$0xff] %vm646, %v360
  %979 = vst.msk [vmem:[#allocation2 + $0x18] sm:$0xff] %vm646, %v361
  %980 = vst.msk [vmem:[#allocation2 + $0x20] sm:$0xff] %vm646, %v362
  %981 = vst.msk [vmem:[#allocation2 + $0x28] sm:$0xff] %vm646, %v363
  %982 = vst.msk [vmem:[#allocation2 + $0x30] sm:$0xff] %vm646, %v364
  %983 = vst.msk [vmem:[#allocation2 + $0x38] sm:$0xff] %vm646, %v365
  %984 = vst.msk [vmem:[#allocation2 + $0x40] sm:$0xff] %vm646, %v366
  %985 = vst.msk [vmem:[#allocation2 + $0x48] sm:$0xff] %vm646, %v367
  %986 = vst.msk [vmem:[#allocation2 + $0x50] sm:$0xff] %vm646, %v368
  %987 = vst.msk [vmem:[#allocation2 + $0x58] sm:$0xff] %vm646, %v369
  %988 = vst.msk [vmem:[#allocation2 + $0x60] sm:$0xff] %vm646, %v370
  %989 = vst.msk [vmem:[#allocation2 + $0x68] sm:$0xff] %vm646, %v371
  %990 = vst.msk [vmem:[#allocation2 + $0x70] sm:$0xff] %vm646, %v372
  %991 = vst.msk [vmem:[#allocation2 + $0x78] sm:$0xff] %vm646, %v373
  // Predicated region
  $region42: #{gat_forward.4} parent=0 // pred_check
    %p992 = pneg %p35
  $region43: #{gat_forward.4} parent=0 // pred_check_branch
    %994 = sbr.rel (%p992) target = $region45
  $region44: #{gat_forward.4} parent=0 // pred_region
    %v995 = vld [vmem:[#allocation3] sm:$0xff]
    %v996 = vld [vmem:[#allocation3 + $0x8] sm:$0xff]
    %v997 = vld [vmem:[#allocation3 + $0x10] sm:$0xff]
    %v998 = vld [vmem:[#allocation3 + $0x18] sm:$0xff]
    %v999 = vld [vmem:[#allocation3 + $0x20] sm:$0xff]
    %v1000 = vld [vmem:[#allocation3 + $0x28] sm:$0xff]
    %v1001 = vld [vmem:[#allocation3 + $0x30] sm:$0xff]
    %v1002 = vld [vmem:[#allocation3 + $0x38] sm:$0xff]
    %v1003 = vld [vmem:[#allocation3 + $0x40] sm:$0xff]
    %v1004 = vld [vmem:[#allocation3 + $0x48] sm:$0xff]
    %v1005 = vld [vmem:[#allocation3 + $0x50] sm:$0xff]
    %v1006 = vld [vmem:[#allocation3 + $0x58] sm:$0xff]
    %v1007 = vld [vmem:[#allocation3 + $0x60] sm:$0xff]
    %v1008 = vld [vmem:[#allocation3 + $0x68] sm:$0xff]
    %v1009 = vld [vmem:[#allocation3 + $0x70] sm:$0xff]
    %v1010 = vld [vmem:[#allocation3 + $0x78] sm:$0xff]
    %v1011 = vrcp.pop %v995
    %v1012 = vrcp.pop %v996
    %v1013 = vrcp.pop %v997
    %v1014 = vrcp.pop %v998
    %v1015 = vrcp.pop %v999
    %v1016 = vrcp.pop %v1000
    %v1017 = vrcp.pop %v1001
    %v1018 = vrcp.pop %v1002
    %v1019 = vrcp.pop %v1003
    %v1020 = vrcp.pop %v1004
    %v1021 = vrcp.pop %v1005
    %v1022 = vrcp.pop %v1006
    %v1023 = vrcp.pop %v1007
    %v1024 = vrcp.pop %v1008
    %v1025 = vrcp.pop %v1009
    %v1026 = vrcp.pop %v1010
    %v1027 = vld [vmem:[#allocation4] sm:$0xff]
    %v1028 = vld [vmem:[#allocation4 + $0x8] sm:$0xff]
    %v1029 = vld [vmem:[#allocation4 + $0x10] sm:$0xff]
    %v1030 = vld [vmem:[#allocation4 + $0x18] sm:$0xff]
    %v1031 = vld [vmem:[#allocation4 + $0x20] sm:$0xff]
    %v1032 = vld [vmem:[#allocation4 + $0x28] sm:$0xff]
    %v1033 = vld [vmem:[#allocation4 + $0x30] sm:$0xff]
    %v1034 = vld [vmem:[#allocation4 + $0x38] sm:$0xff]
    %v1035 = vld [vmem:[#allocation4 + $0x40] sm:$0xff]
    %v1036 = vld [vmem:[#allocation4 + $0x48] sm:$0xff]
    %v1037 = vld [vmem:[#allocation4 + $0x50] sm:$0xff]
    %v1038 = vld [vmem:[#allocation4 + $0x58] sm:$0xff]
    %v1039 = vld [vmem:[#allocation4 + $0x60] sm:$0xff]
    %v1040 = vld [vmem:[#allocation4 + $0x68] sm:$0xff]
    %v1041 = vld [vmem:[#allocation4 + $0x70] sm:$0xff]
    %v1042 = vld [vmem:[#allocation4 + $0x78] sm:$0xff]
    %1044 = vset.pattern.permute.xlu0 0
    %1045 = vperm.xlu0 %1044, %v1011
    %v1046 = vpop.permute.xlu0 %1045
    %1049 = vset.pattern.permute.xlu0 0
    %1050 = vperm.xlu0 %1049, %v1012
    %v1051 = vpop.permute.xlu0 %1050
    %1054 = vset.pattern.permute.xlu0 0
    %1055 = vperm.xlu0 %1054, %v1013
    %v1056 = vpop.permute.xlu0 %1055
    %1059 = vset.pattern.permute.xlu0 0
    %1060 = vperm.xlu0 %1059, %v1014
    %v1061 = vpop.permute.xlu0 %1060
    %1064 = vset.pattern.permute.xlu0 0
    %1065 = vperm.xlu0 %1064, %v1015
    %v1066 = vpop.permute.xlu0 %1065
    %1069 = vset.pattern.permute.xlu0 0
    %1070 = vperm.xlu0 %1069, %v1016
    %v1071 = vpop.permute.xlu0 %1070
    %1074 = vset.pattern.permute.xlu0 0
    %1075 = vperm.xlu0 %1074, %v1017
    %v1076 = vpop.permute.xlu0 %1075
    %1079 = vset.pattern.permute.xlu0 0
    %1080 = vperm.xlu0 %1079, %v1018
    %v1081 = vpop.permute.xlu0 %1080
    %1084 = vset.pattern.permute.xlu0 0
    %1085 = vperm.xlu0 %1084, %v1019
    %v1086 = vpop.permute.xlu0 %1085
    %1089 = vset.pattern.permute.xlu0 0
    %1090 = vperm.xlu0 %1089, %v1020
    %v1091 = vpop.permute.xlu0 %1090
    %1094 = vset.pattern.permute.xlu0 0
    %1095 = vperm.xlu0 %1094, %v1021
    %v1096 = vpop.permute.xlu0 %1095
    %1099 = vset.pattern.permute.xlu0 0
    %1100 = vperm.xlu0 %1099, %v1022
    %v1101 = vpop.permute.xlu0 %1100
    %1104 = vset.pattern.permute.xlu0 0
    %1105 = vperm.xlu0 %1104, %v1023
    %v1106 = vpop.permute.xlu0 %1105
    %1109 = vset.pattern.permute.xlu0 0
    %1110 = vperm.xlu0 %1109, %v1024
    %v1111 = vpop.permute.xlu0 %1110
    %1114 = vset.pattern.permute.xlu0 0
    %1115 = vperm.xlu0 %1114, %v1025
    %v1116 = vpop.permute.xlu0 %1115
    %1119 = vset.pattern.permute.xlu0 0
    %1120 = vperm.xlu0 %1119, %v1026
    %v1121 = vpop.permute.xlu0 %1120
    %v1123 = vmul.f32 %v1027, %v1046
    %v1124 = vmul.f32 %v1028, %v1051
    %v1125 = vmul.f32 %v1029, %v1056
    %v1126 = vmul.f32 %v1030, %v1061
    %v1127 = vmul.f32 %v1031, %v1066
    %v1128 = vmul.f32 %v1032, %v1071
    %v1129 = vmul.f32 %v1033, %v1076
    %v1130 = vmul.f32 %v1034, %v1081
    %v1131 = vmul.f32 %v1035, %v1086
    %v1132 = vmul.f32 %v1036, %v1091
    %v1133 = vmul.f32 %v1037, %v1096
    %v1134 = vmul.f32 %v1038, %v1101
    %v1135 = vmul.f32 %v1039, %v1106
    %v1136 = vmul.f32 %v1040, %v1111
    %v1137 = vmul.f32 %v1041, %v1116
    %v1138 = vmul.f32 %v1042, %v1121
    %v1139 = vld [vmem:[%s5] sm:$0x1]
    %v1141 = vlaneseq
    %v1142 = vshrl.u32 %v1141, 7
    %v1143 = vsub.s32 0, %v1142
    %v1144 = vrot.slane %v1139, %v1143
    %v1146 = vadd.f32 %v1123, %v1144
    %v1147 = vadd.f32 %v1124, %v1144
    %v1148 = vadd.f32 %v1125, %v1144
    %v1149 = vadd.f32 %v1126, %v1144
    %v1150 = vadd.f32 %v1127, %v1144
    %v1151 = vadd.f32 %v1128, %v1144
    %v1152 = vadd.f32 %v1129, %v1144
    %v1153 = vadd.f32 %v1130, %v1144
    %v1154 = vadd.f32 %v1131, %v1144
    %v1155 = vadd.f32 %v1132, %v1144
    %v1156 = vadd.f32 %v1133, %v1144
    %v1157 = vadd.f32 %v1134, %v1144
    %v1158 = vadd.f32 %v1135, %v1144
    %v1159 = vadd.f32 %v1136, %v1144
    %v1160 = vadd.f32 %v1137, %v1144
    %v1161 = vadd.f32 %v1138, %v1144
    %v1162 = vmax.f32 %v1146, 0.0
    %v1163 = vmax.f32 %v1147, 0.0
    %v1164 = vmax.f32 %v1148, 0.0
    %v1165 = vmax.f32 %v1149, 0.0
    %v1166 = vmax.f32 %v1150, 0.0
    %v1167 = vmax.f32 %v1151, 0.0
    %v1168 = vmax.f32 %v1152, 0.0
    %v1169 = vmax.f32 %v1153, 0.0
    %v1170 = vmax.f32 %v1154, 0.0
    %v1171 = vmax.f32 %v1155, 0.0
    %v1172 = vmax.f32 %v1156, 0.0
    %v1173 = vmax.f32 %v1157, 0.0
    %v1174 = vmax.f32 %v1158, 0.0
    %v1175 = vmax.f32 %v1159, 0.0
    %v1176 = vmax.f32 %v1160, 0.0
    %v1177 = vmax.f32 %v1161, 0.0
    %v1178 = vpack.c.bf16 %v1163, %v1162
    %v1179 = vpack.c.bf16 %v1165, %v1164
    %v1180 = vpack.c.bf16 %v1167, %v1166
    %v1181 = vpack.c.bf16 %v1169, %v1168
    %v1182 = vpack.c.bf16 %v1171, %v1170
    %v1183 = vpack.c.bf16 %v1173, %v1172
    %v1184 = vpack.c.bf16 %v1175, %v1174
    %v1185 = vpack.c.bf16 %v1177, %v1176
    %v1186 = vld [vmem:[%s6] sm:$0xf]
    %v1187 = vld [vmem:[%s6 + $0x4] sm:$0xf]
    %v1188 = vld [vmem:[%s6 + $0x8] sm:$0xf]
    %v1189 = vld [vmem:[%s6 + $0xc] sm:$0xf]
    %v1190 = vld [vmem:[%s6 + $0x10] sm:$0xf]
    %v1191 = vld [vmem:[%s6 + $0x14] sm:$0xf]
    %v1192 = vld [vmem:[%s6 + $0x18] sm:$0xf]
    %v1193 = vld [vmem:[%s6 + $0x1c] sm:$0xf]
    %v1194 = vld [vmem:[%s6 + $0x20] sm:$0xf]
    %v1195 = vld [vmem:[%s6 + $0x24] sm:$0xf]
    %v1196 = vld [vmem:[%s6 + $0x28] sm:$0xf]
    %v1197 = vld [vmem:[%s6 + $0x2c] sm:$0xf]
    %v1198 = vld [vmem:[%s6 + $0x30] sm:$0xf]
    %v1199 = vld [vmem:[%s6 + $0x34] sm:$0xf]
    %v1200 = vld [vmem:[%s6 + $0x38] sm:$0xf]
    %v1201 = vld [vmem:[%s6 + $0x3c] sm:$0xf]
    %v1202 = vld [vmem:[%s7] sm:$0x1]
    %v1204 = vlaneseq
    %v1205 = vshrl.u32 %v1204, 7
    %v1206 = vsub.s32 0, %v1205
    %v1207 = vrot.slane %v1202, %v1206
    %v1225 = vunpack.c.l.b16 %v1186
    %v1226 = vunpack.c.l.b16 %v1187
    %v1227 = vunpack.c.l.b16 %v1188
    %v1228 = vunpack.c.l.b16 %v1189
    %v1229 = vunpack.c.l.b16 %v1190
    %v1230 = vunpack.c.l.b16 %v1191
    %v1231 = vunpack.c.l.b16 %v1192
    %v1232 = vunpack.c.l.b16 %v1193
    %v1233 = vunpack.c.l.b16 %v1194
    %v1234 = vunpack.c.l.b16 %v1195
    %v1235 = vunpack.c.l.b16 %v1196
    %v1236 = vunpack.c.l.b16 %v1197
    %v1237 = vunpack.c.l.b16 %v1198
    %v1238 = vunpack.c.l.b16 %v1199
    %v1239 = vunpack.c.l.b16 %v1200
    %v1240 = vunpack.c.l.b16 %v1201
    %v1241 = vpack.c.b16 %v1226, %v1225
    %v1242 = vpack.c.b16 %v1228, %v1227
    %v1243 = vpack.c.b16 %v1230, %v1229
    %v1244 = vpack.c.b16 %v1232, %v1231
    %v1245 = vpack.c.b16 %v1234, %v1233
    %v1246 = vpack.c.b16 %v1236, %v1235
    %v1247 = vpack.c.b16 %v1238, %v1237
    %v1248 = vpack.c.b16 %v1240, %v1239
    %1257 = vmatprep.subr.bf16.mxu0 0
    %1258 = vmatpush1.bf16.msra.mxu0 %v1248
    %1259 = vmatprep.subr.bf16.mxu0 0
    %1260 = vmatpush1.bf16.msra.mxu0 %v1247
    %1261 = vmatprep.subr.bf16.mxu0 0
    %1262 = vmatpush1.bf16.msra.mxu0 %v1246
    %1263 = vmatprep.subr.bf16.mxu0 0
    %1264 = vmatpush1.bf16.msra.mxu0 %v1245
    %1265 = vmatprep.subr.bf16.mxu0 0
    %1266 = vmatpush1.bf16.msra.mxu0 %v1244
    %1267 = vmatprep.subr.bf16.mxu0 0
    %1268 = vmatpush1.bf16.msra.mxu0 %v1243
    %1269 = vmatprep.subr.bf16.mxu0 0
    %1270 = vmatpush1.bf16.msra.mxu0 %v1242
    %1271 = vmatprep.subr.bf16.mxu0 0
    %1272 = vmatpush1.bf16.msra.mxu0 %v1241
    %1273 = vmatprep.subr.bf16.mxu0 0
    %1274 = vmatpush2.bf16.msra.mxu0 0
    %1275 = vmatprep.subr.bf16.mxu0 0
    %1276 = vmatpush2.bf16.msra.mxu0 0
    %1277 = vmatprep.subr.bf16.mxu0 0
    %1278 = vmatpush2.bf16.msra.mxu0 0
    %1279 = vmatprep.subr.bf16.mxu0 0
    %1280 = vmatpush2.bf16.msra.mxu0 0
    %1281 = vmatprep.subr.bf16.mxu0 0
    %1282 = vmatpush2.bf16.msra.mxu0 0
    %1283 = vmatprep.subr.bf16.mxu0 0
    %1284 = vmatpush2.bf16.msra.mxu0 0
    %1285 = vmatprep.subr.bf16.mxu0 0
    %1286 = vmatpush2.bf16.msra.mxu0 0
    %1287 = vmatprep.subr.bf16.mxu0 0
    %1288 = vmatpush2.bf16.msra.mxu0 0
    %1289 = vmatprep.mubr.bf16.mxu0 0
    %1290 = vmatmul.mubr.bf16.gmra.mxu0 %v1178
    %v1291 = vpop.f32.mrf.mxu0
    %v1292 = vadd.f32 %v1207, %v1291
    %v1293 = vpop.f32.mrf.mxu0
    %v1294 = vpop.f32.mrf.mxu0
    %v1295 = vadd.f32 %v1207, %v1294
    %v1296 = vpop.f32.mrf.mxu0
    %1297 = vmatprep.mubr.bf16.mxu0 0
    %1298 = vmatmul.mubr.bf16.gmra.mxu0 %v1179
    %v1299 = vpop.f32.mrf.mxu0
    %v1300 = vadd.f32 %v1207, %v1299
    %v1301 = vpop.f32.mrf.mxu0
    %v1302 = vpop.f32.mrf.mxu0
    %v1303 = vadd.f32 %v1207, %v1302
    %v1304 = vpop.f32.mrf.mxu0
    %1305 = vmatprep.mubr.bf16.mxu0 0
    %1306 = vmatmul.mubr.bf16.gmra.mxu0 %v1180
    %v1307 = vpop.f32.mrf.mxu0
    %v1308 = vadd.f32 %v1207, %v1307
    %v1309 = vpop.f32.mrf.mxu0
    %v1310 = vpop.f32.mrf.mxu0
    %v1311 = vadd.f32 %v1207, %v1310
    %v1312 = vpop.f32.mrf.mxu0
    %1313 = vmatprep.mubr.bf16.mxu0 0
    %1314 = vmatmul.mubr.bf16.gmra.mxu0 %v1181
    %v1315 = vpop.f32.mrf.mxu0
    %v1316 = vadd.f32 %v1207, %v1315
    %v1317 = vpop.f32.mrf.mxu0
    %v1318 = vpop.f32.mrf.mxu0
    %v1319 = vadd.f32 %v1207, %v1318
    %v1320 = vpop.f32.mrf.mxu0
    %1321 = vmatprep.mubr.bf16.mxu0 0
    %1322 = vmatmul.mubr.bf16.gmra.mxu0 %v1182
    %v1323 = vpop.f32.mrf.mxu0
    %v1324 = vadd.f32 %v1207, %v1323
    %v1325 = vpop.f32.mrf.mxu0
    %v1326 = vpop.f32.mrf.mxu0
    %v1327 = vadd.f32 %v1207, %v1326
    %v1328 = vpop.f32.mrf.mxu0
    %1329 = vmatprep.mubr.bf16.mxu0 0
    %1330 = vmatmul.mubr.bf16.gmra.mxu0 %v1183
    %v1331 = vpop.f32.mrf.mxu0
    %v1332 = vadd.f32 %v1207, %v1331
    %v1333 = vpop.f32.mrf.mxu0
    %v1334 = vpop.f32.mrf.mxu0
    %v1335 = vadd.f32 %v1207, %v1334
    %v1336 = vpop.f32.mrf.mxu0
    %1337 = vmatprep.mubr.bf16.mxu0 0
    %1338 = vmatmul.mubr.bf16.gmra.mxu0 %v1184
    %v1339 = vpop.f32.mrf.mxu0
    %v1340 = vadd.f32 %v1207, %v1339
    %v1341 = vpop.f32.mrf.mxu0
    %v1342 = vpop.f32.mrf.mxu0
    %v1343 = vadd.f32 %v1207, %v1342
    %v1344 = vpop.f32.mrf.mxu0
    %1345 = vmatprep.mubr.bf16.mxu0 0
    %1346 = vmatmul.mubr.bf16.gmra.mxu0 %v1185
    %v1347 = vpop.f32.mrf.mxu0
    %v1348 = vadd.f32 %v1207, %v1347
    %v1349 = vpop.f32.mrf.mxu0
    %v1350 = vpop.f32.mrf.mxu0
    %v1351 = vadd.f32 %v1207, %v1350
    %v1352 = vpop.f32.mrf.mxu0
    %1353 = vdwg.mxu0
    %v1354 = vpack.c.bf16 %v1295, %v1292
    %v1355 = vpack.c.bf16 %v1303, %v1300
    %v1356 = vpack.c.bf16 %v1311, %v1308
    %v1357 = vpack.c.bf16 %v1319, %v1316
    %v1358 = vpack.c.bf16 %v1327, %v1324
    %v1359 = vpack.c.bf16 %v1335, %v1332
    %v1360 = vpack.c.bf16 %v1343, %v1340
    %v1361 = vpack.c.bf16 %v1351, %v1348
    %v1370 = vunpack.c.l.b16 %v1354
    %v1371 = vunpack.c.h.b16 %v1354
    %v1372 = vunpack.c.l.b16 %v1355
    %v1373 = vunpack.c.h.b16 %v1355
    %v1374 = vunpack.c.l.b16 %v1356
    %v1375 = vunpack.c.h.b16 %v1356
    %v1376 = vunpack.c.l.b16 %v1357
    %v1377 = vunpack.c.h.b16 %v1357
    %v1378 = vunpack.c.l.b16 %v1358
    %v1379 = vunpack.c.h.b16 %v1358
    %v1380 = vunpack.c.l.b16 %v1359
    %v1381 = vunpack.c.h.b16 %v1359
    %v1382 = vunpack.c.l.b16 %v1360
    %v1383 = vunpack.c.h.b16 %v1360
    %v1384 = vunpack.c.l.b16 %v1361
    %v1385 = vunpack.c.h.b16 %v1361
    %v1386 = vpack.c.b16 %v1370, %v1370
    %v1387 = vpack.c.b16 %v1371, %v1371
    %v1388 = vpack.c.b16 %v1372, %v1372
    %v1389 = vpack.c.b16 %v1373, %v1373
    %v1390 = vpack.c.b16 %v1374, %v1374
    %v1391 = vpack.c.b16 %v1375, %v1375
    %v1392 = vpack.c.b16 %v1376, %v1376
    %v1393 = vpack.c.b16 %v1377, %v1377
    %v1394 = vpack.c.b16 %v1378, %v1378
    %v1395 = vpack.c.b16 %v1379, %v1379
    %v1396 = vpack.c.b16 %v1380, %v1380
    %v1397 = vpack.c.b16 %v1381, %v1381
    %v1398 = vpack.c.b16 %v1382, %v1382
    %v1399 = vpack.c.b16 %v1383, %v1383
    %v1400 = vpack.c.b16 %v1384, %v1384
    %v1401 = vpack.c.b16 %v1385, %v1385
    %1418 = vst [vmem:[%s9] sm:$0xf] %v1386
    %1419 = vst [vmem:[%s9 + $0x4] sm:$0xf] %v1387
    %1420 = vst [vmem:[%s9 + $0x8] sm:$0xf] %v1388
    %1421 = vst [vmem:[%s9 + $0xc] sm:$0xf] %v1389
    %1422 = vst [vmem:[%s9 + $0x10] sm:$0xf] %v1390
    %1423 = vst [vmem:[%s9 + $0x14] sm:$0xf] %v1391
    %1424 = vst [vmem:[%s9 + $0x18] sm:$0xf] %v1392
    %1425 = vst [vmem:[%s9 + $0x1c] sm:$0xf] %v1393
    %1426 = vst [vmem:[%s9 + $0x20] sm:$0xf] %v1394
    %1427 = vst [vmem:[%s9 + $0x24] sm:$0xf] %v1395
    %1428 = vst [vmem:[%s9 + $0x28] sm:$0xf] %v1396
    %1429 = vst [vmem:[%s9 + $0x2c] sm:$0xf] %v1397
    %1430 = vst [vmem:[%s9 + $0x30] sm:$0xf] %v1398
    %1431 = vst [vmem:[%s9 + $0x34] sm:$0xf] %v1399
    %1432 = vst [vmem:[%s9 + $0x38] sm:$0xf] %v1400
    %1433 = vst [vmem:[%s9 + $0x3c] sm:$0xf] %v1401
    %v1434 = vld [vmem:[%s8] sm:$0x1]
    %v1436 = vlaneseq
    %v1437 = vshrl.u32 %v1436, 7
    %v1438 = vsub.s32 0, %v1437
    %v1439 = vrot.slane %v1434, %v1438
    %v1441 = vmul.f32 %v1292, %v1439
    %v1442 = vmul.f32 %v1295, %v1439
    %v1443 = vmul.f32 %v1300, %v1439
    %v1444 = vmul.f32 %v1303, %v1439
    %v1445 = vmul.f32 %v1308, %v1439
    %v1446 = vmul.f32 %v1311, %v1439
    %v1447 = vmul.f32 %v1316, %v1439
    %v1448 = vmul.f32 %v1319, %v1439
    %v1449 = vmul.f32 %v1324, %v1439
    %v1450 = vmul.f32 %v1327, %v1439
    %v1451 = vmul.f32 %v1332, %v1439
    %v1452 = vmul.f32 %v1335, %v1439
    %v1453 = vmul.f32 %v1340, %v1439
    %v1454 = vmul.f32 %v1343, %v1439
    %v1455 = vmul.f32 %v1348, %v1439
    %v1456 = vmul.f32 %v1351, %v1439
    %1457 = vadd.xlane.f32.xlu0 %v1441
    %v1458 = vpop.xlane.xlu0 %1457
    %1459 = vadd.xlane.f32.xlu0 %v1442
    %v1460 = vpop.xlane.xlu0 %1459
    %1461 = vadd.xlane.f32.xlu0 %v1443
    %v1462 = vpop.xlane.xlu0 %1461
    %1463 = vadd.xlane.f32.xlu0 %v1444
    %v1464 = vpop.xlane.xlu0 %1463
    %1465 = vadd.xlane.f32.xlu0 %v1445
    %v1466 = vpop.xlane.xlu0 %1465
    %1467 = vadd.xlane.f32.xlu0 %v1446
    %v1468 = vpop.xlane.xlu0 %1467
    %1469 = vadd.xlane.f32.xlu0 %v1447
    %v1470 = vpop.xlane.xlu0 %1469
    %1471 = vadd.xlane.f32.xlu0 %v1448
    %v1472 = vpop.xlane.xlu0 %1471
    %1473 = vadd.xlane.f32.xlu0 %v1449
    %v1474 = vpop.xlane.xlu0 %1473
    %1475 = vadd.xlane.f32.xlu0 %v1450
    %v1476 = vpop.xlane.xlu0 %1475
    %1477 = vadd.xlane.f32.xlu0 %v1451
    %v1478 = vpop.xlane.xlu0 %1477
    %1479 = vadd.xlane.f32.xlu0 %v1452
    %v1480 = vpop.xlane.xlu0 %1479
    %1481 = vadd.xlane.f32.xlu0 %v1453
    %v1482 = vpop.xlane.xlu0 %1481
    %1483 = vadd.xlane.f32.xlu0 %v1454
    %v1484 = vpop.xlane.xlu0 %1483
    %1485 = vadd.xlane.f32.xlu0 %v1455
    %v1486 = vpop.xlane.xlu0 %1485
    %1487 = vadd.xlane.f32.xlu0 %v1456
    %v1488 = vpop.xlane.xlu0 %1487
    %1489 = vxpose.xlu0.b32.start [1/16] %v1458, 128
    %1490 = vxpose.xlu0.b32.cont [2/16] %v1460, 128
    %1491 = vxpose.xlu0.b32.cont [3/16] %v1462, 128
    %1492 = vxpose.xlu0.b32.cont [4/16] %v1464, 128
    %1493 = vxpose.xlu0.b32.cont [5/16] %v1466, 128
    %1494 = vxpose.xlu0.b32.cont [6/16] %v1468, 128
    %1495 = vxpose.xlu0.b32.cont [7/16] %v1470, 128
    %1496 = vxpose.xlu0.b32.cont [8/16] %v1472, 128
    %1497 = vxpose.xlu0.b32.cont [9/16] %v1474, 128
    %1498 = vxpose.xlu0.b32.cont [10/16] %v1476, 128
    %1499 = vxpose.xlu0.b32.cont [11/16] %v1478, 128
    %1500 = vxpose.xlu0.b32.cont [12/16] %v1480, 128
    %1501 = vxpose.xlu0.b32.cont [13/16] %v1482, 128
    %1502 = vxpose.xlu0.b32.cont [14/16] %v1484, 128
    %1503 = vxpose.xlu0.b32.cont [15/16] %v1486, 128
    %1504 = vxpose.xlu0.b32.end [16/16] %v1488, 128
    %v1505 = vpop.trf.xlu0
    %v1506 = vpop.trf.xlu0
    %v1507 = vpop.trf.xlu0
    %v1508 = vpop.trf.xlu0
    %v1509 = vpop.trf.xlu0
    %v1510 = vpop.trf.xlu0
    %v1511 = vpop.trf.xlu0
    %v1512 = vpop.trf.xlu0
    %v1513 = vpop.trf.xlu0
    %v1514 = vpop.trf.xlu0
    %v1515 = vpop.trf.xlu0
    %v1516 = vpop.trf.xlu0
    %v1517 = vpop.trf.xlu0
    %v1518 = vpop.trf.xlu0
    %v1519 = vpop.trf.xlu0
    %v1520 = vpop.trf.xlu0
    %1521 = vst [vmem:[%s10] sm:$0x1] %v1505
  $region45: #{gat_forward.4} parent=0 // pred_fallthru
    _
  // Predicated region
  $region46: #{gat_forward.4} parent=0 // pred_check
    _
  $region47: #{gat_forward.4} parent=0 // pred_check_branch
    %1523 = sbr.rel (0) target = $region49
  $region48: #{gat_forward.4} parent=0 // pred_region
    _
  $region49: #{gat_forward.4} parent=0 // pred_fallthru
    _
  // Predicated region
  $region50: #{gat_forward.4} parent=0 // pred_check
    _
  $region51: #{gat_forward.4} parent=0 // pred_check_branch
    %1525 = sbr.rel (0) target = $region53
  $region52: #{gat_forward.4} parent=0 // pred_region
    _
  $region53: #{gat_forward.4} parent=0 // pred_fallthru
    _
  // Predicated region
  $region54: #{gat_forward.4} parent=0 // pred_check
    _
  $region55: #{gat_forward.4} parent=0 // pred_check_branch
    %1527 = sbr.rel (0) target = $region57
  $region56: #{gat_forward.4} parent=0 // pred_region
    _
  $region57: #{gat_forward.4} parent=0 // pred_fallthru
    _
  // Predicated region
  $region58: #{gat_forward.4} parent=0 // pred_check
    _
  $region59: #{gat_forward.4} parent=0 // pred_check_branch
    %1529 = sbr.rel (0) target = $region61
  $region60: #{gat_forward.4} parent=0 // pred_region
    _
  $region61: #{gat_forward.4} parent=0 // pred_fallthru
    _

</llo_original>
